<compile_context>
chip_gen: v5e
topology: v5e:2x2
jax: 0.10.0
libtpu: 0.0.40
codegen_flags: <defaults>
</compile_context>

<pallas_src>
import jax
import jax.numpy as jnp
from jax.experimental import pallas as pl
from jax.experimental.pallas import tpu as pltpu

LATENT = 32                  # latent_dim
HID = 2144 * 2               # hidden1 output features (4288)
C1_IN, C1_OUT, K = 32, 64, 3
L0 = 2144 // C1_IN           # 67  (length after view(B, 32, -1))
L1 = L0 + K - 1              # 69  (after convTrans1)
L2 = L1 + K - 1              # 71  (after convTrans2)
SEG = 128                    # padded per-(branch,channel) lane slot (vreg aligned)
HID_PAD = 2 * C1_IN * SEG    # 8192
W_STEP = 2 * SEG             # per-grid-step lane width (time + mag segments)

# Tap-shift correctness invariant: each segment must carry >= K-1 zero pad
# lanes at every stage so pltpu.roll wraparound / cross-segment leakage is 0.
assert SEG - L0 >= K - 1 and SEG - L1 >= K - 1
assert SEG % 128 == 0


# ---------------------------------------------------------------------------
# Fused decoder kernel (one batch element per grid step)
# ---------------------------------------------------------------------------
def _decoder_kernel(z_ref, w1_ref, b1_ref, wc1_ref, bc1_ref, wc2_ref, bc2_ref,
                    out_ref, h_scr, x_scr):
    # ---- Stage 1: Linear(latent -> 8192 padded) + ReLU --------------------
    z_b = z_ref[0]                                           # (1, 32)
    h = jnp.dot(z_b, w1_ref[...], preferred_element_type=jnp.float32)
    # Pad columns of w1/b1 are zero -> pad lanes are exactly 0 after ReLU.
    h_scr[...] = jnp.maximum(h + b1_ref[...], 0.0)           # (1, 8192)

    # ---- Stage 2: re-layout to channel-major (32, 2*128) ------------------
    # slot s = br*32 + c lives at lanes [s*128, (s+1)*128) of h_scr; copy it
    # to row c, segment br of x_scr.  All slices are 128-lane aligned
    # single-vreg copies; loop is a fixed 64-iteration unroll (batch is
    # handled by the grid, so code size does not scale with B).
    for br in range(2):
        for c in range(C1_IN):
            s = br * C1_IN + c
            x_scr[c:c + 1, br * SEG:(br + 1) * SEG] = \
                h_scr[0:1, s * SEG:(s + 1) * SEG]
    x = x_scr[...]                                           # (32, 256)

    # ---- Stage 3: ConvTranspose1d(32->64, k=3) + ReLU ----------------------
    # Per-tap matmul, taps combined with a lane roll (right shift by k); the
    # wrapped / cross-segment lanes are guaranteed-zero pad lanes.
    acc1 = jnp.dot(wc1_ref[0], x, preferred_element_type=jnp.float32)
    for k in range(1, K):
        y_k = jnp.dot(wc1_ref[k], x, preferred_element_type=jnp.float32)
        acc1 = acc1 + pltpu.roll(y_k, shift=k, axis=1)
    h1 = jnp.maximum(acc1 + bc1_ref[...], 0.0)               # (64, 256)

    # Re-zero pad lanes >= L1 of each segment (they hold relu(bias) garbage).
    lane = jax.lax.broadcasted_iota(jnp.int32, (C1_OUT, W_STEP), 1)
    h1 = jnp.where((lane & (SEG - 1)) < L1, h1, 0.0)

    # ---- Stage 4: ConvTranspose1d(64->1, k=3) ------------------------------
    y2 = jnp.dot(wc2_ref[...], h1, preferred_element_type=jnp.float32)  # (3, 256)
    acc2 = y2[0:1, :]
    for k in range(1, K):
        acc2 = acc2 + pltpu.roll(y2[k:k + 1, :], shift=k, axis=1)
    out_all = acc2 + bc2_ref[...]                            # (1, 256)

    # ---- Stage 5: lane-dense (2, 128) store (row0 = time, row1 = mag) ------
    out_blk = jnp.concatenate(
        [out_all[:, 0:SEG], out_all[:, SEG:2 * SEG]], axis=0)   # (2, 128)
    out_ref[0] = out_blk


# ---------------------------------------------------------------------------
# One-time (offline) weight layout transforms
# ---------------------------------------------------------------------------
def prepare_decoder_params(params):
    """Pad each 67-wide channel slot of hidden1 to a 128-lane slot, and
    pre-transpose the conv weights into per-tap matmul form."""
    w1t, b1, wc1, bc1, wc2, bc2 = params
    # w1t: (32, 4288), feature f = br*2144 + c*67 + p  ->  slot (br*32+c)*128 + p
    w1_r = w1t.reshape(LATENT, 2, C1_IN, L0)
    w1_pad = jnp.pad(w1_r, ((0, 0), (0, 0), (0, 0), (0, SEG - L0))
                     ).reshape(LATENT, HID_PAD)               # (32, 8192)
    b1_r = b1.reshape(2, C1_IN, L0)
    b1_pad = jnp.pad(b1_r, ((0, 0), (0, 0), (0, SEG - L0))
                     ).reshape(1, HID_PAD)                    # (1, 8192)
    wc1_taps = jnp.transpose(wc1, (2, 1, 0))                  # (3, 64, 32)  [k,o,c]
    wc2_taps = jnp.transpose(wc2[:, 0, :], (1, 0))            # (3, 64)      [k,c]
    return (w1_pad, b1_pad, wc1_taps,
            bc1.reshape(C1_OUT, 1),                           # (64, 1)
            wc2_taps,
            bc2.reshape(1, 1))                                # (1, 1)


# ---------------------------------------------------------------------------
# Wrapper
# ---------------------------------------------------------------------------
def decoder_forward_pallas(z, prep):
    w1_pad, b1_pad, wc1_taps, bc1_col, wc2_taps, bc2_2d = prep
    B = z.shape[0]
    z3 = z.reshape(B, 1, LATENT).astype(jnp.float32)

    out_pad = pl.pallas_call(
        _decoder_kernel,
        out_shape=jax.ShapeDtypeStruct((B, 2, SEG), jnp.float32),
        grid=(B,),
        in_specs=[
            pl.BlockSpec((1, 1, LATENT), lambda b: (b, 0, 0)),        # z
            pl.BlockSpec((LATENT, HID_PAD), lambda b: (0, 0)),        # w1 (resident)
            pl.BlockSpec((1, HID_PAD), lambda b: (0, 0)),             # b1
            pl.BlockSpec((K, C1_OUT, C1_IN), lambda b: (0, 0, 0)),    # conv1 taps
            pl.BlockSpec((C1_OUT, 1), lambda b: (0, 0)),              # conv1 bias
            pl.BlockSpec((K, C1_OUT), lambda b: (0, 0)),              # conv2 taps
            pl.BlockSpec((1, 1), lambda b: (0, 0)),                   # conv2 bias
        ],
        out_specs=pl.BlockSpec((1, 2, SEG), lambda b: (b, 0, 0)),
        scratch_shapes=[
            pltpu.VMEM((1, HID_PAD), jnp.float32),     # h_scr  (linear output)
            pltpu.VMEM((C1_IN, W_STEP), jnp.float32),  # x_scr  (channel-major)
        ],
        compiler_params=pltpu.CompilerParams(
            dimension_semantics=("parallel",)),
    )(z3, w1_pad, b1_pad, wc1_taps, bc1_col, wc2_taps, bc2_2d)

    # drop the pad lanes; rows are ordered (time, mag) == torch.cat(..., dim=1)
    return out_pad[:, :, :L2]                                 # (B, 2, 71)


# ---------------------------------------------------------------------------
# Plain-JAX reference (PyTorch semantics)
# ---------------------------------------------------------------------------
def _ref_conv_transpose1d(x, w, b):
    # x: (B, Cin, L); w: (Cin, Cout, K) (PyTorch layout); b: (Cout,)
    B, Cin, L = x.shape
    _, Cout, Kk = w.shape
    out = jnp.zeros((B, Cout, L + Kk - 1), jnp.float32) + b[None, :, None]
    for k in range(Kk):
        y = jnp.einsum('bcl,co->bol', x, w[:, :, k],
                       precision=jax.lax.Precision.HIGHEST)
        out = out.at[:, :, k:k + L].add(y)
    return out


def reference_forward(z, params):
    w1t, b1, wc1, bc1, wc2, bc2 = params
    B = z.shape[0]
    h = jnp.maximum(jnp.einsum('bsl,lf->bsf', z, w1t,
                               precision=jax.lax.Precision.HIGHEST) + b1, 0.0)
    t = h[:, :, :2144].reshape(B, C1_IN, L0)
    m = h[:, :, 2144:].reshape(B, C1_IN, L0)
    t1 = jnp.maximum(_ref_conv_transpose1d(t, wc1, bc1), 0.0)
    m1 = jnp.maximum(_ref_conv_transpose1d(m, wc1, bc1), 0.0)
    t2 = _ref_conv_transpose1d(t1, wc2, bc2)
    m2 = _ref_conv_transpose1d(m1, wc2, bc2)
    return jnp.concatenate([t2, m2], axis=1)                  # (B, 2, 71)


if __name__ == "__main__":
    B = 2
    key = jax.random.PRNGKey(0)
    ks = jax.random.split(key, 7)
    # Deterministic synthetic parameters (PyTorch shapes, Linear weight pre-transposed).
    w1t = jax.random.normal(ks[0], (LATENT, HID), jnp.float32) * 0.05
    b1 = jax.random.normal(ks[1], (HID,), jnp.float32) * 0.05
    wc1 = jax.random.normal(ks[2], (C1_IN, C1_OUT, K), jnp.float32) * 0.05
    bc1 = jax.random.normal(ks[3], (C1_OUT,), jnp.float32) * 0.05
    wc2 = jax.random.normal(ks[4], (C1_OUT, 1, K), jnp.float32) * 0.05
    bc2 = jax.random.normal(ks[5], (1,), jnp.float32) * 0.05
    params = (w1t, b1, wc1, bc1, wc2, bc2)

    z = jax.random.normal(ks[6], (B, 1, LATENT), jnp.float32)

    prep = prepare_decoder_params(params)                     # one-time transforms
    out = jax.block_until_ready(decoder_forward_pallas(z, prep))
    ref = jax.block_until_ready(reference_forward(z, params))

    assert out.shape == (B, 2, L2), out.shape
    assert jnp.allclose(out, ref, atol=1e-3, rtol=1e-3), float(
        jnp.max(jnp.abs(out - ref)))
    print("KERNEL_OK")
</pallas_src>

<mosaic_0001>
module attributes {stable_mosaic.version = 11 : i64} {
  func.func @_decoder_kernel(%arg0: i32, %arg1: memref<1x1x32xf32, #tpu.memory_space<vmem>>, %arg2: memref<32x8192xf32, #tpu.memory_space<vmem>>, %arg3: memref<1x8192xf32, #tpu.memory_space<vmem>>, %arg4: memref<3x64x32xf32, #tpu.memory_space<vmem>>, %arg5: memref<64x1xf32, #tpu.memory_space<vmem>>, %arg6: memref<3x64xf32, #tpu.memory_space<vmem>>, %arg7: memref<1x1xf32, #tpu.memory_space<vmem>>, %arg8: memref<1x2x128xf32, #tpu.memory_space<vmem>>, %arg9: memref<1x8192xf32, #tpu.memory_space<vmem>>, %arg10: memref<32x256xf32, #tpu.memory_space<vmem>>) attributes {dimension_semantics = [#tpu.dimension_semantics<parallel>], iteration_bounds = array<i64: 2>, scalar_prefetch = 0 : i64, scratch_operands = 2 : i64, tpu.core_type = #tpu.core_type<tc>, window_params = [{transform_indices = @transform_0, window_bounds = array<i64: 1, 1, 32>}, {pipeline_mode = #tpu.pipeline_mode<synchronous>, transform_indices = @transform_1, window_bounds = array<i64: 32, 8192>}, {pipeline_mode = #tpu.pipeline_mode<synchronous>, transform_indices = @transform_2, window_bounds = array<i64: 1, 8192>}, {pipeline_mode = #tpu.pipeline_mode<synchronous>, transform_indices = @transform_3, window_bounds = array<i64: 3, 64, 32>}, {pipeline_mode = #tpu.pipeline_mode<synchronous>, transform_indices = @transform_4, window_bounds = array<i64: 64, 1>}, {pipeline_mode = #tpu.pipeline_mode<synchronous>, transform_indices = @transform_5, window_bounds = array<i64: 3, 64>}, {pipeline_mode = #tpu.pipeline_mode<synchronous>, transform_indices = @transform_6, window_bounds = array<i64: 1, 1>}, {transform_indices = @transform_7, window_bounds = array<i64: 1, 2, 128>}]} {
    %c0 = arith.constant 0 : index
    %c0_0 = arith.constant 0 : index
    %c0_1 = arith.constant 0 : index
    %0 = vector.load %arg1[%c0, %c0_0, %c0_1] : memref<1x1x32xf32, #tpu.memory_space<vmem>>, vector<1x1x32xf32>
    %1 = vector.shape_cast %0 : vector<1x1x32xf32> to vector<1x32xf32>
    %c0_2 = arith.constant 0 : index
    %c0_3 = arith.constant 0 : index
    %2 = vector.load %arg2[%c0_2, %c0_3] : memref<32x8192xf32, #tpu.memory_space<vmem>>, vector<32x8192xf32>
    %cst = arith.constant dense<0.000000e+00> : vector<1x8192xf32>
    %3 = tpu.matmul %1, %2, %cst {dimension_numbers = #tpu.dot_dimension_numbers<[1], [0], [0], [1], [0, 0, 1, 1], [], []>} : vector<1x32xf32>, vector<32x8192xf32>, vector<1x8192xf32> -> vector<1x8192xf32>
    %c0_4 = arith.constant 0 : index
    %c0_5 = arith.constant 0 : index
    %4 = vector.load %arg3[%c0_4, %c0_5] : memref<1x8192xf32, #tpu.memory_space<vmem>>, vector<1x8192xf32>
    %5 = arith.addf %3, %4 : vector<1x8192xf32>
    %cst_6 = arith.constant 0.000000e+00 : f32
    %6 = vector.broadcast %cst_6 : f32 to vector<1x8192xf32>
    %7 = arith.maximumf %5, %6 : vector<1x8192xf32>
    %c0_7 = arith.constant 0 : index
    %c0_8 = arith.constant 0 : index
    %8 = vector.load %arg9[%c0_7, %c0_8] : memref<1x8192xf32, #tpu.memory_space<vmem>>, vector<1x8192xf32>
    tpu.vector_store %arg9[%c0_7, %c0_8], %7 {strides = array<i32>} : memref<1x8192xf32, #tpu.memory_space<vmem>>, vector<1x8192xf32>,
    %c0_9 = arith.constant 0 : index
    %c0_10 = arith.constant 0 : index
    %9 = vector.load %arg9[%c0_9, %c0_10] : memref<1x8192xf32, #tpu.memory_space<vmem>>, vector<1x128xf32>
    %c0_11 = arith.constant 0 : index
    %c0_12 = arith.constant 0 : index
    %10 = vector.load %arg10[%c0_11, %c0_12] : memref<32x256xf32, #tpu.memory_space<vmem>>, vector<1x128xf32>
    tpu.vector_store %arg10[%c0_11, %c0_12], %9 {strides = array<i32>} : memref<32x256xf32, #tpu.memory_space<vmem>>, vector<1x128xf32>,
    %c0_13 = arith.constant 0 : index
    %c128 = arith.constant 128 : index
    %11 = vector.load %arg9[%c0_13, %c128] : memref<1x8192xf32, #tpu.memory_space<vmem>>, vector<1x128xf32>
    %c1 = arith.constant 1 : index
    %c0_14 = arith.constant 0 : index
    %12 = vector.load %arg10[%c1, %c0_14] : memref<32x256xf32, #tpu.memory_space<vmem>>, vector<1x128xf32>
    tpu.vector_store %arg10[%c1, %c0_14], %11 {strides = array<i32>} : memref<32x256xf32, #tpu.memory_space<vmem>>, vector<1x128xf32>,
    %c0_15 = arith.constant 0 : index
    %c256 = arith.constant 256 : index
    %13 = vector.load %arg9[%c0_15, %c256] : memref<1x8192xf32, #tpu.memory_space<vmem>>, vector<1x128xf32>
    %c2 = arith.constant 2 : index
    %c0_16 = arith.constant 0 : index
    %14 = vector.load %arg10[%c2, %c0_16] : memref<32x256xf32, #tpu.memory_space<vmem>>, vector<1x128xf32>
    tpu.vector_store %arg10[%c2, %c0_16], %13 {strides = array<i32>} : memref<32x256xf32, #tpu.memory_space<vmem>>, vector<1x128xf32>,
    %c0_17 = arith.constant 0 : index
    %c384 = arith.constant 384 : index
    %15 = vector.load %arg9[%c0_17, %c384] : memref<1x8192xf32, #tpu.memory_space<vmem>>, vector<1x128xf32>
    %c3 = arith.constant 3 : index
    %c0_18 = arith.constant 0 : index
    %16 = vector.load %arg10[%c3, %c0_18] : memref<32x256xf32, #tpu.memory_space<vmem>>, vector<1x128xf32>
    tpu.vector_store %arg10[%c3, %c0_18], %15 {strides = array<i32>} : memref<32x256xf32, #tpu.memory_space<vmem>>, vector<1x128xf32>,
    %c0_19 = arith.constant 0 : index
    %c512 = arith.constant 512 : index
    %17 = vector.load %arg9[%c0_19, %c512] : memref<1x8192xf32, #tpu.memory_space<vmem>>, vector<1x128xf32>
    %c4 = arith.constant 4 : index
    %c0_20 = arith.constant 0 : index
    %18 = vector.load %arg10[%c4, %c0_20] : memref<32x256xf32, #tpu.memory_space<vmem>>, vector<1x128xf32>
    tpu.vector_store %arg10[%c4, %c0_20], %17 {strides = array<i32>} : memref<32x256xf32, #tpu.memory_space<vmem>>, vector<1x128xf32>,
    %c0_21 = arith.constant 0 : index
    %c640 = arith.constant 640 : index
    %19 = vector.load %arg9[%c0_21, %c640] : memref<1x8192xf32, #tpu.memory_space<vmem>>, vector<1x128xf32>
    %c5 = arith.constant 5 : index
    %c0_22 = arith.constant 0 : index
    %20 = vector.load %arg10[%c5, %c0_22] : memref<32x256xf32, #tpu.memory_space<vmem>>, vector<1x128xf32>
    tpu.vector_store %arg10[%c5, %c0_22], %19 {strides = array<i32>} : memref<32x256xf32, #tpu.memory_space<vmem>>, vector<1x128xf32>,
    %c0_23 = arith.constant 0 : index
    %c768 = arith.constant 768 : index
    %21 = vector.load %arg9[%c0_23, %c768] : memref<1x8192xf32, #tpu.memory_space<vmem>>, vector<1x128xf32>
    %c6 = arith.constant 6 : index
    %c0_24 = arith.constant 0 : index
    %22 = vector.load %arg10[%c6, %c0_24] : memref<32x256xf32, #tpu.memory_space<vmem>>, vector<1x128xf32>
    tpu.vector_store %arg10[%c6, %c0_24], %21 {strides = array<i32>} : memref<32x256xf32, #tpu.memory_space<vmem>>, vector<1x128xf32>,
    %c0_25 = arith.constant 0 : index
    %c896 = arith.constant 896 : index
    %23 = vector.load %arg9[%c0_25, %c896] : memref<1x8192xf32, #tpu.memory_space<vmem>>, vector<1x128xf32>
    %c7 = arith.constant 7 : index
    %c0_26 = arith.constant 0 : index
    %24 = vector.load %arg10[%c7, %c0_26] : memref<32x256xf32, #tpu.memory_space<vmem>>, vector<1x128xf32>
    tpu.vector_store %arg10[%c7, %c0_26], %23 {strides = array<i32>} : memref<32x256xf32, #tpu.memory_space<vmem>>, vector<1x128xf32>,
    %c0_27 = arith.constant 0 : index
    %c1024 = arith.constant 1024 : index
    %25 = vector.load %arg9[%c0_27, %c1024] : memref<1x8192xf32, #tpu.memory_space<vmem>>, vector<1x128xf32>
    %c8 = arith.constant 8 : index
    %c0_28 = arith.constant 0 : index
    %26 = vector.load %arg10[%c8, %c0_28] : memref<32x256xf32, #tpu.memory_space<vmem>>, vector<1x128xf32>
    tpu.vector_store %arg10[%c8, %c0_28], %25 {strides = array<i32>} : memref<32x256xf32, #tpu.memory_space<vmem>>, vector<1x128xf32>,
    %c0_29 = arith.constant 0 : index
    %c1152 = arith.constant 1152 : index
    %27 = vector.load %arg9[%c0_29, %c1152] : memref<1x8192xf32, #tpu.memory_space<vmem>>, vector<1x128xf32>
    %c9 = arith.constant 9 : index
    %c0_30 = arith.constant 0 : index
    %28 = vector.load %arg10[%c9, %c0_30] : memref<32x256xf32, #tpu.memory_space<vmem>>, vector<1x128xf32>
    tpu.vector_store %arg10[%c9, %c0_30], %27 {strides = array<i32>} : memref<32x256xf32, #tpu.memory_space<vmem>>, vector<1x128xf32>,
    %c0_31 = arith.constant 0 : index
    %c1280 = arith.constant 1280 : index
    %29 = vector.load %arg9[%c0_31, %c1280] : memref<1x8192xf32, #tpu.memory_space<vmem>>, vector<1x128xf32>
    %c10 = arith.constant 10 : index
    %c0_32 = arith.constant 0 : index
    %30 = vector.load %arg10[%c10, %c0_32] : memref<32x256xf32, #tpu.memory_space<vmem>>, vector<1x128xf32>
    tpu.vector_store %arg10[%c10, %c0_32], %29 {strides = array<i32>} : memref<32x256xf32, #tpu.memory_space<vmem>>, vector<1x128xf32>,
    %c0_33 = arith.constant 0 : index
    %c1408 = arith.constant 1408 : index
    %31 = vector.load %arg9[%c0_33, %c1408] : memref<1x8192xf32, #tpu.memory_space<vmem>>, vector<1x128xf32>
    %c11 = arith.constant 11 : index
    %c0_34 = arith.constant 0 : index
    %32 = vector.load %arg10[%c11, %c0_34] : memref<32x256xf32, #tpu.memory_space<vmem>>, vector<1x128xf32>
    tpu.vector_store %arg10[%c11, %c0_34], %31 {strides = array<i32>} : memref<32x256xf32, #tpu.memory_space<vmem>>, vector<1x128xf32>,
    %c0_35 = arith.constant 0 : index
    %c1536 = arith.constant 1536 : index
    %33 = vector.load %arg9[%c0_35, %c1536] : memref<1x8192xf32, #tpu.memory_space<vmem>>, vector<1x128xf32>
    %c12 = arith.constant 12 : index
    %c0_36 = arith.constant 0 : index
    %34 = vector.load %arg10[%c12, %c0_36] : memref<32x256xf32, #tpu.memory_space<vmem>>, vector<1x128xf32>
    tpu.vector_store %arg10[%c12, %c0_36], %33 {strides = array<i32>} : memref<32x256xf32, #tpu.memory_space<vmem>>, vector<1x128xf32>,
    %c0_37 = arith.constant 0 : index
    %c1664 = arith.constant 1664 : index
    %35 = vector.load %arg9[%c0_37, %c1664] : memref<1x8192xf32, #tpu.memory_space<vmem>>, vector<1x128xf32>
    %c13 = arith.constant 13 : index
    %c0_38 = arith.constant 0 : index
    %36 = vector.load %arg10[%c13, %c0_38] : memref<32x256xf32, #tpu.memory_space<vmem>>, vector<1x128xf32>
    tpu.vector_store %arg10[%c13, %c0_38], %35 {strides = array<i32>} : memref<32x256xf32, #tpu.memory_space<vmem>>, vector<1x128xf32>,
    %c0_39 = arith.constant 0 : index
    %c1792 = arith.constant 1792 : index
    %37 = vector.load %arg9[%c0_39, %c1792] : memref<1x8192xf32, #tpu.memory_space<vmem>>, vector<1x128xf32>
    %c14 = arith.constant 14 : index
    %c0_40 = arith.constant 0 : index
    %38 = vector.load %arg10[%c14, %c0_40] : memref<32x256xf32, #tpu.memory_space<vmem>>, vector<1x128xf32>
    tpu.vector_store %arg10[%c14, %c0_40], %37 {strides = array<i32>} : memref<32x256xf32, #tpu.memory_space<vmem>>, vector<1x128xf32>,
    %c0_41 = arith.constant 0 : index
    %c1920 = arith.constant 1920 : index
    %39 = vector.load %arg9[%c0_41, %c1920] : memref<1x8192xf32, #tpu.memory_space<vmem>>, vector<1x128xf32>
    %c15 = arith.constant 15 : index
    %c0_42 = arith.constant 0 : index
    %40 = vector.load %arg10[%c15, %c0_42] : memref<32x256xf32, #tpu.memory_space<vmem>>, vector<1x128xf32>
    tpu.vector_store %arg10[%c15, %c0_42], %39 {strides = array<i32>} : memref<32x256xf32, #tpu.memory_space<vmem>>, vector<1x128xf32>,
    %c0_43 = arith.constant 0 : index
    %c2048 = arith.constant 2048 : index
    %41 = vector.load %arg9[%c0_43, %c2048] : memref<1x8192xf32, #tpu.memory_space<vmem>>, vector<1x128xf32>
    %c16 = arith.constant 16 : index
    %c0_44 = arith.constant 0 : index
    %42 = vector.load %arg10[%c16, %c0_44] : memref<32x256xf32, #tpu.memory_space<vmem>>, vector<1x128xf32>
    tpu.vector_store %arg10[%c16, %c0_44], %41 {strides = array<i32>} : memref<32x256xf32, #tpu.memory_space<vmem>>, vector<1x128xf32>,
    %c0_45 = arith.constant 0 : index
    %c2176 = arith.constant 2176 : index
    %43 = vector.load %arg9[%c0_45, %c2176] : memref<1x8192xf32, #tpu.memory_space<vmem>>, vector<1x128xf32>
    %c17 = arith.constant 17 : index
    %c0_46 = arith.constant 0 : index
    %44 = vector.load %arg10[%c17, %c0_46] : memref<32x256xf32, #tpu.memory_space<vmem>>, vector<1x128xf32>
    tpu.vector_store %arg10[%c17, %c0_46], %43 {strides = array<i32>} : memref<32x256xf32, #tpu.memory_space<vmem>>, vector<1x128xf32>,
    %c0_47 = arith.constant 0 : index
    %c2304 = arith.constant 2304 : index
    %45 = vector.load %arg9[%c0_47, %c2304] : memref<1x8192xf32, #tpu.memory_space<vmem>>, vector<1x128xf32>
    %c18 = arith.constant 18 : index
    %c0_48 = arith.constant 0 : index
    %46 = vector.load %arg10[%c18, %c0_48] : memref<32x256xf32, #tpu.memory_space<vmem>>, vector<1x128xf32>
    tpu.vector_store %arg10[%c18, %c0_48], %45 {strides = array<i32>} : memref<32x256xf32, #tpu.memory_space<vmem>>, vector<1x128xf32>,
    %c0_49 = arith.constant 0 : index
    %c2432 = arith.constant 2432 : index
    %47 = vector.load %arg9[%c0_49, %c2432] : memref<1x8192xf32, #tpu.memory_space<vmem>>, vector<1x128xf32>
    %c19 = arith.constant 19 : index
    %c0_50 = arith.constant 0 : index
    %48 = vector.load %arg10[%c19, %c0_50] : memref<32x256xf32, #tpu.memory_space<vmem>>, vector<1x128xf32>
    tpu.vector_store %arg10[%c19, %c0_50], %47 {strides = array<i32>} : memref<32x256xf32, #tpu.memory_space<vmem>>, vector<1x128xf32>,
    %c0_51 = arith.constant 0 : index
    %c2560 = arith.constant 2560 : index
    %49 = vector.load %arg9[%c0_51, %c2560] : memref<1x8192xf32, #tpu.memory_space<vmem>>, vector<1x128xf32>
    %c20 = arith.constant 20 : index
    %c0_52 = arith.constant 0 : index
    %50 = vector.load %arg10[%c20, %c0_52] : memref<32x256xf32, #tpu.memory_space<vmem>>, vector<1x128xf32>
    tpu.vector_store %arg10[%c20, %c0_52], %49 {strides = array<i32>} : memref<32x256xf32, #tpu.memory_space<vmem>>, vector<1x128xf32>,
    %c0_53 = arith.constant 0 : index
    %c2688 = arith.constant 2688 : index
    %51 = vector.load %arg9[%c0_53, %c2688] : memref<1x8192xf32, #tpu.memory_space<vmem>>, vector<1x128xf32>
    %c21 = arith.constant 21 : index
    %c0_54 = arith.constant 0 : index
    %52 = vector.load %arg10[%c21, %c0_54] : memref<32x256xf32, #tpu.memory_space<vmem>>, vector<1x128xf32>
    tpu.vector_store %arg10[%c21, %c0_54], %51 {strides = array<i32>} : memref<32x256xf32, #tpu.memory_space<vmem>>, vector<1x128xf32>,
    %c0_55 = arith.constant 0 : index
    %c2816 = arith.constant 2816 : index
    %53 = vector.load %arg9[%c0_55, %c2816] : memref<1x8192xf32, #tpu.memory_space<vmem>>, vector<1x128xf32>
    %c22 = arith.constant 22 : index
    %c0_56 = arith.constant 0 : index
    %54 = vector.load %arg10[%c22, %c0_56] : memref<32x256xf32, #tpu.memory_space<vmem>>, vector<1x128xf32>
    tpu.vector_store %arg10[%c22, %c0_56], %53 {strides = array<i32>} : memref<32x256xf32, #tpu.memory_space<vmem>>, vector<1x128xf32>,
    %c0_57 = arith.constant 0 : index
    %c2944 = arith.constant 2944 : index
    %55 = vector.load %arg9[%c0_57, %c2944] : memref<1x8192xf32, #tpu.memory_space<vmem>>, vector<1x128xf32>
    %c23 = arith.constant 23 : index
    %c0_58 = arith.constant 0 : index
    %56 = vector.load %arg10[%c23, %c0_58] : memref<32x256xf32, #tpu.memory_space<vmem>>, vector<1x128xf32>
    tpu.vector_store %arg10[%c23, %c0_58], %55 {strides = array<i32>} : memref<32x256xf32, #tpu.memory_space<vmem>>, vector<1x128xf32>,
    %c0_59 = arith.constant 0 : index
    %c3072 = arith.constant 3072 : index
    %57 = vector.load %arg9[%c0_59, %c3072] : memref<1x8192xf32, #tpu.memory_space<vmem>>, vector<1x128xf32>
    %c24 = arith.constant 24 : index
    %c0_60 = arith.constant 0 : index
    %58 = vector.load %arg10[%c24, %c0_60] : memref<32x256xf32, #tpu.memory_space<vmem>>, vector<1x128xf32>
    tpu.vector_store %arg10[%c24, %c0_60], %57 {strides = array<i32>} : memref<32x256xf32, #tpu.memory_space<vmem>>, vector<1x128xf32>,
    %c0_61 = arith.constant 0 : index
    %c3200 = arith.constant 3200 : index
    %59 = vector.load %arg9[%c0_61, %c3200] : memref<1x8192xf32, #tpu.memory_space<vmem>>, vector<1x128xf32>
    %c25 = arith.constant 25 : index
    %c0_62 = arith.constant 0 : index
    %60 = vector.load %arg10[%c25, %c0_62] : memref<32x256xf32, #tpu.memory_space<vmem>>, vector<1x128xf32>
    tpu.vector_store %arg10[%c25, %c0_62], %59 {strides = array<i32>} : memref<32x256xf32, #tpu.memory_space<vmem>>, vector<1x128xf32>,
    %c0_63 = arith.constant 0 : index
    %c3328 = arith.constant 3328 : index
    %61 = vector.load %arg9[%c0_63, %c3328] : memref<1x8192xf32, #tpu.memory_space<vmem>>, vector<1x128xf32>
    %c26 = arith.constant 26 : index
    %c0_64 = arith.constant 0 : index
    %62 = vector.load %arg10[%c26, %c0_64] : memref<32x256xf32, #tpu.memory_space<vmem>>, vector<1x128xf32>
    tpu.vector_store %arg10[%c26, %c0_64], %61 {strides = array<i32>} : memref<32x256xf32, #tpu.memory_space<vmem>>, vector<1x128xf32>,
    %c0_65 = arith.constant 0 : index
    %c3456 = arith.constant 3456 : index
    %63 = vector.load %arg9[%c0_65, %c3456] : memref<1x8192xf32, #tpu.memory_space<vmem>>, vector<1x128xf32>
    %c27 = arith.constant 27 : index
    %c0_66 = arith.constant 0 : index
    %64 = vector.load %arg10[%c27, %c0_66] : memref<32x256xf32, #tpu.memory_space<vmem>>, vector<1x128xf32>
    tpu.vector_store %arg10[%c27, %c0_66], %63 {strides = array<i32>} : memref<32x256xf32, #tpu.memory_space<vmem>>, vector<1x128xf32>,
    %c0_67 = arith.constant 0 : index
    %c3584 = arith.constant 3584 : index
    %65 = vector.load %arg9[%c0_67, %c3584] : memref<1x8192xf32, #tpu.memory_space<vmem>>, vector<1x128xf32>
    %c28 = arith.constant 28 : index
    %c0_68 = arith.constant 0 : index
    %66 = vector.load %arg10[%c28, %c0_68] : memref<32x256xf32, #tpu.memory_space<vmem>>, vector<1x128xf32>
    tpu.vector_store %arg10[%c28, %c0_68], %65 {strides = array<i32>} : memref<32x256xf32, #tpu.memory_space<vmem>>, vector<1x128xf32>,
    %c0_69 = arith.constant 0 : index
    %c3712 = arith.constant 3712 : index
    %67 = vector.load %arg9[%c0_69, %c3712] : memref<1x8192xf32, #tpu.memory_space<vmem>>, vector<1x128xf32>
    %c29 = arith.constant 29 : index
    %c0_70 = arith.constant 0 : index
    %68 = vector.load %arg10[%c29, %c0_70] : memref<32x256xf32, #tpu.memory_space<vmem>>, vector<1x128xf32>
    tpu.vector_store %arg10[%c29, %c0_70], %67 {strides = array<i32>} : memref<32x256xf32, #tpu.memory_space<vmem>>, vector<1x128xf32>,
    %c0_71 = arith.constant 0 : index
    %c3840 = arith.constant 3840 : index
    %69 = vector.load %arg9[%c0_71, %c3840] : memref<1x8192xf32, #tpu.memory_space<vmem>>, vector<1x128xf32>
    %c30 = arith.constant 30 : index
    %c0_72 = arith.constant 0 : index
    %70 = vector.load %arg10[%c30, %c0_72] : memref<32x256xf32, #tpu.memory_space<vmem>>, vector<1x128xf32>
    tpu.vector_store %arg10[%c30, %c0_72], %69 {strides = array<i32>} : memref<32x256xf32, #tpu.memory_space<vmem>>, vector<1x128xf32>,
    %c0_73 = arith.constant 0 : index
    %c3968 = arith.constant 3968 : index
    %71 = vector.load %arg9[%c0_73, %c3968] : memref<1x8192xf32, #tpu.memory_space<vmem>>, vector<1x128xf32>
    %c31 = arith.constant 31 : index
    %c0_74 = arith.constant 0 : index
    %72 = vector.load %arg10[%c31, %c0_74] : memref<32x256xf32, #tpu.memory_space<vmem>>, vector<1x128xf32>
    tpu.vector_store %arg10[%c31, %c0_74], %71 {strides = array<i32>} : memref<32x256xf32, #tpu.memory_space<vmem>>, vector<1x128xf32>,
    %c0_75 = arith.constant 0 : index
    %c4096 = arith.constant 4096 : index
    %73 = vector.load %arg9[%c0_75, %c4096] : memref<1x8192xf32, #tpu.memory_space<vmem>>, vector<1x128xf32>
    %c0_76 = arith.constant 0 : index
    %c128_77 = arith.constant 128 : index
    %74 = vector.load %arg10[%c0_76, %c128_77] : memref<32x256xf32, #tpu.memory_space<vmem>>, vector<1x128xf32>
    tpu.vector_store %arg10[%c0_76, %c128_77], %73 {strides = array<i32>} : memref<32x256xf32, #tpu.memory_space<vmem>>, vector<1x128xf32>,
    %c0_78 = arith.constant 0 : index
    %c4224 = arith.constant 4224 : index
    %75 = vector.load %arg9[%c0_78, %c4224] : memref<1x8192xf32, #tpu.memory_space<vmem>>, vector<1x128xf32>
    %c1_79 = arith.constant 1 : index
    %c128_80 = arith.constant 128 : index
    %76 = vector.load %arg10[%c1_79, %c128_80] : memref<32x256xf32, #tpu.memory_space<vmem>>, vector<1x128xf32>
    tpu.vector_store %arg10[%c1_79, %c128_80], %75 {strides = array<i32>} : memref<32x256xf32, #tpu.memory_space<vmem>>, vector<1x128xf32>,
    %c0_81 = arith.constant 0 : index
    %c4352 = arith.constant 4352 : index
    %77 = vector.load %arg9[%c0_81, %c4352] : memref<1x8192xf32, #tpu.memory_space<vmem>>, vector<1x128xf32>
    %c2_82 = arith.constant 2 : index
    %c128_83 = arith.constant 128 : index
    %78 = vector.load %arg10[%c2_82, %c128_83] : memref<32x256xf32, #tpu.memory_space<vmem>>, vector<1x128xf32>
    tpu.vector_store %arg10[%c2_82, %c128_83], %77 {strides = array<i32>} : memref<32x256xf32, #tpu.memory_space<vmem>>, vector<1x128xf32>,
    %c0_84 = arith.constant 0 : index
    %c4480 = arith.constant 4480 : index
    %79 = vector.load %arg9[%c0_84, %c4480] : memref<1x8192xf32, #tpu.memory_space<vmem>>, vector<1x128xf32>
    %c3_85 = arith.constant 3 : index
    %c128_86 = arith.constant 128 : index
    %80 = vector.load %arg10[%c3_85, %c128_86] : memref<32x256xf32, #tpu.memory_space<vmem>>, vector<1x128xf32>
    tpu.vector_store %arg10[%c3_85, %c128_86], %79 {strides = array<i32>} : memref<32x256xf32, #tpu.memory_space<vmem>>, vector<1x128xf32>,
    %c0_87 = arith.constant 0 : index
    %c4608 = arith.constant 4608 : index
    %81 = vector.load %arg9[%c0_87, %c4608] : memref<1x8192xf32, #tpu.memory_space<vmem>>, vector<1x128xf32>
    %c4_88 = arith.constant 4 : index
    %c128_89 = arith.constant 128 : index
    %82 = vector.load %arg10[%c4_88, %c128_89] : memref<32x256xf32, #tpu.memory_space<vmem>>, vector<1x128xf32>
    tpu.vector_store %arg10[%c4_88, %c128_89], %81 {strides = array<i32>} : memref<32x256xf32, #tpu.memory_space<vmem>>, vector<1x128xf32>,
    %c0_90 = arith.constant 0 : index
    %c4736 = arith.constant 4736 : index
    %83 = vector.load %arg9[%c0_90, %c4736] : memref<1x8192xf32, #tpu.memory_space<vmem>>, vector<1x128xf32>
    %c5_91 = arith.constant 5 : index
    %c128_92 = arith.constant 128 : index
    %84 = vector.load %arg10[%c5_91, %c128_92] : memref<32x256xf32, #tpu.memory_space<vmem>>, vector<1x128xf32>
    tpu.vector_store %arg10[%c5_91, %c128_92], %83 {strides = array<i32>} : memref<32x256xf32, #tpu.memory_space<vmem>>, vector<1x128xf32>,
    %c0_93 = arith.constant 0 : index
    %c4864 = arith.constant 4864 : index
    %85 = vector.load %arg9[%c0_93, %c4864] : memref<1x8192xf32, #tpu.memory_space<vmem>>, vector<1x128xf32>
    %c6_94 = arith.constant 6 : index
    %c128_95 = arith.constant 128 : index
    %86 = vector.load %arg10[%c6_94, %c128_95] : memref<32x256xf32, #tpu.memory_space<vmem>>, vector<1x128xf32>
    tpu.vector_store %arg10[%c6_94, %c128_95], %85 {strides = array<i32>} : memref<32x256xf32, #tpu.memory_space<vmem>>, vector<1x128xf32>,
    %c0_96 = arith.constant 0 : index
    %c4992 = arith.constant 4992 : index
    %87 = vector.load %arg9[%c0_96, %c4992] : memref<1x8192xf32, #tpu.memory_space<vmem>>, vector<1x128xf32>
    %c7_97 = arith.constant 7 : index
    %c128_98 = arith.constant 128 : index
    %88 = vector.load %arg10[%c7_97, %c128_98] : memref<32x256xf32, #tpu.memory_space<vmem>>, vector<1x128xf32>
    tpu.vector_store %arg10[%c7_97, %c128_98], %87 {strides = array<i32>} : memref<32x256xf32, #tpu.memory_space<vmem>>, vector<1x128xf32>,
    %c0_99 = arith.constant 0 : index
    %c5120 = arith.constant 5120 : index
    %89 = vector.load %arg9[%c0_99, %c5120] : memref<1x8192xf32, #tpu.memory_space<vmem>>, vector<1x128xf32>
    %c8_100 = arith.constant 8 : index
    %c128_101 = arith.constant 128 : index
    %90 = vector.load %arg10[%c8_100, %c128_101] : memref<32x256xf32, #tpu.memory_space<vmem>>, vector<1x128xf32>
    tpu.vector_store %arg10[%c8_100, %c128_101], %89 {strides = array<i32>} : memref<32x256xf32, #tpu.memory_space<vmem>>, vector<1x128xf32>,
    %c0_102 = arith.constant 0 : index
    %c5248 = arith.constant 5248 : index
    %91 = vector.load %arg9[%c0_102, %c5248] : memref<1x8192xf32, #tpu.memory_space<vmem>>, vector<1x128xf32>
    %c9_103 = arith.constant 9 : index
    %c128_104 = arith.constant 128 : index
    %92 = vector.load %arg10[%c9_103, %c128_104] : memref<32x256xf32, #tpu.memory_space<vmem>>, vector<1x128xf32>
    tpu.vector_store %arg10[%c9_103, %c128_104], %91 {strides = array<i32>} : memref<32x256xf32, #tpu.memory_space<vmem>>, vector<1x128xf32>,
    %c0_105 = arith.constant 0 : index
    %c5376 = arith.constant 5376 : index
    %93 = vector.load %arg9[%c0_105, %c5376] : memref<1x8192xf32, #tpu.memory_space<vmem>>, vector<1x128xf32>
    %c10_106 = arith.constant 10 : index
    %c128_107 = arith.constant 128 : index
    %94 = vector.load %arg10[%c10_106, %c128_107] : memref<32x256xf32, #tpu.memory_space<vmem>>, vector<1x128xf32>
    tpu.vector_store %arg10[%c10_106, %c128_107], %93 {strides = array<i32>} : memref<32x256xf32, #tpu.memory_space<vmem>>, vector<1x128xf32>,
    %c0_108 = arith.constant 0 : index
    %c5504 = arith.constant 5504 : index
    %95 = vector.load %arg9[%c0_108, %c5504] : memref<1x8192xf32, #tpu.memory_space<vmem>>, vector<1x128xf32>
    %c11_109 = arith.constant 11 : index
    %c128_110 = arith.constant 128 : index
    %96 = vector.load %arg10[%c11_109, %c128_110] : memref<32x256xf32, #tpu.memory_space<vmem>>, vector<1x128xf32>
    tpu.vector_store %arg10[%c11_109, %c128_110], %95 {strides = array<i32>} : memref<32x256xf32, #tpu.memory_space<vmem>>, vector<1x128xf32>,
    %c0_111 = arith.constant 0 : index
    %c5632 = arith.constant 5632 : index
    %97 = vector.load %arg9[%c0_111, %c5632] : memref<1x8192xf32, #tpu.memory_space<vmem>>, vector<1x128xf32>
    %c12_112 = arith.constant 12 : index
    %c128_113 = arith.constant 128 : index
    %98 = vector.load %arg10[%c12_112, %c128_113] : memref<32x256xf32, #tpu.memory_space<vmem>>, vector<1x128xf32>
    tpu.vector_store %arg10[%c12_112, %c128_113], %97 {strides = array<i32>} : memref<32x256xf32, #tpu.memory_space<vmem>>, vector<1x128xf32>,
    %c0_114 = arith.constant 0 : index
    %c5760 = arith.constant 5760 : index
    %99 = vector.load %arg9[%c0_114, %c5760] : memref<1x8192xf32, #tpu.memory_space<vmem>>, vector<1x128xf32>
    %c13_115 = arith.constant 13 : index
    %c128_116 = arith.constant 128 : index
    %100 = vector.load %arg10[%c13_115, %c128_116] : memref<32x256xf32, #tpu.memory_space<vmem>>, vector<1x128xf32>
    tpu.vector_store %arg10[%c13_115, %c128_116], %99 {strides = array<i32>} : memref<32x256xf32, #tpu.memory_space<vmem>>, vector<1x128xf32>,
    %c0_117 = arith.constant 0 : index
    %c5888 = arith.constant 5888 : index
    %101 = vector.load %arg9[%c0_117, %c5888] : memref<1x8192xf32, #tpu.memory_space<vmem>>, vector<1x128xf32>
    %c14_118 = arith.constant 14 : index
    %c128_119 = arith.constant 128 : index
    %102 = vector.load %arg10[%c14_118, %c128_119] : memref<32x256xf32, #tpu.memory_space<vmem>>, vector<1x128xf32>
    tpu.vector_store %arg10[%c14_118, %c128_119], %101 {strides = array<i32>} : memref<32x256xf32, #tpu.memory_space<vmem>>, vector<1x128xf32>,
    %c0_120 = arith.constant 0 : index
    %c6016 = arith.constant 6016 : index
    %103 = vector.load %arg9[%c0_120, %c6016] : memref<1x8192xf32, #tpu.memory_space<vmem>>, vector<1x128xf32>
    %c15_121 = arith.constant 15 : index
    %c128_122 = arith.constant 128 : index
    %104 = vector.load %arg10[%c15_121, %c128_122] : memref<32x256xf32, #tpu.memory_space<vmem>>, vector<1x128xf32>
    tpu.vector_store %arg10[%c15_121, %c128_122], %103 {strides = array<i32>} : memref<32x256xf32, #tpu.memory_space<vmem>>, vector<1x128xf32>,
    %c0_123 = arith.constant 0 : index
    %c6144 = arith.constant 6144 : index
    %105 = vector.load %arg9[%c0_123, %c6144] : memref<1x8192xf32, #tpu.memory_space<vmem>>, vector<1x128xf32>
    %c16_124 = arith.constant 16 : index
    %c128_125 = arith.constant 128 : index
    %106 = vector.load %arg10[%c16_124, %c128_125] : memref<32x256xf32, #tpu.memory_space<vmem>>, vector<1x128xf32>
    tpu.vector_store %arg10[%c16_124, %c128_125], %105 {strides = array<i32>} : memref<32x256xf32, #tpu.memory_space<vmem>>, vector<1x128xf32>,
    %c0_126 = arith.constant 0 : index
    %c6272 = arith.constant 6272 : index
    %107 = vector.load %arg9[%c0_126, %c6272] : memref<1x8192xf32, #tpu.memory_space<vmem>>, vector<1x128xf32>
    %c17_127 = arith.constant 17 : index
    %c128_128 = arith.constant 128 : index
    %108 = vector.load %arg10[%c17_127, %c128_128] : memref<32x256xf32, #tpu.memory_space<vmem>>, vector<1x128xf32>
    tpu.vector_store %arg10[%c17_127, %c128_128], %107 {strides = array<i32>} : memref<32x256xf32, #tpu.memory_space<vmem>>, vector<1x128xf32>,
    %c0_129 = arith.constant 0 : index
    %c6400 = arith.constant 6400 : index
    %109 = vector.load %arg9[%c0_129, %c6400] : memref<1x8192xf32, #tpu.memory_space<vmem>>, vector<1x128xf32>
    %c18_130 = arith.constant 18 : index
    %c128_131 = arith.constant 128 : index
    %110 = vector.load %arg10[%c18_130, %c128_131] : memref<32x256xf32, #tpu.memory_space<vmem>>, vector<1x128xf32>
    tpu.vector_store %arg10[%c18_130, %c128_131], %109 {strides = array<i32>} : memref<32x256xf32, #tpu.memory_space<vmem>>, vector<1x128xf32>,
    %c0_132 = arith.constant 0 : index
    %c6528 = arith.constant 6528 : index
    %111 = vector.load %arg9[%c0_132, %c6528] : memref<1x8192xf32, #tpu.memory_space<vmem>>, vector<1x128xf32>
    %c19_133 = arith.constant 19 : index
    %c128_134 = arith.constant 128 : index
    %112 = vector.load %arg10[%c19_133, %c128_134] : memref<32x256xf32, #tpu.memory_space<vmem>>, vector<1x128xf32>
    tpu.vector_store %arg10[%c19_133, %c128_134], %111 {strides = array<i32>} : memref<32x256xf32, #tpu.memory_space<vmem>>, vector<1x128xf32>,
    %c0_135 = arith.constant 0 : index
    %c6656 = arith.constant 6656 : index
    %113 = vector.load %arg9[%c0_135, %c6656] : memref<1x8192xf32, #tpu.memory_space<vmem>>, vector<1x128xf32>
    %c20_136 = arith.constant 20 : index
    %c128_137 = arith.constant 128 : index
    %114 = vector.load %arg10[%c20_136, %c128_137] : memref<32x256xf32, #tpu.memory_space<vmem>>, vector<1x128xf32>
    tpu.vector_store %arg10[%c20_136, %c128_137], %113 {strides = array<i32>} : memref<32x256xf32, #tpu.memory_space<vmem>>, vector<1x128xf32>,
    %c0_138 = arith.constant 0 : index
    %c6784 = arith.constant 6784 : index
    %115 = vector.load %arg9[%c0_138, %c6784] : memref<1x8192xf32, #tpu.memory_space<vmem>>, vector<1x128xf32>
    %c21_139 = arith.constant 21 : index
    %c128_140 = arith.constant 128 : index
    %116 = vector.load %arg10[%c21_139, %c128_140] : memref<32x256xf32, #tpu.memory_space<vmem>>, vector<1x128xf32>
    tpu.vector_store %arg10[%c21_139, %c128_140], %115 {strides = array<i32>} : memref<32x256xf32, #tpu.memory_space<vmem>>, vector<1x128xf32>,
    %c0_141 = arith.constant 0 : index
    %c6912 = arith.constant 6912 : index
    %117 = vector.load %arg9[%c0_141, %c6912] : memref<1x8192xf32, #tpu.memory_space<vmem>>, vector<1x128xf32>
    %c22_142 = arith.constant 22 : index
    %c128_143 = arith.constant 128 : index
    %118 = vector.load %arg10[%c22_142, %c128_143] : memref<32x256xf32, #tpu.memory_space<vmem>>, vector<1x128xf32>
    tpu.vector_store %arg10[%c22_142, %c128_143], %117 {strides = array<i32>} : memref<32x256xf32, #tpu.memory_space<vmem>>, vector<1x128xf32>,
    %c0_144 = arith.constant 0 : index
    %c7040 = arith.constant 7040 : index
    %119 = vector.load %arg9[%c0_144, %c7040] : memref<1x8192xf32, #tpu.memory_space<vmem>>, vector<1x128xf32>
    %c23_145 = arith.constant 23 : index
    %c128_146 = arith.constant 128 : index
    %120 = vector.load %arg10[%c23_145, %c128_146] : memref<32x256xf32, #tpu.memory_space<vmem>>, vector<1x128xf32>
    tpu.vector_store %arg10[%c23_145, %c128_146], %119 {strides = array<i32>} : memref<32x256xf32, #tpu.memory_space<vmem>>, vector<1x128xf32>,
    %c0_147 = arith.constant 0 : index
    %c7168 = arith.constant 7168 : index
    %121 = vector.load %arg9[%c0_147, %c7168] : memref<1x8192xf32, #tpu.memory_space<vmem>>, vector<1x128xf32>
    %c24_148 = arith.constant 24 : index
    %c128_149 = arith.constant 128 : index
    %122 = vector.load %arg10[%c24_148, %c128_149] : memref<32x256xf32, #tpu.memory_space<vmem>>, vector<1x128xf32>
    tpu.vector_store %arg10[%c24_148, %c128_149], %121 {strides = array<i32>} : memref<32x256xf32, #tpu.memory_space<vmem>>, vector<1x128xf32>,
    %c0_150 = arith.constant 0 : index
    %c7296 = arith.constant 7296 : index
    %123 = vector.load %arg9[%c0_150, %c7296] : memref<1x8192xf32, #tpu.memory_space<vmem>>, vector<1x128xf32>
    %c25_151 = arith.constant 25 : index
    %c128_152 = arith.constant 128 : index
    %124 = vector.load %arg10[%c25_151, %c128_152] : memref<32x256xf32, #tpu.memory_space<vmem>>, vector<1x128xf32>
    tpu.vector_store %arg10[%c25_151, %c128_152], %123 {strides = array<i32>} : memref<32x256xf32, #tpu.memory_space<vmem>>, vector<1x128xf32>,
    %c0_153 = arith.constant 0 : index
    %c7424 = arith.constant 7424 : index
    %125 = vector.load %arg9[%c0_153, %c7424] : memref<1x8192xf32, #tpu.memory_space<vmem>>, vector<1x128xf32>
    %c26_154 = arith.constant 26 : index
    %c128_155 = arith.constant 128 : index
    %126 = vector.load %arg10[%c26_154, %c128_155] : memref<32x256xf32, #tpu.memory_space<vmem>>, vector<1x128xf32>
    tpu.vector_store %arg10[%c26_154, %c128_155], %125 {strides = array<i32>} : memref<32x256xf32, #tpu.memory_space<vmem>>, vector<1x128xf32>,
    %c0_156 = arith.constant 0 : index
    %c7552 = arith.constant 7552 : index
    %127 = vector.load %arg9[%c0_156, %c7552] : memref<1x8192xf32, #tpu.memory_space<vmem>>, vector<1x128xf32>
    %c27_157 = arith.constant 27 : index
    %c128_158 = arith.constant 128 : index
    %128 = vector.load %arg10[%c27_157, %c128_158] : memref<32x256xf32, #tpu.memory_space<vmem>>, vector<1x128xf32>
    tpu.vector_store %arg10[%c27_157, %c128_158], %127 {strides = array<i32>} : memref<32x256xf32, #tpu.memory_space<vmem>>, vector<1x128xf32>,
    %c0_159 = arith.constant 0 : index
    %c7680 = arith.constant 7680 : index
    %129 = vector.load %arg9[%c0_159, %c7680] : memref<1x8192xf32, #tpu.memory_space<vmem>>, vector<1x128xf32>
    %c28_160 = arith.constant 28 : index
    %c128_161 = arith.constant 128 : index
    %130 = vector.load %arg10[%c28_160, %c128_161] : memref<32x256xf32, #tpu.memory_space<vmem>>, vector<1x128xf32>
    tpu.vector_store %arg10[%c28_160, %c128_161], %129 {strides = array<i32>} : memref<32x256xf32, #tpu.memory_space<vmem>>, vector<1x128xf32>,
    %c0_162 = arith.constant 0 : index
    %c7808 = arith.constant 7808 : index
    %131 = vector.load %arg9[%c0_162, %c7808] : memref<1x8192xf32, #tpu.memory_space<vmem>>, vector<1x128xf32>
    %c29_163 = arith.constant 29 : index
    %c128_164 = arith.constant 128 : index
    %132 = vector.load %arg10[%c29_163, %c128_164] : memref<32x256xf32, #tpu.memory_space<vmem>>, vector<1x128xf32>
    tpu.vector_store %arg10[%c29_163, %c128_164], %131 {strides = array<i32>} : memref<32x256xf32, #tpu.memory_space<vmem>>, vector<1x128xf32>,
    %c0_165 = arith.constant 0 : index
    %c7936 = arith.constant 7936 : index
    %133 = vector.load %arg9[%c0_165, %c7936] : memref<1x8192xf32, #tpu.memory_space<vmem>>, vector<1x128xf32>
    %c30_166 = arith.constant 30 : index
    %c128_167 = arith.constant 128 : index
    %134 = vector.load %arg10[%c30_166, %c128_167] : memref<32x256xf32, #tpu.memory_space<vmem>>, vector<1x128xf32>
    tpu.vector_store %arg10[%c30_166, %c128_167], %133 {strides = array<i32>} : memref<32x256xf32, #tpu.memory_space<vmem>>, vector<1x128xf32>,
    %c0_168 = arith.constant 0 : index
    %c8064 = arith.constant 8064 : index
    %135 = vector.load %arg9[%c0_168, %c8064] : memref<1x8192xf32, #tpu.memory_space<vmem>>, vector<1x128xf32>
    %c31_169 = arith.constant 31 : index
    %c128_170 = arith.constant 128 : index
    %136 = vector.load %arg10[%c31_169, %c128_170] : memref<32x256xf32, #tpu.memory_space<vmem>>, vector<1x128xf32>
    tpu.vector_store %arg10[%c31_169, %c128_170], %135 {strides = array<i32>} : memref<32x256xf32, #tpu.memory_space<vmem>>, vector<1x128xf32>,
    %c0_171 = arith.constant 0 : index
    %c0_172 = arith.constant 0 : index
    %137 = vector.load %arg10[%c0_171, %c0_172] : memref<32x256xf32, #tpu.memory_space<vmem>>, vector<32x256xf32>
    %c0_173 = arith.constant 0 : index
    %c0_174 = arith.constant 0 : index
    %c0_175 = arith.constant 0 : index
    %138 = vector.load %arg4[%c0_173, %c0_174, %c0_175] : memref<3x64x32xf32, #tpu.memory_space<vmem>>, vector<1x64x32xf32>
    %139 = vector.shape_cast %138 : vector<1x64x32xf32> to vector<64x32xf32>
    %cst_176 = arith.constant dense<0.000000e+00> : vector<64x256xf32>
    %140 = tpu.matmul %139, %137, %cst_176 {dimension_numbers = #tpu.dot_dimension_numbers<[1], [0], [0], [1], [0, 0, 1, 1], [], []>} : vector<64x32xf32>, vector<32x256xf32>, vector<64x256xf32> -> vector<64x256xf32>
    %c1_177 = arith.constant 1 : index
    %c0_178 = arith.constant 0 : index
    %c0_179 = arith.constant 0 : index
    %141 = vector.load %arg4[%c1_177, %c0_178, %c0_179] : memref<3x64x32xf32, #tpu.memory_space<vmem>>, vector<1x64x32xf32>
    %142 = vector.shape_cast %141 : vector<1x64x32xf32> to vector<64x32xf32>
    %cst_180 = arith.constant dense<0.000000e+00> : vector<64x256xf32>
    %143 = tpu.matmul %142, %137, %cst_180 {dimension_numbers = #tpu.dot_dimension_numbers<[1], [0], [0], [1], [0, 0, 1, 1], [], []>} : vector<64x32xf32>, vector<32x256xf32>, vector<64x256xf32> -> vector<64x256xf32>
    %c1_i32 = arith.constant 1 : i32
    %144 = tpu.dynamic_rotate %143 by %c1_i32 dim 1 : vector<64x256xf32>, i32 -> vector<64x256xf32>
    %145 = arith.addf %140, %144 : vector<64x256xf32>
    %c2_181 = arith.constant 2 : index
    %c0_182 = arith.constant 0 : index
    %c0_183 = arith.constant 0 : index
    %146 = vector.load %arg4[%c2_181, %c0_182, %c0_183] : memref<3x64x32xf32, #tpu.memory_space<vmem>>, vector<1x64x32xf32>
    %147 = vector.shape_cast %146 : vector<1x64x32xf32> to vector<64x32xf32>
    %cst_184 = arith.constant dense<0.000000e+00> : vector<64x256xf32>
    %148 = tpu.matmul %147, %137, %cst_184 {dimension_numbers = #tpu.dot_dimension_numbers<[1], [0], [0], [1], [0, 0, 1, 1], [], []>} : vector<64x32xf32>, vector<32x256xf32>, vector<64x256xf32> -> vector<64x256xf32>
    %c2_i32 = arith.constant 2 : i32
    %149 = tpu.dynamic_rotate %148 by %c2_i32 dim 1 : vector<64x256xf32>, i32 -> vector<64x256xf32>
    %150 = arith.addf %145, %149 : vector<64x256xf32>
    %c0_185 = arith.constant 0 : index
    %c0_186 = arith.constant 0 : index
    %151 = vector.load %arg5[%c0_185, %c0_186] : memref<64x1xf32, #tpu.memory_space<vmem>>, vector<64x1xf32>
    %152 = vector.broadcast %151 : vector<64x1xf32> to vector<64x256xf32>
    %153 = arith.addf %150, %152 : vector<64x256xf32>
    %cst_187 = arith.constant 0.000000e+00 : f32
    %154 = vector.broadcast %cst_187 : f32 to vector<64x256xf32>
    %155 = arith.maximumf %153, %154 : vector<64x256xf32>
    %156 = tpu.iota {dimensions = array<i32: 1>} : vector<64x256xi32>
    %c127_i32 = arith.constant 127 : i32
    %157 = vector.broadcast %c127_i32 : i32 to vector<64x256xi32>
    %158 = arith.andi %156, %157 : vector<64x256xi32>
    %c69_i32 = arith.constant 69 : i32
    %159 = vector.broadcast %c69_i32 : i32 to vector<64x256xi32>
    %160 = arith.cmpi slt, %158, %159 : vector<64x256xi32>
    %cst_188 = arith.constant 0.000000e+00 : f32
    %161 = vector.broadcast %cst_188 : f32 to vector<64x256xf32>
    %162 = arith.select %160, %155, %161 : vector<64x256xi1>, vector<64x256xf32>
    %c0_189 = arith.constant 0 : index
    %c0_190 = arith.constant 0 : index
    %163 = vector.load %arg6[%c0_189, %c0_190] : memref<3x64xf32, #tpu.memory_space<vmem>>, vector<3x64xf32>
    %cst_191 = arith.constant dense<0.000000e+00> : vector<3x256xf32>
    %164 = tpu.matmul %163, %162, %cst_191 {dimension_numbers = #tpu.dot_dimension_numbers<[1], [0], [0], [1], [0, 0, 1, 1], [], []>} : vector<3x64xf32>, vector<64x256xf32>, vector<3x256xf32> -> vector<3x256xf32>
    %165 = vector.extract_strided_slice %164 {offsets = [0, 0], sizes = [1, 256], strides = [1, 1]} : vector<3x256xf32> to vector<1x256xf32>
    %166 = vector.extract_strided_slice %164 {offsets = [1, 0], sizes = [1, 256], strides = [1, 1]} : vector<3x256xf32> to vector<1x256xf32>
    %c1_i32_192 = arith.constant 1 : i32
    %167 = tpu.dynamic_rotate %166 by %c1_i32_192 dim 1 : vector<1x256xf32>, i32 -> vector<1x256xf32>
    %168 = arith.addf %165, %167 : vector<1x256xf32>
    %169 = vector.extract_strided_slice %164 {offsets = [2, 0], sizes = [1, 256], strides = [1, 1]} : vector<3x256xf32> to vector<1x256xf32>
    %c2_i32_193 = arith.constant 2 : i32
    %170 = tpu.dynamic_rotate %169 by %c2_i32_193 dim 1 : vector<1x256xf32>, i32 -> vector<1x256xf32>
    %171 = arith.addf %168, %170 : vector<1x256xf32>
    %c0_194 = arith.constant 0 : index
    %c0_195 = arith.constant 0 : index
    %172 = vector.load %arg7[%c0_194, %c0_195] : memref<1x1xf32, #tpu.memory_space<vmem>>, vector<1x1xf32>
    %173 = vector.broadcast %172 : vector<1x1xf32> to vector<1x256xf32>
    %174 = arith.addf %171, %173 : vector<1x256xf32>
    %175 = vector.extract_strided_slice %174 {offsets = [0, 0], sizes = [1, 128], strides = [1, 1]} : vector<1x256xf32> to vector<1x128xf32>
    %176 = vector.extract_strided_slice %174 {offsets = [0, 128], sizes = [1, 128], strides = [1, 1]} : vector<1x256xf32> to vector<1x128xf32>
    %177 = tpu.concatenate %175, %176 in 0 : vector<1x128xf32>, vector<1x128xf32> -> vector<2x128xf32>
    %c0_196 = arith.constant 0 : index
    %c0_197 = arith.constant 0 : index
    %c0_198 = arith.constant 0 : index
    %178 = vector.load %arg8[%c0_196, %c0_197, %c0_198] : memref<1x2x128xf32, #tpu.memory_space<vmem>>, vector<1x2x128xf32>
    %179 = vector.shape_cast %178 : vector<1x2x128xf32> to vector<2x128xf32>
    %180 = vector.shape_cast %177 : vector<2x128xf32> to vector<1x2x128xf32>
    tpu.vector_store %arg8[%c0_196, %c0_197, %c0_198], %180 {strides = array<i32>} : memref<1x2x128xf32, #tpu.memory_space<vmem>>, vector<1x2x128xf32>,
    return
  }
  func.func @transform_0(%arg0: i32) -> (i32, i32, i32) {
    %c0_i32 = arith.constant 0 : i32
    %c0_i32_0 = arith.constant 0 : i32
    %c0_i32_1 = arith.constant 0 : i32
    return %arg0, %c0_i32, %c0_i32_0 : i32, i32, i32
  }
  func.func @transform_1(%arg0: i32) -> (i32, i32) {
    %c0_i32 = arith.constant 0 : i32
    %c0_i32_0 = arith.constant 0 : i32
    %c0_i32_1 = arith.constant 0 : i32
    return %c0_i32, %c0_i32_0 : i32, i32
  }
  func.func @transform_2(%arg0: i32) -> (i32, i32) {
    %c0_i32 = arith.constant 0 : i32
    %c0_i32_0 = arith.constant 0 : i32
    %c0_i32_1 = arith.constant 0 : i32
    return %c0_i32, %c0_i32_0 : i32, i32
  }
  func.func @transform_3(%arg0: i32) -> (i32, i32, i32) {
    %c0_i32 = arith.constant 0 : i32
    %c0_i32_0 = arith.constant 0 : i32
    %c0_i32_1 = arith.constant 0 : i32
    %c0_i32_2 = arith.constant 0 : i32
    return %c0_i32, %c0_i32_0, %c0_i32_1 : i32, i32, i32
  }
  func.func @transform_4(%arg0: i32) -> (i32, i32) {
    %c0_i32 = arith.constant 0 : i32
    %c0_i32_0 = arith.constant 0 : i32
    %c0_i32_1 = arith.constant 0 : i32
    return %c0_i32, %c0_i32_0 : i32, i32
  }
  func.func @transform_5(%arg0: i32) -> (i32, i32) {
    %c0_i32 = arith.constant 0 : i32
    %c0_i32_0 = arith.constant 0 : i32
    %c0_i32_1 = arith.constant 0 : i32
    return %c0_i32, %c0_i32_0 : i32, i32
  }
  func.func @transform_6(%arg0: i32) -> (i32, i32) {
    %c0_i32 = arith.constant 0 : i32
    %c0_i32_0 = arith.constant 0 : i32
    %c0_i32_1 = arith.constant 0 : i32
    return %c0_i32, %c0_i32_0 : i32, i32
  }
  func.func @transform_7(%arg0: i32) -> (i32, i32, i32) {
    %c0_i32 = arith.constant 0 : i32
    %c0_i32_0 = arith.constant 0 : i32
    %c0_i32_1 = arith.constant 0 : i32
    return %arg0, %c0_i32, %c0_i32_0 : i32, i32, i32
  }
}

</mosaic_0001>

<llo_original>
// kernel: tpu_custom_call.1
$region0: #{tpu_custom_call.1}
  #allocation0 [shape = 'u32[]', space=smem, size = 0x4, offset = 0x4, fixed_abs, tag = 'smem constant byte address 0x4 - core index']
  #allocation1 [shape = 'u32[72,128]{1,0:T(1,128)}', space=vmem, size = 0x9000, scoped, tag = 'internal scratch']
  #allocation2 [shape = 'f32[1,8192]{1,0:T(1,128)}', space=vmem, size = 0x8000, scoped, tag = 'scratch operand']
  #allocation3 [shape = 'f32[32,256]{1,0:T(8,128)}', space=vmem, size = 0x8000, scoped, tag = 'scratch operand']
  #allocation4 [shape = 'f32[1,1]{1,0:T(1,128)S(1)}', space=vmem, size = 0x200, scoped, tag = 'scoped memory for tpu_custom_call.1']
  %s0 = inlined_call_operand.vmem [shape: f32[2,1,32], index: 0, kind: input, shape index: {}]
  %s1 = inlined_call_operand.hbm [shape: f32[32,8192], index: 1, kind: input, shape index: {}]
  %s2 = inlined_call_operand.vmem [shape: f32[1,8192], index: 2, kind: input, shape index: {}]
  %s3 = inlined_call_operand.vmem [shape: f32[3,64,32], index: 3, kind: input, shape index: {}]
  %s4 = inlined_call_operand.vmem [shape: f32[64,1], index: 4, kind: input, shape index: {}]
  %s5 = inlined_call_operand.vmem [shape: f32[3,64], index: 5, kind: input, shape index: {}]
  %s6 = inlined_call_operand.<no memory space> [shape: f32[1,1], index: 6, kind: input, shape index: {}]
  %s7 = inlined_call_operand.hbm [shape: f32[2,2,128], index: 7, kind: output, shape index: {}]
  %s8 = sld [smem:[#allocation0]]
  $region65: #{tpu_custom_call.1} parent=0
    _
  %s10 = ssub.s32 1, %s8
  %s11 = scalar_select 0, %s10, %s8
  %v12 = vstv %s6
  %13 = vst [vmem:[#allocation4] sm:$0x1] %v12
  $region1: #{tpu_custom_call.1} parent=0
    #allocation5 [shape = 'u8[1048576]{0}', space=vmem, size = 0x100000, scoped, tag = 'input window, operand 1, single buffered']
    #allocation6 [shape = 's32[2]{0}', space=sflag, size = 0x8, scoped, tag = 'scoped memory for tpu_custom_call.1']
    #allocation7 [shape = 's32[2]{0}', space=sflag, size = 0x8, scoped, tag = 'scoped memory for tpu_custom_call.1']
    #allocation8 [shape = 'u8[2048]{0}', space=vmem, size = 0x800, scoped, tag = 'output window, operand 0']
    %14 = vsyncpa [#allocation6], 0
    %15 = vsyncpa [#allocation7], 0
    %s16 = scalar_lea.sflag [#allocation7], 1
    %17 = vsyncpa %s16, 0
    loop: start=0, step=1, limit=4
    $region2: #{tpu_custom_call.1} parent=1 // loop_pre_header
      _
    $region3: #{tpu_custom_call.1} parent=1 // loop_header
      %s19 = sphi 0, %s23
      %p20 = scmp.ge.s32.totalorder %s19, 4
      %s29 = sphi 0, %s31
      %s32 = sphi 0, %s29
      %s33 = sphi 0, %s32
      %s49 = sphi 0, %s33
      %s53 = sphi 0, %s53
      %s55 = sphi 0, %s53
      %s56 = sphi 0, %s55
      %s70 = sphi 0, %s56
      %s74 = sphi 0, %s74
      %s76 = sphi 0, %s74
      %s77 = sphi 0, %s76
      %s91 = sphi 0, %s77
      %s95 = sphi 0, %s95
      %s97 = sphi 0, %s95
      %s98 = sphi 0, %s97
      %s112 = sphi 0, %s98
      %s116 = sphi 0, %s116
      %s118 = sphi 0, %s116
      %s119 = sphi 0, %s118
      %s133 = sphi 0, %s119
      %s137 = sphi 0, %s137
      %s139 = sphi 0, %s137
      %s140 = sphi 0, %s139
      %s154 = sphi 0, %s140
      %s158 = sphi 0, %s158
      %s160 = sphi 0, %s158
      %s161 = sphi 0, %s160
      %s175 = sphi 0, %s161
      %s181 = sphi 0, %s183
      %s184 = sphi 0, %s181
      %s185 = sphi 0, %s184
      %s201 = sphi 0, %s185
    $region4: #{tpu_custom_call.1} parent=1 // loop_header_branch
      %22 = sbr.rel (%p20) target = $region8
    $region5: #{tpu_custom_call.1} parent=1 // loop_body
      %s24 = ssub.s32 %s19, 1
      %s25 = ssub.s32 %s19, 2
      %s26 = sadd.s32 %s19, 1
      %s27 = ssub.s32 %s19, %s26
      %p28 = scmp.eq.s32.totalorder %s27, 0
      %s30 = sadd.s32 %s29, 1
      %s31 = scalar_select %p28, %s29, %s30
      %p34 = pneg %p28
      %p35 = scmp.eq.s32.totalorder %s19, 1
      %p36 = por %p34, %p35
      %p37 = scmp.ne.s32.totalorder %s29, %s32
      %p38 = scmp.eq.s32.totalorder %s19, 0
      %p39 = por %p37, %p38
      %p40 = scmp.ne.s32.totalorder %s29, %s32
      %p41 = scmp.eq.s32.totalorder %s24, 1
      %p42 = por %p40, %p41
      %p43 = scmp.ne.s32.totalorder %s32, %s33
      %p44 = scmp.eq.s32.totalorder %s24, 0
      %p45 = por %p43, %p44
      %p46 = scmp.ne.s32.totalorder %s32, %s33
      %p47 = scmp.eq.s32.totalorder %s25, 1
      %p48 = por %p46, %p47
      %p50 = scmp.ne.s32.totalorder %s33, %s49
      %p51 = scmp.eq.s32.totalorder %s25, 0
      %p52 = por %p50, %p51
      %s54 = sadd.s32 %s53, 1
      %p57 = scmp.eq.s32.totalorder %s19, 1
      %p58 = scmp.ne.s32.totalorder %s53, %s55
      %p59 = scmp.eq.s32.totalorder %s19, 0
      %p60 = por %p58, %p59
      %p61 = scmp.ne.s32.totalorder %s53, %s55
      %p62 = scmp.eq.s32.totalorder %s24, 1
      %p63 = por %p61, %p62
      %p64 = scmp.ne.s32.totalorder %s55, %s56
      %p65 = scmp.eq.s32.totalorder %s24, 0
      %p66 = por %p64, %p65
      %p67 = scmp.ne.s32.totalorder %s55, %s56
      %p68 = scmp.eq.s32.totalorder %s25, 1
      %p69 = por %p67, %p68
      %p71 = scmp.ne.s32.totalorder %s56, %s70
      %p72 = scmp.eq.s32.totalorder %s25, 0
      %p73 = por %p71, %p72
      %s75 = sadd.s32 %s74, 1
      %p78 = scmp.eq.s32.totalorder %s19, 1
      %p79 = scmp.ne.s32.totalorder %s74, %s76
      %p80 = scmp.eq.s32.totalorder %s19, 0
      %p81 = por %p79, %p80
      %p82 = scmp.ne.s32.totalorder %s74, %s76
      %p83 = scmp.eq.s32.totalorder %s24, 1
      %p84 = por %p82, %p83
      %p85 = scmp.ne.s32.totalorder %s76, %s77
      %p86 = scmp.eq.s32.totalorder %s24, 0
      %p87 = por %p85, %p86
      %p88 = scmp.ne.s32.totalorder %s76, %s77
      %p89 = scmp.eq.s32.totalorder %s25, 1
      %p90 = por %p88, %p89
      %p92 = scmp.ne.s32.totalorder %s77, %s91
      %p93 = scmp.eq.s32.totalorder %s25, 0
      %p94 = por %p92, %p93
      %s96 = sadd.s32 %s95, 1
      %p99 = scmp.eq.s32.totalorder %s19, 1
      %p100 = scmp.ne.s32.totalorder %s95, %s97
      %p101 = scmp.eq.s32.totalorder %s19, 0
      %p102 = por %p100, %p101
      %p103 = scmp.ne.s32.totalorder %s95, %s97
      %p104 = scmp.eq.s32.totalorder %s24, 1
      %p105 = por %p103, %p104
      %p106 = scmp.ne.s32.totalorder %s97, %s98
      %p107 = scmp.eq.s32.totalorder %s24, 0
      %p108 = por %p106, %p107
      %p109 = scmp.ne.s32.totalorder %s97, %s98
      %p110 = scmp.eq.s32.totalorder %s25, 1
      %p111 = por %p109, %p110
      %p113 = scmp.ne.s32.totalorder %s98, %s112
      %p114 = scmp.eq.s32.totalorder %s25, 0
      %p115 = por %p113, %p114
      %s117 = sadd.s32 %s116, 1
      %p120 = scmp.eq.s32.totalorder %s19, 1
      %p121 = scmp.ne.s32.totalorder %s116, %s118
      %p122 = scmp.eq.s32.totalorder %s19, 0
      %p123 = por %p121, %p122
      %p124 = scmp.ne.s32.totalorder %s116, %s118
      %p125 = scmp.eq.s32.totalorder %s24, 1
      %p126 = por %p124, %p125
      %p127 = scmp.ne.s32.totalorder %s118, %s119
      %p128 = scmp.eq.s32.totalorder %s24, 0
      %p129 = por %p127, %p128
      %p130 = scmp.ne.s32.totalorder %s118, %s119
      %p131 = scmp.eq.s32.totalorder %s25, 1
      %p132 = por %p130, %p131
      %p134 = scmp.ne.s32.totalorder %s119, %s133
      %p135 = scmp.eq.s32.totalorder %s25, 0
      %p136 = por %p134, %p135
      %s138 = sadd.s32 %s137, 1
      %p141 = scmp.eq.s32.totalorder %s19, 1
      %p142 = scmp.ne.s32.totalorder %s137, %s139
      %p143 = scmp.eq.s32.totalorder %s19, 0
      %p144 = por %p142, %p143
      %p145 = scmp.ne.s32.totalorder %s137, %s139
      %p146 = scmp.eq.s32.totalorder %s24, 1
      %p147 = por %p145, %p146
      %p148 = scmp.ne.s32.totalorder %s139, %s140
      %p149 = scmp.eq.s32.totalorder %s24, 0
      %p150 = por %p148, %p149
      %p151 = scmp.ne.s32.totalorder %s139, %s140
      %p152 = scmp.eq.s32.totalorder %s25, 1
      %p153 = por %p151, %p152
      %p155 = scmp.ne.s32.totalorder %s140, %s154
      %p156 = scmp.eq.s32.totalorder %s25, 0
      %p157 = por %p155, %p156
      %s159 = sadd.s32 %s158, 1
      %p162 = scmp.eq.s32.totalorder %s19, 1
      %p163 = scmp.ne.s32.totalorder %s158, %s160
      %p164 = scmp.eq.s32.totalorder %s19, 0
      %p165 = por %p163, %p164
      %p166 = scmp.ne.s32.totalorder %s158, %s160
      %p167 = scmp.eq.s32.totalorder %s24, 1
      %p168 = por %p166, %p167
      %p169 = scmp.ne.s32.totalorder %s160, %s161
      %p170 = scmp.eq.s32.totalorder %s24, 0
      %p171 = por %p169, %p170
      %p172 = scmp.ne.s32.totalorder %s160, %s161
      %p173 = scmp.eq.s32.totalorder %s25, 1
      %p174 = por %p172, %p173
      %p176 = scmp.ne.s32.totalorder %s161, %s175
      %p177 = scmp.eq.s32.totalorder %s25, 0
      %p178 = por %p176, %p177
      %s179 = ssub.s32 %s19, %s26
      %p180 = scmp.eq.s32.totalorder %s179, 0
      %s182 = sadd.s32 %s181, 1
      %s183 = scalar_select %p180, %s181, %s182
      %p186 = pneg %p180
      %p187 = scmp.eq.s32.totalorder %s19, 1
      %p188 = por %p186, %p187
      %p189 = scmp.ne.s32.totalorder %s181, %s184
      %p190 = scmp.eq.s32.totalorder %s19, 0
      %p191 = por %p189, %p190
      %p192 = scmp.ne.s32.totalorder %s181, %s184
      %p193 = scmp.eq.s32.totalorder %s24, 1
      %p194 = por %p192, %p193
      %p195 = scmp.ne.s32.totalorder %s184, %s185
      %p196 = scmp.eq.s32.totalorder %s24, 0
      %p197 = por %p195, %p196
      %p198 = scmp.ne.s32.totalorder %s184, %s185
      %p199 = scmp.eq.s32.totalorder %s25, 1
      %p200 = por %p198, %p199
      %p202 = scmp.ne.s32.totalorder %s185, %s201
      %p203 = scmp.eq.s32.totalorder %s25, 0
      %p204 = por %p202, %p203
      %p205 = scmp.le.s32.totalorder 1, %s19
      %p206 = scmp.lt.s32.totalorder %s19, 3
      %p207 = pnand %p205, %p206
      %p208 = pneg %p207
      // Predicated region
      $region9: #{tpu_custom_call.1} parent=5 // pred_check
        _
      $region10: #{tpu_custom_call.1} parent=5 // pred_check_branch
        %210 = sbr.rel (%p207) target = $region12
      $region11: #{tpu_custom_call.1} parent=5 // pred_region
        %s211 = ssub.s32 %s19, 1
        // Predicated region
        $region13: #{tpu_custom_call.1} parent=11 // pred_check
          %p212 = pneg %p66
        $region14: #{tpu_custom_call.1} parent=11 // pred_check_branch
          %214 = sbr.rel (%p212) target = $region16
        $region15: #{tpu_custom_call.1} parent=11 // pred_region
          %216 = vsyncadd [#allocation6], 0
          %s217 = sshll.u32 %s1, 4
          %s218 = int_to_ptr.hbm [resolvable:$true] %s217
          %s219 = sshll.u32 [#allocation5], 4
          %s220 = int_to_ptr.vmem [resolvable:$true] %s219
          %225 = dma.hbm_to_vmem [thread:$0]  %s218, 32768, %s220, [#allocation6], 8192, 8192, 512
        $region16: #{tpu_custom_call.1} parent=11 // pred_fallthru
          _
        // Predicated region
        $region17: #{tpu_custom_call.1} parent=11 // pred_check
          %p226 = pneg %p87
        $region18: #{tpu_custom_call.1} parent=11 // pred_check_branch
          %228 = sbr.rel (%p226) target = $region20
        $region19: #{tpu_custom_call.1} parent=11 // pred_region
          _
        $region20: #{tpu_custom_call.1} parent=11 // pred_fallthru
          _
        // Predicated region
        $region21: #{tpu_custom_call.1} parent=11 // pred_check
          %p229 = pneg %p108
        $region22: #{tpu_custom_call.1} parent=11 // pred_check_branch
          %231 = sbr.rel (%p229) target = $region24
        $region23: #{tpu_custom_call.1} parent=11 // pred_region
          _
        $region24: #{tpu_custom_call.1} parent=11 // pred_fallthru
          _
        // Predicated region
        $region25: #{tpu_custom_call.1} parent=11 // pred_check
          %p232 = pneg %p129
        $region26: #{tpu_custom_call.1} parent=11 // pred_check_branch
          %234 = sbr.rel (%p232) target = $region28
        $region27: #{tpu_custom_call.1} parent=11 // pred_region
          _
        $region28: #{tpu_custom_call.1} parent=11 // pred_fallthru
          _
        // Predicated region
        $region29: #{tpu_custom_call.1} parent=11 // pred_check
          %p235 = pneg %p150
        $region30: #{tpu_custom_call.1} parent=11 // pred_check_branch
          %237 = sbr.rel (%p235) target = $region32
        $region31: #{tpu_custom_call.1} parent=11 // pred_region
          _
        $region32: #{tpu_custom_call.1} parent=11 // pred_fallthru
          _
        // Predicated region
        $region33: #{tpu_custom_call.1} parent=11 // pred_check
          %p238 = pneg %p171
        $region34: #{tpu_custom_call.1} parent=11 // pred_check_branch
          %240 = sbr.rel (%p238) target = $region36
        $region35: #{tpu_custom_call.1} parent=11 // pred_region
          _
        $region36: #{tpu_custom_call.1} parent=11 // pred_fallthru
          _
      $region12: #{tpu_custom_call.1} parent=5 // pred_fallthru
        _
      %p241 = scmp.lt.s32.totalorder %s19, 2
      // Predicated region
      $region37: #{tpu_custom_call.1} parent=5 // pred_check
        %p242 = pneg %p241
      $region38: #{tpu_custom_call.1} parent=5 // pred_check_branch
        %244 = sbr.rel (%p242) target = $region40
      $region39: #{tpu_custom_call.1} parent=5 // pred_region
        // Predicated region
        $region41: #{tpu_custom_call.1} parent=39 // pred_check
          %p245 = pneg %p39
        $region42: #{tpu_custom_call.1} parent=39 // pred_check_branch
          %247 = sbr.rel (%p245) target = $region44
        $region43: #{tpu_custom_call.1} parent=39 // pred_region
          %p248 = scmp.lt.s32.totalorder %s19, 1
          %s249 = scalar_select %p248, %s19, 1
          %s250 = scalar_lea.vmem %s0, %s249
        $region44: #{tpu_custom_call.1} parent=39 // pred_fallthru
          _
      $region40: #{tpu_custom_call.1} parent=5 // pred_fallthru
        _
      %p251 = scmp.le.s32.totalorder 1, %s19
      %p252 = scmp.lt.s32.totalorder %s19, 3
      %p253 = pnand %p251, %p252
      %p254 = pneg %p253
      // Predicated region
      $region45: #{tpu_custom_call.1} parent=5 // pred_check
        _
      $region46: #{tpu_custom_call.1} parent=5 // pred_check_branch
        %256 = sbr.rel (%p253) target = $region48
      $region47: #{tpu_custom_call.1} parent=5 // pred_region
        %s257 = ssub.s32 %s19, 1
        // Predicated region
        $region49: #{tpu_custom_call.1} parent=47 // pred_check
          %p258 = pneg %p66
        $region50: #{tpu_custom_call.1} parent=47 // pred_check_branch
          %260 = sbr.rel (%p258) target = $region52
        $region51: #{tpu_custom_call.1} parent=47 // pred_region
          %262 = dma.done [#allocation6], 32768
        $region52: #{tpu_custom_call.1} parent=47 // pred_fallthru
          _
        %p263 = scmp.lt.s32.totalorder %s24, 1
        %s264 = scalar_select %p263, %s24, 1
        %s265 = scalar_lea.vmem %s0, %s264
        %p266 = pneg %p45
        %p267 = pneg %p42
        %p268 = pneg %p66
        %p269 = pneg %p63
        %p270 = pneg %p87
        %p271 = pneg %p84
        %p272 = pneg %p108
        %p273 = pneg %p105
        %p274 = pneg %p129
        %p275 = pneg %p126
        %p276 = pneg %p150
        %p277 = pneg %p147
        %p278 = pneg %p171
        %p279 = pneg %p168
        %p280 = pneg %p197
        %p281 = pneg %p194
        %s282 = sand.u32 %s184, 1
        %s283 = scalar_lea.sflag [#allocation7], %s282
        %s284 = sand.u32 %s184, 1
        %s285 = smul.addr %s284, 2
        %s286 = scalar_lea.vmem [#allocation8], %s285
        %p287 = scmp.lt.s32.totalorder %s24, 1
        %s288 = scalar_select %p287, %s24, 1
        %s289 = scalar_lea.vmem %s0, %s288
        %v290 = vld [vmem:[%s289] sm:$0x1]
        %v291 = vld [vmem:[#allocation5] sm:$0xff]
        %v292 = vld [vmem:[#allocation5 + $0x8] sm:$0xff]
        %v293 = vld [vmem:[#allocation5 + $0x10] sm:$0xff]
        %v294 = vld [vmem:[#allocation5 + $0x18] sm:$0xff]
        %v295 = vld [vmem:[#allocation5 + $0x20] sm:$0xff]
        %v296 = vld [vmem:[#allocation5 + $0x28] sm:$0xff]
        %v297 = vld [vmem:[#allocation5 + $0x30] sm:$0xff]
        %v298 = vld [vmem:[#allocation5 + $0x38] sm:$0xff]
        %v299 = vld [vmem:[#allocation5 + $0x40] sm:$0xff]
        %v300 = vld [vmem:[#allocation5 + $0x48] sm:$0xff]
        %v301 = vld [vmem:[#allocation5 + $0x50] sm:$0xff]
        %v302 = vld [vmem:[#allocation5 + $0x58] sm:$0xff]
        %v303 = vld [vmem:[#allocation5 + $0x60] sm:$0xff]
        %v304 = vld [vmem:[#allocation5 + $0x68] sm:$0xff]
        %v305 = vld [vmem:[#allocation5 + $0x70] sm:$0xff]
        %v306 = vld [vmem:[#allocation5 + $0x78] sm:$0xff]
        %v307 = vld [vmem:[#allocation5 + $0x80] sm:$0xff]
        %v308 = vld [vmem:[#allocation5 + $0x88] sm:$0xff]
        %v309 = vld [vmem:[#allocation5 + $0x90] sm:$0xff]
        %v310 = vld [vmem:[#allocation5 + $0x98] sm:$0xff]
        %v311 = vld [vmem:[#allocation5 + $0xa0] sm:$0xff]
        %v312 = vld [vmem:[#allocation5 + $0xa8] sm:$0xff]
        %v313 = vld [vmem:[#allocation5 + $0xb0] sm:$0xff]
        %v314 = vld [vmem:[#allocation5 + $0xb8] sm:$0xff]
        %v315 = vld [vmem:[#allocation5 + $0xc0] sm:$0xff]
        %v316 = vld [vmem:[#allocation5 + $0xc8] sm:$0xff]
        %v317 = vld [vmem:[#allocation5 + $0xd0] sm:$0xff]
        %v318 = vld [vmem:[#allocation5 + $0xd8] sm:$0xff]
        %v319 = vld [vmem:[#allocation5 + $0xe0] sm:$0xff]
        %v320 = vld [vmem:[#allocation5 + $0xe8] sm:$0xff]
        %v321 = vld [vmem:[#allocation5 + $0xf0] sm:$0xff]
        %v322 = vld [vmem:[#allocation5 + $0xf8] sm:$0xff]
        %v323 = vld [vmem:[#allocation5 + $0x100] sm:$0xff]
        %v324 = vld [vmem:[#allocation5 + $0x108] sm:$0xff]
        %v325 = vld [vmem:[#allocation5 + $0x110] sm:$0xff]
        %v326 = vld [vmem:[#allocation5 + $0x118] sm:$0xff]
        %v327 = vld [vmem:[#allocation5 + $0x120] sm:$0xff]
        %v328 = vld [vmem:[#allocation5 + $0x128] sm:$0xff]
        %v329 = vld [vmem:[#allocation5 + $0x130] sm:$0xff]
        %v330 = vld [vmem:[#allocation5 + $0x138] sm:$0xff]
        %v331 = vld [vmem:[#allocation5 + $0x140] sm:$0xff]
        %v332 = vld [vmem:[#allocation5 + $0x148] sm:$0xff]
        %v333 = vld [vmem:[#allocation5 + $0x150] sm:$0xff]
        %v334 = vld [vmem:[#allocation5 + $0x158] sm:$0xff]
        %v335 = vld [vmem:[#allocation5 + $0x160] sm:$0xff]
        %v336 = vld [vmem:[#allocation5 + $0x168] sm:$0xff]
        %v337 = vld [vmem:[#allocation5 + $0x170] sm:$0xff]
        %v338 = vld [vmem:[#allocation5 + $0x178] sm:$0xff]
        %v339 = vld [vmem:[#allocation5 + $0x180] sm:$0xff]
        %v340 = vld [vmem:[#allocation5 + $0x188] sm:$0xff]
        %v341 = vld [vmem:[#allocation5 + $0x190] sm:$0xff]
        %v342 = vld [vmem:[#allocation5 + $0x198] sm:$0xff]
        %v343 = vld [vmem:[#allocation5 + $0x1a0] sm:$0xff]
        %v344 = vld [vmem:[#allocation5 + $0x1a8] sm:$0xff]
        %v345 = vld [vmem:[#allocation5 + $0x1b0] sm:$0xff]
        %v346 = vld [vmem:[#allocation5 + $0x1b8] sm:$0xff]
        %v347 = vld [vmem:[#allocation5 + $0x1c0] sm:$0xff]
        %v348 = vld [vmem:[#allocation5 + $0x1c8] sm:$0xff]
        %v349 = vld [vmem:[#allocation5 + $0x1d0] sm:$0xff]
        %v350 = vld [vmem:[#allocation5 + $0x1d8] sm:$0xff]
        %v351 = vld [vmem:[#allocation5 + $0x1e0] sm:$0xff]
        %v352 = vld [vmem:[#allocation5 + $0x1e8] sm:$0xff]
        %v353 = vld [vmem:[#allocation5 + $0x1f0] sm:$0xff]
        %v354 = vld [vmem:[#allocation5 + $0x1f8] sm:$0xff]
        %v355 = vld [vmem:[#allocation5 + $0x200] sm:$0xff]
        %v356 = vld [vmem:[#allocation5 + $0x208] sm:$0xff]
        %v357 = vld [vmem:[#allocation5 + $0x210] sm:$0xff]
        %v358 = vld [vmem:[#allocation5 + $0x218] sm:$0xff]
        %v359 = vld [vmem:[#allocation5 + $0x220] sm:$0xff]
        %v360 = vld [vmem:[#allocation5 + $0x228] sm:$0xff]
        %v361 = vld [vmem:[#allocation5 + $0x230] sm:$0xff]
        %v362 = vld [vmem:[#allocation5 + $0x238] sm:$0xff]
        %v363 = vld [vmem:[#allocation5 + $0x240] sm:$0xff]
        %v364 = vld [vmem:[#allocation5 + $0x248] sm:$0xff]
        %v365 = vld [vmem:[#allocation5 + $0x250] sm:$0xff]
        %v366 = vld [vmem:[#allocation5 + $0x258] sm:$0xff]
        %v367 = vld [vmem:[#allocation5 + $0x260] sm:$0xff]
        %v368 = vld [vmem:[#allocation5 + $0x268] sm:$0xff]
        %v369 = vld [vmem:[#allocation5 + $0x270] sm:$0xff]
        %v370 = vld [vmem:[#allocation5 + $0x278] sm:$0xff]
        %v371 = vld [vmem:[#allocation5 + $0x280] sm:$0xff]
        %v372 = vld [vmem:[#allocation5 + $0x288] sm:$0xff]
        %v373 = vld [vmem:[#allocation5 + $0x290] sm:$0xff]
        %v374 = vld [vmem:[#allocation5 + $0x298] sm:$0xff]
        %v375 = vld [vmem:[#allocation5 + $0x2a0] sm:$0xff]
        %v376 = vld [vmem:[#allocation5 + $0x2a8] sm:$0xff]
        %v377 = vld [vmem:[#allocation5 + $0x2b0] sm:$0xff]
        %v378 = vld [vmem:[#allocation5 + $0x2b8] sm:$0xff]
        %v379 = vld [vmem:[#allocation5 + $0x2c0] sm:$0xff]
        %v380 = vld [vmem:[#allocation5 + $0x2c8] sm:$0xff]
        %v381 = vld [vmem:[#allocation5 + $0x2d0] sm:$0xff]
        %v382 = vld [vmem:[#allocation5 + $0x2d8] sm:$0xff]
        %v383 = vld [vmem:[#allocation5 + $0x2e0] sm:$0xff]
        %v384 = vld [vmem:[#allocation5 + $0x2e8] sm:$0xff]
        %v385 = vld [vmem:[#allocation5 + $0x2f0] sm:$0xff]
        %v386 = vld [vmem:[#allocation5 + $0x2f8] sm:$0xff]
        %v387 = vld [vmem:[#allocation5 + $0x300] sm:$0xff]
        %v388 = vld [vmem:[#allocation5 + $0x308] sm:$0xff]
        %v389 = vld [vmem:[#allocation5 + $0x310] sm:$0xff]
        %v390 = vld [vmem:[#allocation5 + $0x318] sm:$0xff]
        %v391 = vld [vmem:[#allocation5 + $0x320] sm:$0xff]
        %v392 = vld [vmem:[#allocation5 + $0x328] sm:$0xff]
        %v393 = vld [vmem:[#allocation5 + $0x330] sm:$0xff]
        %v394 = vld [vmem:[#allocation5 + $0x338] sm:$0xff]
        %v395 = vld [vmem:[#allocation5 + $0x340] sm:$0xff]
        %v396 = vld [vmem:[#allocation5 + $0x348] sm:$0xff]
        %v397 = vld [vmem:[#allocation5 + $0x350] sm:$0xff]
        %v398 = vld [vmem:[#allocation5 + $0x358] sm:$0xff]
        %v399 = vld [vmem:[#allocation5 + $0x360] sm:$0xff]
        %v400 = vld [vmem:[#allocation5 + $0x368] sm:$0xff]
        %v401 = vld [vmem:[#allocation5 + $0x370] sm:$0xff]
        %v402 = vld [vmem:[#allocation5 + $0x378] sm:$0xff]
        %v403 = vld [vmem:[#allocation5 + $0x380] sm:$0xff]
        %v404 = vld [vmem:[#allocation5 + $0x388] sm:$0xff]
        %v405 = vld [vmem:[#allocation5 + $0x390] sm:$0xff]
        %v406 = vld [vmem:[#allocation5 + $0x398] sm:$0xff]
        %v407 = vld [vmem:[#allocation5 + $0x3a0] sm:$0xff]
        %v408 = vld [vmem:[#allocation5 + $0x3a8] sm:$0xff]
        %v409 = vld [vmem:[#allocation5 + $0x3b0] sm:$0xff]
        %v410 = vld [vmem:[#allocation5 + $0x3b8] sm:$0xff]
        %v411 = vld [vmem:[#allocation5 + $0x3c0] sm:$0xff]
        %v412 = vld [vmem:[#allocation5 + $0x3c8] sm:$0xff]
        %v413 = vld [vmem:[#allocation5 + $0x3d0] sm:$0xff]
        %v414 = vld [vmem:[#allocation5 + $0x3d8] sm:$0xff]
        %v415 = vld [vmem:[#allocation5 + $0x3e0] sm:$0xff]
        %v416 = vld [vmem:[#allocation5 + $0x3e8] sm:$0xff]
        %v417 = vld [vmem:[#allocation5 + $0x3f0] sm:$0xff]
        %v418 = vld [vmem:[#allocation5 + $0x3f8] sm:$0xff]
        %v419 = vld [vmem:[#allocation5 + $0x400] sm:$0xff]
        %v420 = vld [vmem:[#allocation5 + $0x408] sm:$0xff]
        %v421 = vld [vmem:[#allocation5 + $0x410] sm:$0xff]
        %v422 = vld [vmem:[#allocation5 + $0x418] sm:$0xff]
        %v423 = vld [vmem:[#allocation5 + $0x420] sm:$0xff]
        %v424 = vld [vmem:[#allocation5 + $0x428] sm:$0xff]
        %v425 = vld [vmem:[#allocation5 + $0x430] sm:$0xff]
        %v426 = vld [vmem:[#allocation5 + $0x438] sm:$0xff]
        %v427 = vld [vmem:[#allocation5 + $0x440] sm:$0xff]
        %v428 = vld [vmem:[#allocation5 + $0x448] sm:$0xff]
        %v429 = vld [vmem:[#allocation5 + $0x450] sm:$0xff]
        %v430 = vld [vmem:[#allocation5 + $0x458] sm:$0xff]
        %v431 = vld [vmem:[#allocation5 + $0x460] sm:$0xff]
        %v432 = vld [vmem:[#allocation5 + $0x468] sm:$0xff]
        %v433 = vld [vmem:[#allocation5 + $0x470] sm:$0xff]
        %v434 = vld [vmem:[#allocation5 + $0x478] sm:$0xff]
        %v435 = vld [vmem:[#allocation5 + $0x480] sm:$0xff]
        %v436 = vld [vmem:[#allocation5 + $0x488] sm:$0xff]
        %v437 = vld [vmem:[#allocation5 + $0x490] sm:$0xff]
        %v438 = vld [vmem:[#allocation5 + $0x498] sm:$0xff]
        %v439 = vld [vmem:[#allocation5 + $0x4a0] sm:$0xff]
        %v440 = vld [vmem:[#allocation5 + $0x4a8] sm:$0xff]
        %v441 = vld [vmem:[#allocation5 + $0x4b0] sm:$0xff]
        %v442 = vld [vmem:[#allocation5 + $0x4b8] sm:$0xff]
        %v443 = vld [vmem:[#allocation5 + $0x4c0] sm:$0xff]
        %v444 = vld [vmem:[#allocation5 + $0x4c8] sm:$0xff]
        %v445 = vld [vmem:[#allocation5 + $0x4d0] sm:$0xff]
        %v446 = vld [vmem:[#allocation5 + $0x4d8] sm:$0xff]
        %v447 = vld [vmem:[#allocation5 + $0x4e0] sm:$0xff]
        %v448 = vld [vmem:[#allocation5 + $0x4e8] sm:$0xff]
        %v449 = vld [vmem:[#allocation5 + $0x4f0] sm:$0xff]
        %v450 = vld [vmem:[#allocation5 + $0x4f8] sm:$0xff]
        %v451 = vld [vmem:[#allocation5 + $0x500] sm:$0xff]
        %v452 = vld [vmem:[#allocation5 + $0x508] sm:$0xff]
        %v453 = vld [vmem:[#allocation5 + $0x510] sm:$0xff]
        %v454 = vld [vmem:[#allocation5 + $0x518] sm:$0xff]
        %v455 = vld [vmem:[#allocation5 + $0x520] sm:$0xff]
        %v456 = vld [vmem:[#allocation5 + $0x528] sm:$0xff]
        %v457 = vld [vmem:[#allocation5 + $0x530] sm:$0xff]
        %v458 = vld [vmem:[#allocation5 + $0x538] sm:$0xff]
        %v459 = vld [vmem:[#allocation5 + $0x540] sm:$0xff]
        %v460 = vld [vmem:[#allocation5 + $0x548] sm:$0xff]
        %v461 = vld [vmem:[#allocation5 + $0x550] sm:$0xff]
        %v462 = vld [vmem:[#allocation5 + $0x558] sm:$0xff]
        %v463 = vld [vmem:[#allocation5 + $0x560] sm:$0xff]
        %v464 = vld [vmem:[#allocation5 + $0x568] sm:$0xff]
        %v465 = vld [vmem:[#allocation5 + $0x570] sm:$0xff]
        %v466 = vld [vmem:[#allocation5 + $0x578] sm:$0xff]
        %v467 = vld [vmem:[#allocation5 + $0x580] sm:$0xff]
        %v468 = vld [vmem:[#allocation5 + $0x588] sm:$0xff]
        %v469 = vld [vmem:[#allocation5 + $0x590] sm:$0xff]
        %v470 = vld [vmem:[#allocation5 + $0x598] sm:$0xff]
        %v471 = vld [vmem:[#allocation5 + $0x5a0] sm:$0xff]
        %v472 = vld [vmem:[#allocation5 + $0x5a8] sm:$0xff]
        %v473 = vld [vmem:[#allocation5 + $0x5b0] sm:$0xff]
        %v474 = vld [vmem:[#allocation5 + $0x5b8] sm:$0xff]
        %v475 = vld [vmem:[#allocation5 + $0x5c0] sm:$0xff]
        %v476 = vld [vmem:[#allocation5 + $0x5c8] sm:$0xff]
        %v477 = vld [vmem:[#allocation5 + $0x5d0] sm:$0xff]
        %v478 = vld [vmem:[#allocation5 + $0x5d8] sm:$0xff]
        %v479 = vld [vmem:[#allocation5 + $0x5e0] sm:$0xff]
        %v480 = vld [vmem:[#allocation5 + $0x5e8] sm:$0xff]
        %v481 = vld [vmem:[#allocation5 + $0x5f0] sm:$0xff]
        %v482 = vld [vmem:[#allocation5 + $0x5f8] sm:$0xff]
        %v483 = vld [vmem:[#allocation5 + $0x600] sm:$0xff]
        %v484 = vld [vmem:[#allocation5 + $0x608] sm:$0xff]
        %v485 = vld [vmem:[#allocation5 + $0x610] sm:$0xff]
        %v486 = vld [vmem:[#allocation5 + $0x618] sm:$0xff]
        %v487 = vld [vmem:[#allocation5 + $0x620] sm:$0xff]
        %v488 = vld [vmem:[#allocation5 + $0x628] sm:$0xff]
        %v489 = vld [vmem:[#allocation5 + $0x630] sm:$0xff]
        %v490 = vld [vmem:[#allocation5 + $0x638] sm:$0xff]
        %v491 = vld [vmem:[#allocation5 + $0x640] sm:$0xff]
        %v492 = vld [vmem:[#allocation5 + $0x648] sm:$0xff]
        %v493 = vld [vmem:[#allocation5 + $0x650] sm:$0xff]
        %v494 = vld [vmem:[#allocation5 + $0x658] sm:$0xff]
        %v495 = vld [vmem:[#allocation5 + $0x660] sm:$0xff]
        %v496 = vld [vmem:[#allocation5 + $0x668] sm:$0xff]
        %v497 = vld [vmem:[#allocation5 + $0x670] sm:$0xff]
        %v498 = vld [vmem:[#allocation5 + $0x678] sm:$0xff]
        %v499 = vld [vmem:[#allocation5 + $0x680] sm:$0xff]
        %v500 = vld [vmem:[#allocation5 + $0x688] sm:$0xff]
        %v501 = vld [vmem:[#allocation5 + $0x690] sm:$0xff]
        %v502 = vld [vmem:[#allocation5 + $0x698] sm:$0xff]
        %v503 = vld [vmem:[#allocation5 + $0x6a0] sm:$0xff]
        %v504 = vld [vmem:[#allocation5 + $0x6a8] sm:$0xff]
        %v505 = vld [vmem:[#allocation5 + $0x6b0] sm:$0xff]
        %v506 = vld [vmem:[#allocation5 + $0x6b8] sm:$0xff]
        %v507 = vld [vmem:[#allocation5 + $0x6c0] sm:$0xff]
        %v508 = vld [vmem:[#allocation5 + $0x6c8] sm:$0xff]
        %v509 = vld [vmem:[#allocation5 + $0x6d0] sm:$0xff]
        %v510 = vld [vmem:[#allocation5 + $0x6d8] sm:$0xff]
        %v511 = vld [vmem:[#allocation5 + $0x6e0] sm:$0xff]
        %v512 = vld [vmem:[#allocation5 + $0x6e8] sm:$0xff]
        %v513 = vld [vmem:[#allocation5 + $0x6f0] sm:$0xff]
        %v514 = vld [vmem:[#allocation5 + $0x6f8] sm:$0xff]
        %v515 = vld [vmem:[#allocation5 + $0x700] sm:$0xff]
        %v516 = vld [vmem:[#allocation5 + $0x708] sm:$0xff]
        %v517 = vld [vmem:[#allocation5 + $0x710] sm:$0xff]
        %v518 = vld [vmem:[#allocation5 + $0x718] sm:$0xff]
        %v519 = vld [vmem:[#allocation5 + $0x720] sm:$0xff]
        %v520 = vld [vmem:[#allocation5 + $0x728] sm:$0xff]
        %v521 = vld [vmem:[#allocation5 + $0x730] sm:$0xff]
        %v522 = vld [vmem:[#allocation5 + $0x738] sm:$0xff]
        %v523 = vld [vmem:[#allocation5 + $0x740] sm:$0xff]
        %v524 = vld [vmem:[#allocation5 + $0x748] sm:$0xff]
        %v525 = vld [vmem:[#allocation5 + $0x750] sm:$0xff]
        %v526 = vld [vmem:[#allocation5 + $0x758] sm:$0xff]
        %v527 = vld [vmem:[#allocation5 + $0x760] sm:$0xff]
        %v528 = vld [vmem:[#allocation5 + $0x768] sm:$0xff]
        %v529 = vld [vmem:[#allocation5 + $0x770] sm:$0xff]
        %v530 = vld [vmem:[#allocation5 + $0x778] sm:$0xff]
        %v531 = vld [vmem:[#allocation5 + $0x780] sm:$0xff]
        %v532 = vld [vmem:[#allocation5 + $0x788] sm:$0xff]
        %v533 = vld [vmem:[#allocation5 + $0x790] sm:$0xff]
        %v534 = vld [vmem:[#allocation5 + $0x798] sm:$0xff]
        %v535 = vld [vmem:[#allocation5 + $0x7a0] sm:$0xff]
        %v536 = vld [vmem:[#allocation5 + $0x7a8] sm:$0xff]
        %v537 = vld [vmem:[#allocation5 + $0x7b0] sm:$0xff]
        %v538 = vld [vmem:[#allocation5 + $0x7b8] sm:$0xff]
        %v539 = vld [vmem:[#allocation5 + $0x7c0] sm:$0xff]
        %v540 = vld [vmem:[#allocation5 + $0x7c8] sm:$0xff]
        %v541 = vld [vmem:[#allocation5 + $0x7d0] sm:$0xff]
        %v542 = vld [vmem:[#allocation5 + $0x7d8] sm:$0xff]
        %v543 = vld [vmem:[#allocation5 + $0x7e0] sm:$0xff]
        %v544 = vld [vmem:[#allocation5 + $0x7e8] sm:$0xff]
        %v545 = vld [vmem:[#allocation5 + $0x7f0] sm:$0xff]
        %v546 = vld [vmem:[#allocation5 + $0x7f8] sm:$0xff]
        %v547 = vld [vmem:[%s2] sm:$0xff]
        %v548 = vld [vmem:[%s2 + $0x8] sm:$0xff]
        %v549 = vld [vmem:[%s2 + $0x10] sm:$0xff]
        %v550 = vld [vmem:[%s2 + $0x18] sm:$0xff]
        %v551 = vld [vmem:[%s2 + $0x20] sm:$0xff]
        %v552 = vld [vmem:[%s2 + $0x28] sm:$0xff]
        %v553 = vld [vmem:[%s2 + $0x30] sm:$0xff]
        %v554 = vld [vmem:[%s2 + $0x38] sm:$0xff]
        %v563 = vperm.slane %v547, 0
        %v564 = vperm.slane %v547, 1
        %v565 = vperm.slane %v547, 2
        %v566 = vperm.slane %v547, 3
        %v567 = vperm.slane %v547, 4
        %v568 = vperm.slane %v547, 5
        %v569 = vperm.slane %v547, 6
        %v570 = vperm.slane %v547, 7
        %v571 = vperm.slane %v548, 0
        %v572 = vperm.slane %v548, 1
        %v573 = vperm.slane %v548, 2
        %v574 = vperm.slane %v548, 3
        %v575 = vperm.slane %v548, 4
        %v576 = vperm.slane %v548, 5
        %v577 = vperm.slane %v548, 6
        %v578 = vperm.slane %v548, 7
        %v579 = vperm.slane %v549, 0
        %v580 = vperm.slane %v549, 1
        %v581 = vperm.slane %v549, 2
        %v582 = vperm.slane %v549, 3
        %v583 = vperm.slane %v549, 4
        %v584 = vperm.slane %v549, 5
        %v585 = vperm.slane %v549, 6
        %v586 = vperm.slane %v549, 7
        %v587 = vperm.slane %v550, 0
        %v588 = vperm.slane %v550, 1
        %v589 = vperm.slane %v550, 2
        %v590 = vperm.slane %v550, 3
        %v591 = vperm.slane %v550, 4
        %v592 = vperm.slane %v550, 5
        %v593 = vperm.slane %v550, 6
        %v594 = vperm.slane %v550, 7
        %v595 = vperm.slane %v551, 0
        %v596 = vperm.slane %v551, 1
        %v597 = vperm.slane %v551, 2
        %v598 = vperm.slane %v551, 3
        %v599 = vperm.slane %v551, 4
        %v600 = vperm.slane %v551, 5
        %v601 = vperm.slane %v551, 6
        %v602 = vperm.slane %v551, 7
        %v603 = vperm.slane %v552, 0
        %v604 = vperm.slane %v552, 1
        %v605 = vperm.slane %v552, 2
        %v606 = vperm.slane %v552, 3
        %v607 = vperm.slane %v552, 4
        %v608 = vperm.slane %v552, 5
        %v609 = vperm.slane %v552, 6
        %v610 = vperm.slane %v552, 7
        %v611 = vperm.slane %v553, 0
        %v612 = vperm.slane %v553, 1
        %v613 = vperm.slane %v553, 2
        %v614 = vperm.slane %v553, 3
        %v615 = vperm.slane %v553, 4
        %v616 = vperm.slane %v553, 5
        %v617 = vperm.slane %v553, 6
        %v618 = vperm.slane %v553, 7
        %v619 = vperm.slane %v554, 0
        %v620 = vperm.slane %v554, 1
        %v621 = vperm.slane %v554, 2
        %v622 = vperm.slane %v554, 3
        %v623 = vperm.slane %v554, 4
        %v624 = vperm.slane %v554, 5
        %v625 = vperm.slane %v554, 6
        %v626 = vperm.slane %v554, 7
        %vm691 = vcmask 261120
        %v693 = vsel %vm691, %v290, 0
        %695 = vmatpush.msra.mxu0 0.0
        %696 = vmatpush.msra.mxu0 0.0
        %697 = vmatpush.msra.mxu0 0.0
        %698 = vmatpush.msra.mxu0 0.0
        %699 = vmatpush.msra.mxu0 0.0
        %700 = vmatpush.msra.mxu0 0.0
        %701 = vmatpush.msra.mxu0 0.0
        %702 = vmatpush.msra.mxu0 0.0
        %703 = vmatpush.msra.mxu0 0.0
        %704 = vmatpush.msra.mxu0 0.0
        %705 = vmatpush.msra.mxu0 0.0
        %706 = vmatpush.msra.mxu0 0.0
        %707 = vmatpush.msra.mxu0 %v483
        %708 = vmatpush.msra.mxu0 %v419
        %709 = vmatpush.msra.mxu0 %v355
        %710 = vmatpush.msra.mxu0 %v291
        %711 = vmatmul.f32.gmra.mxu0 %v693
        %v712 = vpop.f32.mrf.mxu0
        %v713 = vadd.f32 %v563, %v712
        %714 = vdwg.mxu0
        %715 = vmatpush.msra.mxu0 0.0
        %716 = vmatpush.msra.mxu0 0.0
        %717 = vmatpush.msra.mxu0 0.0
        %718 = vmatpush.msra.mxu0 0.0
        %719 = vmatpush.msra.mxu0 0.0
        %720 = vmatpush.msra.mxu0 0.0
        %721 = vmatpush.msra.mxu0 0.0
        %722 = vmatpush.msra.mxu0 0.0
        %723 = vmatpush.msra.mxu0 0.0
        %724 = vmatpush.msra.mxu0 0.0
        %725 = vmatpush.msra.mxu0 0.0
        %726 = vmatpush.msra.mxu0 0.0
        %727 = vmatpush.msra.mxu0 %v484
        %728 = vmatpush.msra.mxu0 %v420
        %729 = vmatpush.msra.mxu0 %v356
        %730 = vmatpush.msra.mxu0 %v292
        %731 = vmatmul.f32.gmra.mxu0 %v693
        %v732 = vpop.f32.mrf.mxu0
        %v733 = vadd.f32 %v564, %v732
        %734 = vdwg.mxu0
        %735 = vmatpush.msra.mxu0 0.0
        %736 = vmatpush.msra.mxu0 0.0
        %737 = vmatpush.msra.mxu0 0.0
        %738 = vmatpush.msra.mxu0 0.0
        %739 = vmatpush.msra.mxu0 0.0
        %740 = vmatpush.msra.mxu0 0.0
        %741 = vmatpush.msra.mxu0 0.0
        %742 = vmatpush.msra.mxu0 0.0
        %743 = vmatpush.msra.mxu0 0.0
        %744 = vmatpush.msra.mxu0 0.0
        %745 = vmatpush.msra.mxu0 0.0
        %746 = vmatpush.msra.mxu0 0.0
        %747 = vmatpush.msra.mxu0 %v485
        %748 = vmatpush.msra.mxu0 %v421
        %749 = vmatpush.msra.mxu0 %v357
        %750 = vmatpush.msra.mxu0 %v293
        %751 = vmatmul.f32.gmra.mxu0 %v693
        %v752 = vpop.f32.mrf.mxu0
        %v753 = vadd.f32 %v565, %v752
        %754 = vdwg.mxu0
        %755 = vmatpush.msra.mxu0 0.0
        %756 = vmatpush.msra.mxu0 0.0
        %757 = vmatpush.msra.mxu0 0.0
        %758 = vmatpush.msra.mxu0 0.0
        %759 = vmatpush.msra.mxu0 0.0
        %760 = vmatpush.msra.mxu0 0.0
        %761 = vmatpush.msra.mxu0 0.0
        %762 = vmatpush.msra.mxu0 0.0
        %763 = vmatpush.msra.mxu0 0.0
        %764 = vmatpush.msra.mxu0 0.0
        %765 = vmatpush.msra.mxu0 0.0
        %766 = vmatpush.msra.mxu0 0.0
        %767 = vmatpush.msra.mxu0 %v486
        %768 = vmatpush.msra.mxu0 %v422
        %769 = vmatpush.msra.mxu0 %v358
        %770 = vmatpush.msra.mxu0 %v294
        %771 = vmatmul.f32.gmra.mxu0 %v693
        %v772 = vpop.f32.mrf.mxu0
        %v773 = vadd.f32 %v566, %v772
        %774 = vdwg.mxu0
        %775 = vmatpush.msra.mxu0 0.0
        %776 = vmatpush.msra.mxu0 0.0
        %777 = vmatpush.msra.mxu0 0.0
        %778 = vmatpush.msra.mxu0 0.0
        %779 = vmatpush.msra.mxu0 0.0
        %780 = vmatpush.msra.mxu0 0.0
        %781 = vmatpush.msra.mxu0 0.0
        %782 = vmatpush.msra.mxu0 0.0
        %783 = vmatpush.msra.mxu0 0.0
        %784 = vmatpush.msra.mxu0 0.0
        %785 = vmatpush.msra.mxu0 0.0
        %786 = vmatpush.msra.mxu0 0.0
        %787 = vmatpush.msra.mxu0 %v487
        %788 = vmatpush.msra.mxu0 %v423
        %789 = vmatpush.msra.mxu0 %v359
        %790 = vmatpush.msra.mxu0 %v295
        %791 = vmatmul.f32.gmra.mxu0 %v693
        %v792 = vpop.f32.mrf.mxu0
        %v793 = vadd.f32 %v567, %v792
        %794 = vdwg.mxu0
        %795 = vmatpush.msra.mxu0 0.0
        %796 = vmatpush.msra.mxu0 0.0
        %797 = vmatpush.msra.mxu0 0.0
        %798 = vmatpush.msra.mxu0 0.0
        %799 = vmatpush.msra.mxu0 0.0
        %800 = vmatpush.msra.mxu0 0.0
        %801 = vmatpush.msra.mxu0 0.0
        %802 = vmatpush.msra.mxu0 0.0
        %803 = vmatpush.msra.mxu0 0.0
        %804 = vmatpush.msra.mxu0 0.0
        %805 = vmatpush.msra.mxu0 0.0
        %806 = vmatpush.msra.mxu0 0.0
        %807 = vmatpush.msra.mxu0 %v488
        %808 = vmatpush.msra.mxu0 %v424
        %809 = vmatpush.msra.mxu0 %v360
        %810 = vmatpush.msra.mxu0 %v296
        %811 = vmatmul.f32.gmra.mxu0 %v693
        %v812 = vpop.f32.mrf.mxu0
        %v813 = vadd.f32 %v568, %v812
        %814 = vdwg.mxu0
        %815 = vmatpush.msra.mxu0 0.0
        %816 = vmatpush.msra.mxu0 0.0
        %817 = vmatpush.msra.mxu0 0.0
        %818 = vmatpush.msra.mxu0 0.0
        %819 = vmatpush.msra.mxu0 0.0
        %820 = vmatpush.msra.mxu0 0.0
        %821 = vmatpush.msra.mxu0 0.0
        %822 = vmatpush.msra.mxu0 0.0
        %823 = vmatpush.msra.mxu0 0.0
        %824 = vmatpush.msra.mxu0 0.0
        %825 = vmatpush.msra.mxu0 0.0
        %826 = vmatpush.msra.mxu0 0.0
        %827 = vmatpush.msra.mxu0 %v489
        %828 = vmatpush.msra.mxu0 %v425
        %829 = vmatpush.msra.mxu0 %v361
        %830 = vmatpush.msra.mxu0 %v297
        %831 = vmatmul.f32.gmra.mxu0 %v693
        %v832 = vpop.f32.mrf.mxu0
        %v833 = vadd.f32 %v569, %v832
        %834 = vdwg.mxu0
        %835 = vmatpush.msra.mxu0 0.0
        %836 = vmatpush.msra.mxu0 0.0
        %837 = vmatpush.msra.mxu0 0.0
        %838 = vmatpush.msra.mxu0 0.0
        %839 = vmatpush.msra.mxu0 0.0
        %840 = vmatpush.msra.mxu0 0.0
        %841 = vmatpush.msra.mxu0 0.0
        %842 = vmatpush.msra.mxu0 0.0
        %843 = vmatpush.msra.mxu0 0.0
        %844 = vmatpush.msra.mxu0 0.0
        %845 = vmatpush.msra.mxu0 0.0
        %846 = vmatpush.msra.mxu0 0.0
        %847 = vmatpush.msra.mxu0 %v490
        %848 = vmatpush.msra.mxu0 %v426
        %849 = vmatpush.msra.mxu0 %v362
        %850 = vmatpush.msra.mxu0 %v298
        %851 = vmatmul.f32.gmra.mxu0 %v693
        %v852 = vpop.f32.mrf.mxu0
        %v853 = vadd.f32 %v570, %v852
        %854 = vdwg.mxu0
        %855 = vmatpush.msra.mxu0 0.0
        %856 = vmatpush.msra.mxu0 0.0
        %857 = vmatpush.msra.mxu0 0.0
        %858 = vmatpush.msra.mxu0 0.0
        %859 = vmatpush.msra.mxu0 0.0
        %860 = vmatpush.msra.mxu0 0.0
        %861 = vmatpush.msra.mxu0 0.0
        %862 = vmatpush.msra.mxu0 0.0
        %863 = vmatpush.msra.mxu0 0.0
        %864 = vmatpush.msra.mxu0 0.0
        %865 = vmatpush.msra.mxu0 0.0
        %866 = vmatpush.msra.mxu0 0.0
        %867 = vmatpush.msra.mxu0 %v491
        %868 = vmatpush.msra.mxu0 %v427
        %869 = vmatpush.msra.mxu0 %v363
        %870 = vmatpush.msra.mxu0 %v299
        %871 = vmatmul.f32.gmra.mxu0 %v693
        %v872 = vpop.f32.mrf.mxu0
        %v873 = vadd.f32 %v571, %v872
        %874 = vdwg.mxu0
        %875 = vmatpush.msra.mxu0 0.0
        %876 = vmatpush.msra.mxu0 0.0
        %877 = vmatpush.msra.mxu0 0.0
        %878 = vmatpush.msra.mxu0 0.0
        %879 = vmatpush.msra.mxu0 0.0
        %880 = vmatpush.msra.mxu0 0.0
        %881 = vmatpush.msra.mxu0 0.0
        %882 = vmatpush.msra.mxu0 0.0
        %883 = vmatpush.msra.mxu0 0.0
        %884 = vmatpush.msra.mxu0 0.0
        %885 = vmatpush.msra.mxu0 0.0
        %886 = vmatpush.msra.mxu0 0.0
        %887 = vmatpush.msra.mxu0 %v492
        %888 = vmatpush.msra.mxu0 %v428
        %889 = vmatpush.msra.mxu0 %v364
        %890 = vmatpush.msra.mxu0 %v300
        %891 = vmatmul.f32.gmra.mxu0 %v693
        %v892 = vpop.f32.mrf.mxu0
        %v893 = vadd.f32 %v572, %v892
        %894 = vdwg.mxu0
        %895 = vmatpush.msra.mxu0 0.0
        %896 = vmatpush.msra.mxu0 0.0
        %897 = vmatpush.msra.mxu0 0.0
        %898 = vmatpush.msra.mxu0 0.0
        %899 = vmatpush.msra.mxu0 0.0
        %900 = vmatpush.msra.mxu0 0.0
        %901 = vmatpush.msra.mxu0 0.0
        %902 = vmatpush.msra.mxu0 0.0
        %903 = vmatpush.msra.mxu0 0.0
        %904 = vmatpush.msra.mxu0 0.0
        %905 = vmatpush.msra.mxu0 0.0
        %906 = vmatpush.msra.mxu0 0.0
        %907 = vmatpush.msra.mxu0 %v493
        %908 = vmatpush.msra.mxu0 %v429
        %909 = vmatpush.msra.mxu0 %v365
        %910 = vmatpush.msra.mxu0 %v301
        %911 = vmatmul.f32.gmra.mxu0 %v693
        %v912 = vpop.f32.mrf.mxu0
        %v913 = vadd.f32 %v573, %v912
        %914 = vdwg.mxu0
        %915 = vmatpush.msra.mxu0 0.0
        %916 = vmatpush.msra.mxu0 0.0
        %917 = vmatpush.msra.mxu0 0.0
        %918 = vmatpush.msra.mxu0 0.0
        %919 = vmatpush.msra.mxu0 0.0
        %920 = vmatpush.msra.mxu0 0.0
        %921 = vmatpush.msra.mxu0 0.0
        %922 = vmatpush.msra.mxu0 0.0
        %923 = vmatpush.msra.mxu0 0.0
        %924 = vmatpush.msra.mxu0 0.0
        %925 = vmatpush.msra.mxu0 0.0
        %926 = vmatpush.msra.mxu0 0.0
        %927 = vmatpush.msra.mxu0 %v494
        %928 = vmatpush.msra.mxu0 %v430
        %929 = vmatpush.msra.mxu0 %v366
        %930 = vmatpush.msra.mxu0 %v302
        %931 = vmatmul.f32.gmra.mxu0 %v693
        %v932 = vpop.f32.mrf.mxu0
        %v933 = vadd.f32 %v574, %v932
        %934 = vdwg.mxu0
        %935 = vmatpush.msra.mxu0 0.0
        %936 = vmatpush.msra.mxu0 0.0
        %937 = vmatpush.msra.mxu0 0.0
        %938 = vmatpush.msra.mxu0 0.0
        %939 = vmatpush.msra.mxu0 0.0
        %940 = vmatpush.msra.mxu0 0.0
        %941 = vmatpush.msra.mxu0 0.0
        %942 = vmatpush.msra.mxu0 0.0
        %943 = vmatpush.msra.mxu0 0.0
        %944 = vmatpush.msra.mxu0 0.0
        %945 = vmatpush.msra.mxu0 0.0
        %946 = vmatpush.msra.mxu0 0.0
        %947 = vmatpush.msra.mxu0 %v495
        %948 = vmatpush.msra.mxu0 %v431
        %949 = vmatpush.msra.mxu0 %v367
        %950 = vmatpush.msra.mxu0 %v303
        %951 = vmatmul.f32.gmra.mxu0 %v693
        %v952 = vpop.f32.mrf.mxu0
        %v953 = vadd.f32 %v575, %v952
        %954 = vdwg.mxu0
        %955 = vmatpush.msra.mxu0 0.0
        %956 = vmatpush.msra.mxu0 0.0
        %957 = vmatpush.msra.mxu0 0.0
        %958 = vmatpush.msra.mxu0 0.0
        %959 = vmatpush.msra.mxu0 0.0
        %960 = vmatpush.msra.mxu0 0.0
        %961 = vmatpush.msra.mxu0 0.0
        %962 = vmatpush.msra.mxu0 0.0
        %963 = vmatpush.msra.mxu0 0.0
        %964 = vmatpush.msra.mxu0 0.0
        %965 = vmatpush.msra.mxu0 0.0
        %966 = vmatpush.msra.mxu0 0.0
        %967 = vmatpush.msra.mxu0 %v496
        %968 = vmatpush.msra.mxu0 %v432
        %969 = vmatpush.msra.mxu0 %v368
        %970 = vmatpush.msra.mxu0 %v304
        %971 = vmatmul.f32.gmra.mxu0 %v693
        %v972 = vpop.f32.mrf.mxu0
        %v973 = vadd.f32 %v576, %v972
        %974 = vdwg.mxu0
        %975 = vmatpush.msra.mxu0 0.0
        %976 = vmatpush.msra.mxu0 0.0
        %977 = vmatpush.msra.mxu0 0.0
        %978 = vmatpush.msra.mxu0 0.0
        %979 = vmatpush.msra.mxu0 0.0
        %980 = vmatpush.msra.mxu0 0.0
        %981 = vmatpush.msra.mxu0 0.0
        %982 = vmatpush.msra.mxu0 0.0
        %983 = vmatpush.msra.mxu0 0.0
        %984 = vmatpush.msra.mxu0 0.0
        %985 = vmatpush.msra.mxu0 0.0
        %986 = vmatpush.msra.mxu0 0.0
        %987 = vmatpush.msra.mxu0 %v497
        %988 = vmatpush.msra.mxu0 %v433
        %989 = vmatpush.msra.mxu0 %v369
        %990 = vmatpush.msra.mxu0 %v305
        %991 = vmatmul.f32.gmra.mxu0 %v693
        %v992 = vpop.f32.mrf.mxu0
        %v993 = vadd.f32 %v577, %v992
        %994 = vdwg.mxu0
        %995 = vmatpush.msra.mxu0 0.0
        %996 = vmatpush.msra.mxu0 0.0
        %997 = vmatpush.msra.mxu0 0.0
        %998 = vmatpush.msra.mxu0 0.0
        %999 = vmatpush.msra.mxu0 0.0
        %1000 = vmatpush.msra.mxu0 0.0
        %1001 = vmatpush.msra.mxu0 0.0
        %1002 = vmatpush.msra.mxu0 0.0
        %1003 = vmatpush.msra.mxu0 0.0
        %1004 = vmatpush.msra.mxu0 0.0
        %1005 = vmatpush.msra.mxu0 0.0
        %1006 = vmatpush.msra.mxu0 0.0
        %1007 = vmatpush.msra.mxu0 %v498
        %1008 = vmatpush.msra.mxu0 %v434
        %1009 = vmatpush.msra.mxu0 %v370
        %1010 = vmatpush.msra.mxu0 %v306
        %1011 = vmatmul.f32.gmra.mxu0 %v693
        %v1012 = vpop.f32.mrf.mxu0
        %v1013 = vadd.f32 %v578, %v1012
        %1014 = vdwg.mxu0
        %1015 = vmatpush.msra.mxu0 0.0
        %1016 = vmatpush.msra.mxu0 0.0
        %1017 = vmatpush.msra.mxu0 0.0
        %1018 = vmatpush.msra.mxu0 0.0
        %1019 = vmatpush.msra.mxu0 0.0
        %1020 = vmatpush.msra.mxu0 0.0
        %1021 = vmatpush.msra.mxu0 0.0
        %1022 = vmatpush.msra.mxu0 0.0
        %1023 = vmatpush.msra.mxu0 0.0
        %1024 = vmatpush.msra.mxu0 0.0
        %1025 = vmatpush.msra.mxu0 0.0
        %1026 = vmatpush.msra.mxu0 0.0
        %1027 = vmatpush.msra.mxu0 %v499
        %1028 = vmatpush.msra.mxu0 %v435
        %1029 = vmatpush.msra.mxu0 %v371
        %1030 = vmatpush.msra.mxu0 %v307
        %1031 = vmatmul.f32.gmra.mxu0 %v693
        %v1032 = vpop.f32.mrf.mxu0
        %v1033 = vadd.f32 %v579, %v1032
        %1034 = vdwg.mxu0
        %1035 = vmatpush.msra.mxu0 0.0
        %1036 = vmatpush.msra.mxu0 0.0
        %1037 = vmatpush.msra.mxu0 0.0
        %1038 = vmatpush.msra.mxu0 0.0
        %1039 = vmatpush.msra.mxu0 0.0
        %1040 = vmatpush.msra.mxu0 0.0
        %1041 = vmatpush.msra.mxu0 0.0
        %1042 = vmatpush.msra.mxu0 0.0
        %1043 = vmatpush.msra.mxu0 0.0
        %1044 = vmatpush.msra.mxu0 0.0
        %1045 = vmatpush.msra.mxu0 0.0
        %1046 = vmatpush.msra.mxu0 0.0
        %1047 = vmatpush.msra.mxu0 %v500
        %1048 = vmatpush.msra.mxu0 %v436
        %1049 = vmatpush.msra.mxu0 %v372
        %1050 = vmatpush.msra.mxu0 %v308
        %1051 = vmatmul.f32.gmra.mxu0 %v693
        %v1052 = vpop.f32.mrf.mxu0
        %v1053 = vadd.f32 %v580, %v1052
        %1054 = vdwg.mxu0
        %1055 = vmatpush.msra.mxu0 0.0
        %1056 = vmatpush.msra.mxu0 0.0
        %1057 = vmatpush.msra.mxu0 0.0
        %1058 = vmatpush.msra.mxu0 0.0
        %1059 = vmatpush.msra.mxu0 0.0
        %1060 = vmatpush.msra.mxu0 0.0
        %1061 = vmatpush.msra.mxu0 0.0
        %1062 = vmatpush.msra.mxu0 0.0
        %1063 = vmatpush.msra.mxu0 0.0
        %1064 = vmatpush.msra.mxu0 0.0
        %1065 = vmatpush.msra.mxu0 0.0
        %1066 = vmatpush.msra.mxu0 0.0
        %1067 = vmatpush.msra.mxu0 %v501
        %1068 = vmatpush.msra.mxu0 %v437
        %1069 = vmatpush.msra.mxu0 %v373
        %1070 = vmatpush.msra.mxu0 %v309
        %1071 = vmatmul.f32.gmra.mxu0 %v693
        %v1072 = vpop.f32.mrf.mxu0
        %v1073 = vadd.f32 %v581, %v1072
        %1074 = vdwg.mxu0
        %1075 = vmatpush.msra.mxu0 0.0
        %1076 = vmatpush.msra.mxu0 0.0
        %1077 = vmatpush.msra.mxu0 0.0
        %1078 = vmatpush.msra.mxu0 0.0
        %1079 = vmatpush.msra.mxu0 0.0
        %1080 = vmatpush.msra.mxu0 0.0
        %1081 = vmatpush.msra.mxu0 0.0
        %1082 = vmatpush.msra.mxu0 0.0
        %1083 = vmatpush.msra.mxu0 0.0
        %1084 = vmatpush.msra.mxu0 0.0
        %1085 = vmatpush.msra.mxu0 0.0
        %1086 = vmatpush.msra.mxu0 0.0
        %1087 = vmatpush.msra.mxu0 %v502
        %1088 = vmatpush.msra.mxu0 %v438
        %1089 = vmatpush.msra.mxu0 %v374
        %1090 = vmatpush.msra.mxu0 %v310
        %1091 = vmatmul.f32.gmra.mxu0 %v693
        %v1092 = vpop.f32.mrf.mxu0
        %v1093 = vadd.f32 %v582, %v1092
        %1094 = vdwg.mxu0
        %1095 = vmatpush.msra.mxu0 0.0
        %1096 = vmatpush.msra.mxu0 0.0
        %1097 = vmatpush.msra.mxu0 0.0
        %1098 = vmatpush.msra.mxu0 0.0
        %1099 = vmatpush.msra.mxu0 0.0
        %1100 = vmatpush.msra.mxu0 0.0
        %1101 = vmatpush.msra.mxu0 0.0
        %1102 = vmatpush.msra.mxu0 0.0
        %1103 = vmatpush.msra.mxu0 0.0
        %1104 = vmatpush.msra.mxu0 0.0
        %1105 = vmatpush.msra.mxu0 0.0
        %1106 = vmatpush.msra.mxu0 0.0
        %1107 = vmatpush.msra.mxu0 %v503
        %1108 = vmatpush.msra.mxu0 %v439
        %1109 = vmatpush.msra.mxu0 %v375
        %1110 = vmatpush.msra.mxu0 %v311
        %1111 = vmatmul.f32.gmra.mxu0 %v693
        %v1112 = vpop.f32.mrf.mxu0
        %v1113 = vadd.f32 %v583, %v1112
        %1114 = vdwg.mxu0
        %1115 = vmatpush.msra.mxu0 0.0
        %1116 = vmatpush.msra.mxu0 0.0
        %1117 = vmatpush.msra.mxu0 0.0
        %1118 = vmatpush.msra.mxu0 0.0
        %1119 = vmatpush.msra.mxu0 0.0
        %1120 = vmatpush.msra.mxu0 0.0
        %1121 = vmatpush.msra.mxu0 0.0
        %1122 = vmatpush.msra.mxu0 0.0
        %1123 = vmatpush.msra.mxu0 0.0
        %1124 = vmatpush.msra.mxu0 0.0
        %1125 = vmatpush.msra.mxu0 0.0
        %1126 = vmatpush.msra.mxu0 0.0
        %1127 = vmatpush.msra.mxu0 %v504
        %1128 = vmatpush.msra.mxu0 %v440
        %1129 = vmatpush.msra.mxu0 %v376
        %1130 = vmatpush.msra.mxu0 %v312
        %1131 = vmatmul.f32.gmra.mxu0 %v693
        %v1132 = vpop.f32.mrf.mxu0
        %v1133 = vadd.f32 %v584, %v1132
        %1134 = vdwg.mxu0
        %1135 = vmatpush.msra.mxu0 0.0
        %1136 = vmatpush.msra.mxu0 0.0
        %1137 = vmatpush.msra.mxu0 0.0
        %1138 = vmatpush.msra.mxu0 0.0
        %1139 = vmatpush.msra.mxu0 0.0
        %1140 = vmatpush.msra.mxu0 0.0
        %1141 = vmatpush.msra.mxu0 0.0
        %1142 = vmatpush.msra.mxu0 0.0
        %1143 = vmatpush.msra.mxu0 0.0
        %1144 = vmatpush.msra.mxu0 0.0
        %1145 = vmatpush.msra.mxu0 0.0
        %1146 = vmatpush.msra.mxu0 0.0
        %1147 = vmatpush.msra.mxu0 %v505
        %1148 = vmatpush.msra.mxu0 %v441
        %1149 = vmatpush.msra.mxu0 %v377
        %1150 = vmatpush.msra.mxu0 %v313
        %1151 = vmatmul.f32.gmra.mxu0 %v693
        %v1152 = vpop.f32.mrf.mxu0
        %v1153 = vadd.f32 %v585, %v1152
        %1154 = vdwg.mxu0
        %1155 = vmatpush.msra.mxu0 0.0
        %1156 = vmatpush.msra.mxu0 0.0
        %1157 = vmatpush.msra.mxu0 0.0
        %1158 = vmatpush.msra.mxu0 0.0
        %1159 = vmatpush.msra.mxu0 0.0
        %1160 = vmatpush.msra.mxu0 0.0
        %1161 = vmatpush.msra.mxu0 0.0
        %1162 = vmatpush.msra.mxu0 0.0
        %1163 = vmatpush.msra.mxu0 0.0
        %1164 = vmatpush.msra.mxu0 0.0
        %1165 = vmatpush.msra.mxu0 0.0
        %1166 = vmatpush.msra.mxu0 0.0
        %1167 = vmatpush.msra.mxu0 %v506
        %1168 = vmatpush.msra.mxu0 %v442
        %1169 = vmatpush.msra.mxu0 %v378
        %1170 = vmatpush.msra.mxu0 %v314
        %1171 = vmatmul.f32.gmra.mxu0 %v693
        %v1172 = vpop.f32.mrf.mxu0
        %v1173 = vadd.f32 %v586, %v1172
        %1174 = vdwg.mxu0
        %1175 = vmatpush.msra.mxu0 0.0
        %1176 = vmatpush.msra.mxu0 0.0
        %1177 = vmatpush.msra.mxu0 0.0
        %1178 = vmatpush.msra.mxu0 0.0
        %1179 = vmatpush.msra.mxu0 0.0
        %1180 = vmatpush.msra.mxu0 0.0
        %1181 = vmatpush.msra.mxu0 0.0
        %1182 = vmatpush.msra.mxu0 0.0
        %1183 = vmatpush.msra.mxu0 0.0
        %1184 = vmatpush.msra.mxu0 0.0
        %1185 = vmatpush.msra.mxu0 0.0
        %1186 = vmatpush.msra.mxu0 0.0
        %1187 = vmatpush.msra.mxu0 %v507
        %1188 = vmatpush.msra.mxu0 %v443
        %1189 = vmatpush.msra.mxu0 %v379
        %1190 = vmatpush.msra.mxu0 %v315
        %1191 = vmatmul.f32.gmra.mxu0 %v693
        %v1192 = vpop.f32.mrf.mxu0
        %v1193 = vadd.f32 %v587, %v1192
        %1194 = vdwg.mxu0
        %1195 = vmatpush.msra.mxu0 0.0
        %1196 = vmatpush.msra.mxu0 0.0
        %1197 = vmatpush.msra.mxu0 0.0
        %1198 = vmatpush.msra.mxu0 0.0
        %1199 = vmatpush.msra.mxu0 0.0
        %1200 = vmatpush.msra.mxu0 0.0
        %1201 = vmatpush.msra.mxu0 0.0
        %1202 = vmatpush.msra.mxu0 0.0
        %1203 = vmatpush.msra.mxu0 0.0
        %1204 = vmatpush.msra.mxu0 0.0
        %1205 = vmatpush.msra.mxu0 0.0
        %1206 = vmatpush.msra.mxu0 0.0
        %1207 = vmatpush.msra.mxu0 %v508
        %1208 = vmatpush.msra.mxu0 %v444
        %1209 = vmatpush.msra.mxu0 %v380
        %1210 = vmatpush.msra.mxu0 %v316
        %1211 = vmatmul.f32.gmra.mxu0 %v693
        %v1212 = vpop.f32.mrf.mxu0
        %v1213 = vadd.f32 %v588, %v1212
        %1214 = vdwg.mxu0
        %1215 = vmatpush.msra.mxu0 0.0
        %1216 = vmatpush.msra.mxu0 0.0
        %1217 = vmatpush.msra.mxu0 0.0
        %1218 = vmatpush.msra.mxu0 0.0
        %1219 = vmatpush.msra.mxu0 0.0
        %1220 = vmatpush.msra.mxu0 0.0
        %1221 = vmatpush.msra.mxu0 0.0
        %1222 = vmatpush.msra.mxu0 0.0
        %1223 = vmatpush.msra.mxu0 0.0
        %1224 = vmatpush.msra.mxu0 0.0
        %1225 = vmatpush.msra.mxu0 0.0
        %1226 = vmatpush.msra.mxu0 0.0
        %1227 = vmatpush.msra.mxu0 %v509
        %1228 = vmatpush.msra.mxu0 %v445
        %1229 = vmatpush.msra.mxu0 %v381
        %1230 = vmatpush.msra.mxu0 %v317
        %1231 = vmatmul.f32.gmra.mxu0 %v693
        %v1232 = vpop.f32.mrf.mxu0
        %v1233 = vadd.f32 %v589, %v1232
        %1234 = vdwg.mxu0
        %1235 = vmatpush.msra.mxu0 0.0
        %1236 = vmatpush.msra.mxu0 0.0
        %1237 = vmatpush.msra.mxu0 0.0
        %1238 = vmatpush.msra.mxu0 0.0
        %1239 = vmatpush.msra.mxu0 0.0
        %1240 = vmatpush.msra.mxu0 0.0
        %1241 = vmatpush.msra.mxu0 0.0
        %1242 = vmatpush.msra.mxu0 0.0
        %1243 = vmatpush.msra.mxu0 0.0
        %1244 = vmatpush.msra.mxu0 0.0
        %1245 = vmatpush.msra.mxu0 0.0
        %1246 = vmatpush.msra.mxu0 0.0
        %1247 = vmatpush.msra.mxu0 %v510
        %1248 = vmatpush.msra.mxu0 %v446
        %1249 = vmatpush.msra.mxu0 %v382
        %1250 = vmatpush.msra.mxu0 %v318
        %1251 = vmatmul.f32.gmra.mxu0 %v693
        %v1252 = vpop.f32.mrf.mxu0
        %v1253 = vadd.f32 %v590, %v1252
        %1254 = vdwg.mxu0
        %1255 = vmatpush.msra.mxu0 0.0
        %1256 = vmatpush.msra.mxu0 0.0
        %1257 = vmatpush.msra.mxu0 0.0
        %1258 = vmatpush.msra.mxu0 0.0
        %1259 = vmatpush.msra.mxu0 0.0
        %1260 = vmatpush.msra.mxu0 0.0
        %1261 = vmatpush.msra.mxu0 0.0
        %1262 = vmatpush.msra.mxu0 0.0
        %1263 = vmatpush.msra.mxu0 0.0
        %1264 = vmatpush.msra.mxu0 0.0
        %1265 = vmatpush.msra.mxu0 0.0
        %1266 = vmatpush.msra.mxu0 0.0
        %1267 = vmatpush.msra.mxu0 %v511
        %1268 = vmatpush.msra.mxu0 %v447
        %1269 = vmatpush.msra.mxu0 %v383
        %1270 = vmatpush.msra.mxu0 %v319
        %1271 = vmatmul.f32.gmra.mxu0 %v693
        %v1272 = vpop.f32.mrf.mxu0
        %v1273 = vadd.f32 %v591, %v1272
        %1274 = vdwg.mxu0
        %1275 = vmatpush.msra.mxu0 0.0
        %1276 = vmatpush.msra.mxu0 0.0
        %1277 = vmatpush.msra.mxu0 0.0
        %1278 = vmatpush.msra.mxu0 0.0
        %1279 = vmatpush.msra.mxu0 0.0
        %1280 = vmatpush.msra.mxu0 0.0
        %1281 = vmatpush.msra.mxu0 0.0
        %1282 = vmatpush.msra.mxu0 0.0
        %1283 = vmatpush.msra.mxu0 0.0
        %1284 = vmatpush.msra.mxu0 0.0
        %1285 = vmatpush.msra.mxu0 0.0
        %1286 = vmatpush.msra.mxu0 0.0
        %1287 = vmatpush.msra.mxu0 %v512
        %1288 = vmatpush.msra.mxu0 %v448
        %1289 = vmatpush.msra.mxu0 %v384
        %1290 = vmatpush.msra.mxu0 %v320
        %1291 = vmatmul.f32.gmra.mxu0 %v693
        %v1292 = vpop.f32.mrf.mxu0
        %v1293 = vadd.f32 %v592, %v1292
        %1294 = vdwg.mxu0
        %1295 = vmatpush.msra.mxu0 0.0
        %1296 = vmatpush.msra.mxu0 0.0
        %1297 = vmatpush.msra.mxu0 0.0
        %1298 = vmatpush.msra.mxu0 0.0
        %1299 = vmatpush.msra.mxu0 0.0
        %1300 = vmatpush.msra.mxu0 0.0
        %1301 = vmatpush.msra.mxu0 0.0
        %1302 = vmatpush.msra.mxu0 0.0
        %1303 = vmatpush.msra.mxu0 0.0
        %1304 = vmatpush.msra.mxu0 0.0
        %1305 = vmatpush.msra.mxu0 0.0
        %1306 = vmatpush.msra.mxu0 0.0
        %1307 = vmatpush.msra.mxu0 %v513
        %1308 = vmatpush.msra.mxu0 %v449
        %1309 = vmatpush.msra.mxu0 %v385
        %1310 = vmatpush.msra.mxu0 %v321
        %1311 = vmatmul.f32.gmra.mxu0 %v693
        %v1312 = vpop.f32.mrf.mxu0
        %v1313 = vadd.f32 %v593, %v1312
        %1314 = vdwg.mxu0
        %1315 = vmatpush.msra.mxu0 0.0
        %1316 = vmatpush.msra.mxu0 0.0
        %1317 = vmatpush.msra.mxu0 0.0
        %1318 = vmatpush.msra.mxu0 0.0
        %1319 = vmatpush.msra.mxu0 0.0
        %1320 = vmatpush.msra.mxu0 0.0
        %1321 = vmatpush.msra.mxu0 0.0
        %1322 = vmatpush.msra.mxu0 0.0
        %1323 = vmatpush.msra.mxu0 0.0
        %1324 = vmatpush.msra.mxu0 0.0
        %1325 = vmatpush.msra.mxu0 0.0
        %1326 = vmatpush.msra.mxu0 0.0
        %1327 = vmatpush.msra.mxu0 %v514
        %1328 = vmatpush.msra.mxu0 %v450
        %1329 = vmatpush.msra.mxu0 %v386
        %1330 = vmatpush.msra.mxu0 %v322
        %1331 = vmatmul.f32.gmra.mxu0 %v693
        %v1332 = vpop.f32.mrf.mxu0
        %v1333 = vadd.f32 %v594, %v1332
        %1334 = vdwg.mxu0
        %1335 = vmatpush.msra.mxu0 0.0
        %1336 = vmatpush.msra.mxu0 0.0
        %1337 = vmatpush.msra.mxu0 0.0
        %1338 = vmatpush.msra.mxu0 0.0
        %1339 = vmatpush.msra.mxu0 0.0
        %1340 = vmatpush.msra.mxu0 0.0
        %1341 = vmatpush.msra.mxu0 0.0
        %1342 = vmatpush.msra.mxu0 0.0
        %1343 = vmatpush.msra.mxu0 0.0
        %1344 = vmatpush.msra.mxu0 0.0
        %1345 = vmatpush.msra.mxu0 0.0
        %1346 = vmatpush.msra.mxu0 0.0
        %1347 = vmatpush.msra.mxu0 %v515
        %1348 = vmatpush.msra.mxu0 %v451
        %1349 = vmatpush.msra.mxu0 %v387
        %1350 = vmatpush.msra.mxu0 %v323
        %1351 = vmatmul.f32.gmra.mxu0 %v693
        %v1352 = vpop.f32.mrf.mxu0
        %v1353 = vadd.f32 %v595, %v1352
        %1354 = vdwg.mxu0
        %1355 = vmatpush.msra.mxu0 0.0
        %1356 = vmatpush.msra.mxu0 0.0
        %1357 = vmatpush.msra.mxu0 0.0
        %1358 = vmatpush.msra.mxu0 0.0
        %1359 = vmatpush.msra.mxu0 0.0
        %1360 = vmatpush.msra.mxu0 0.0
        %1361 = vmatpush.msra.mxu0 0.0
        %1362 = vmatpush.msra.mxu0 0.0
        %1363 = vmatpush.msra.mxu0 0.0
        %1364 = vmatpush.msra.mxu0 0.0
        %1365 = vmatpush.msra.mxu0 0.0
        %1366 = vmatpush.msra.mxu0 0.0
        %1367 = vmatpush.msra.mxu0 %v516
        %1368 = vmatpush.msra.mxu0 %v452
        %1369 = vmatpush.msra.mxu0 %v388
        %1370 = vmatpush.msra.mxu0 %v324
        %1371 = vmatmul.f32.gmra.mxu0 %v693
        %v1372 = vpop.f32.mrf.mxu0
        %v1373 = vadd.f32 %v596, %v1372
        %1374 = vdwg.mxu0
        %1375 = vmatpush.msra.mxu0 0.0
        %1376 = vmatpush.msra.mxu0 0.0
        %1377 = vmatpush.msra.mxu0 0.0
        %1378 = vmatpush.msra.mxu0 0.0
        %1379 = vmatpush.msra.mxu0 0.0
        %1380 = vmatpush.msra.mxu0 0.0
        %1381 = vmatpush.msra.mxu0 0.0
        %1382 = vmatpush.msra.mxu0 0.0
        %1383 = vmatpush.msra.mxu0 0.0
        %1384 = vmatpush.msra.mxu0 0.0
        %1385 = vmatpush.msra.mxu0 0.0
        %1386 = vmatpush.msra.mxu0 0.0
        %1387 = vmatpush.msra.mxu0 %v517
        %1388 = vmatpush.msra.mxu0 %v453
        %1389 = vmatpush.msra.mxu0 %v389
        %1390 = vmatpush.msra.mxu0 %v325
        %1391 = vmatmul.f32.gmra.mxu0 %v693
        %v1392 = vpop.f32.mrf.mxu0
        %v1393 = vadd.f32 %v597, %v1392
        %1394 = vdwg.mxu0
        %1395 = vmatpush.msra.mxu0 0.0
        %1396 = vmatpush.msra.mxu0 0.0
        %1397 = vmatpush.msra.mxu0 0.0
        %1398 = vmatpush.msra.mxu0 0.0
        %1399 = vmatpush.msra.mxu0 0.0
        %1400 = vmatpush.msra.mxu0 0.0
        %1401 = vmatpush.msra.mxu0 0.0
        %1402 = vmatpush.msra.mxu0 0.0
        %1403 = vmatpush.msra.mxu0 0.0
        %1404 = vmatpush.msra.mxu0 0.0
        %1405 = vmatpush.msra.mxu0 0.0
        %1406 = vmatpush.msra.mxu0 0.0
        %1407 = vmatpush.msra.mxu0 %v518
        %1408 = vmatpush.msra.mxu0 %v454
        %1409 = vmatpush.msra.mxu0 %v390
        %1410 = vmatpush.msra.mxu0 %v326
        %1411 = vmatmul.f32.gmra.mxu0 %v693
        %v1412 = vpop.f32.mrf.mxu0
        %v1413 = vadd.f32 %v598, %v1412
        %1414 = vdwg.mxu0
        %1415 = vmatpush.msra.mxu0 0.0
        %1416 = vmatpush.msra.mxu0 0.0
        %1417 = vmatpush.msra.mxu0 0.0
        %1418 = vmatpush.msra.mxu0 0.0
        %1419 = vmatpush.msra.mxu0 0.0
        %1420 = vmatpush.msra.mxu0 0.0
        %1421 = vmatpush.msra.mxu0 0.0
        %1422 = vmatpush.msra.mxu0 0.0
        %1423 = vmatpush.msra.mxu0 0.0
        %1424 = vmatpush.msra.mxu0 0.0
        %1425 = vmatpush.msra.mxu0 0.0
        %1426 = vmatpush.msra.mxu0 0.0
        %1427 = vmatpush.msra.mxu0 %v519
        %1428 = vmatpush.msra.mxu0 %v455
        %1429 = vmatpush.msra.mxu0 %v391
        %1430 = vmatpush.msra.mxu0 %v327
        %1431 = vmatmul.f32.gmra.mxu0 %v693
        %v1432 = vpop.f32.mrf.mxu0
        %v1433 = vadd.f32 %v599, %v1432
        %1434 = vdwg.mxu0
        %1435 = vmatpush.msra.mxu0 0.0
        %1436 = vmatpush.msra.mxu0 0.0
        %1437 = vmatpush.msra.mxu0 0.0
        %1438 = vmatpush.msra.mxu0 0.0
        %1439 = vmatpush.msra.mxu0 0.0
        %1440 = vmatpush.msra.mxu0 0.0
        %1441 = vmatpush.msra.mxu0 0.0
        %1442 = vmatpush.msra.mxu0 0.0
        %1443 = vmatpush.msra.mxu0 0.0
        %1444 = vmatpush.msra.mxu0 0.0
        %1445 = vmatpush.msra.mxu0 0.0
        %1446 = vmatpush.msra.mxu0 0.0
        %1447 = vmatpush.msra.mxu0 %v520
        %1448 = vmatpush.msra.mxu0 %v456
        %1449 = vmatpush.msra.mxu0 %v392
        %1450 = vmatpush.msra.mxu0 %v328
        %1451 = vmatmul.f32.gmra.mxu0 %v693
        %v1452 = vpop.f32.mrf.mxu0
        %v1453 = vadd.f32 %v600, %v1452
        %1454 = vdwg.mxu0
        %1455 = vmatpush.msra.mxu0 0.0
        %1456 = vmatpush.msra.mxu0 0.0
        %1457 = vmatpush.msra.mxu0 0.0
        %1458 = vmatpush.msra.mxu0 0.0
        %1459 = vmatpush.msra.mxu0 0.0
        %1460 = vmatpush.msra.mxu0 0.0
        %1461 = vmatpush.msra.mxu0 0.0
        %1462 = vmatpush.msra.mxu0 0.0
        %1463 = vmatpush.msra.mxu0 0.0
        %1464 = vmatpush.msra.mxu0 0.0
        %1465 = vmatpush.msra.mxu0 0.0
        %1466 = vmatpush.msra.mxu0 0.0
        %1467 = vmatpush.msra.mxu0 %v521
        %1468 = vmatpush.msra.mxu0 %v457
        %1469 = vmatpush.msra.mxu0 %v393
        %1470 = vmatpush.msra.mxu0 %v329
        %1471 = vmatmul.f32.gmra.mxu0 %v693
        %v1472 = vpop.f32.mrf.mxu0
        %v1473 = vadd.f32 %v601, %v1472
        %1474 = vdwg.mxu0
        %1475 = vmatpush.msra.mxu0 0.0
        %1476 = vmatpush.msra.mxu0 0.0
        %1477 = vmatpush.msra.mxu0 0.0
        %1478 = vmatpush.msra.mxu0 0.0
        %1479 = vmatpush.msra.mxu0 0.0
        %1480 = vmatpush.msra.mxu0 0.0
        %1481 = vmatpush.msra.mxu0 0.0
        %1482 = vmatpush.msra.mxu0 0.0
        %1483 = vmatpush.msra.mxu0 0.0
        %1484 = vmatpush.msra.mxu0 0.0
        %1485 = vmatpush.msra.mxu0 0.0
        %1486 = vmatpush.msra.mxu0 0.0
        %1487 = vmatpush.msra.mxu0 %v522
        %1488 = vmatpush.msra.mxu0 %v458
        %1489 = vmatpush.msra.mxu0 %v394
        %1490 = vmatpush.msra.mxu0 %v330
        %1491 = vmatmul.f32.gmra.mxu0 %v693
        %v1492 = vpop.f32.mrf.mxu0
        %v1493 = vadd.f32 %v602, %v1492
        %1494 = vdwg.mxu0
        %1495 = vmatpush.msra.mxu0 0.0
        %1496 = vmatpush.msra.mxu0 0.0
        %1497 = vmatpush.msra.mxu0 0.0
        %1498 = vmatpush.msra.mxu0 0.0
        %1499 = vmatpush.msra.mxu0 0.0
        %1500 = vmatpush.msra.mxu0 0.0
        %1501 = vmatpush.msra.mxu0 0.0
        %1502 = vmatpush.msra.mxu0 0.0
        %1503 = vmatpush.msra.mxu0 0.0
        %1504 = vmatpush.msra.mxu0 0.0
        %1505 = vmatpush.msra.mxu0 0.0
        %1506 = vmatpush.msra.mxu0 0.0
        %1507 = vmatpush.msra.mxu0 %v523
        %1508 = vmatpush.msra.mxu0 %v459
        %1509 = vmatpush.msra.mxu0 %v395
        %1510 = vmatpush.msra.mxu0 %v331
        %1511 = vmatmul.f32.gmra.mxu0 %v693
        %v1512 = vpop.f32.mrf.mxu0
        %v1513 = vadd.f32 %v603, %v1512
        %1514 = vdwg.mxu0
        %1515 = vmatpush.msra.mxu0 0.0
        %1516 = vmatpush.msra.mxu0 0.0
        %1517 = vmatpush.msra.mxu0 0.0
        %1518 = vmatpush.msra.mxu0 0.0
        %1519 = vmatpush.msra.mxu0 0.0
        %1520 = vmatpush.msra.mxu0 0.0
        %1521 = vmatpush.msra.mxu0 0.0
        %1522 = vmatpush.msra.mxu0 0.0
        %1523 = vmatpush.msra.mxu0 0.0
        %1524 = vmatpush.msra.mxu0 0.0
        %1525 = vmatpush.msra.mxu0 0.0
        %1526 = vmatpush.msra.mxu0 0.0
        %1527 = vmatpush.msra.mxu0 %v524
        %1528 = vmatpush.msra.mxu0 %v460
        %1529 = vmatpush.msra.mxu0 %v396
        %1530 = vmatpush.msra.mxu0 %v332
        %1531 = vmatmul.f32.gmra.mxu0 %v693
        %v1532 = vpop.f32.mrf.mxu0
        %v1533 = vadd.f32 %v604, %v1532
        %1534 = vdwg.mxu0
        %1535 = vmatpush.msra.mxu0 0.0
        %1536 = vmatpush.msra.mxu0 0.0
        %1537 = vmatpush.msra.mxu0 0.0
        %1538 = vmatpush.msra.mxu0 0.0
        %1539 = vmatpush.msra.mxu0 0.0
        %1540 = vmatpush.msra.mxu0 0.0
        %1541 = vmatpush.msra.mxu0 0.0
        %1542 = vmatpush.msra.mxu0 0.0
        %1543 = vmatpush.msra.mxu0 0.0
        %1544 = vmatpush.msra.mxu0 0.0
        %1545 = vmatpush.msra.mxu0 0.0
        %1546 = vmatpush.msra.mxu0 0.0
        %1547 = vmatpush.msra.mxu0 %v525
        %1548 = vmatpush.msra.mxu0 %v461
        %1549 = vmatpush.msra.mxu0 %v397
        %1550 = vmatpush.msra.mxu0 %v333
        %1551 = vmatmul.f32.gmra.mxu0 %v693
        %v1552 = vpop.f32.mrf.mxu0
        %v1553 = vadd.f32 %v605, %v1552
        %1554 = vdwg.mxu0
        %1555 = vmatpush.msra.mxu0 0.0
        %1556 = vmatpush.msra.mxu0 0.0
        %1557 = vmatpush.msra.mxu0 0.0
        %1558 = vmatpush.msra.mxu0 0.0
        %1559 = vmatpush.msra.mxu0 0.0
        %1560 = vmatpush.msra.mxu0 0.0
        %1561 = vmatpush.msra.mxu0 0.0
        %1562 = vmatpush.msra.mxu0 0.0
        %1563 = vmatpush.msra.mxu0 0.0
        %1564 = vmatpush.msra.mxu0 0.0
        %1565 = vmatpush.msra.mxu0 0.0
        %1566 = vmatpush.msra.mxu0 0.0
        %1567 = vmatpush.msra.mxu0 %v526
        %1568 = vmatpush.msra.mxu0 %v462
        %1569 = vmatpush.msra.mxu0 %v398
        %1570 = vmatpush.msra.mxu0 %v334
        %1571 = vmatmul.f32.gmra.mxu0 %v693
        %v1572 = vpop.f32.mrf.mxu0
        %v1573 = vadd.f32 %v606, %v1572
        %1574 = vdwg.mxu0
        %1575 = vmatpush.msra.mxu0 0.0
        %1576 = vmatpush.msra.mxu0 0.0
        %1577 = vmatpush.msra.mxu0 0.0
        %1578 = vmatpush.msra.mxu0 0.0
        %1579 = vmatpush.msra.mxu0 0.0
        %1580 = vmatpush.msra.mxu0 0.0
        %1581 = vmatpush.msra.mxu0 0.0
        %1582 = vmatpush.msra.mxu0 0.0
        %1583 = vmatpush.msra.mxu0 0.0
        %1584 = vmatpush.msra.mxu0 0.0
        %1585 = vmatpush.msra.mxu0 0.0
        %1586 = vmatpush.msra.mxu0 0.0
        %1587 = vmatpush.msra.mxu0 %v527
        %1588 = vmatpush.msra.mxu0 %v463
        %1589 = vmatpush.msra.mxu0 %v399
        %1590 = vmatpush.msra.mxu0 %v335
        %1591 = vmatmul.f32.gmra.mxu0 %v693
        %v1592 = vpop.f32.mrf.mxu0
        %v1593 = vadd.f32 %v607, %v1592
        %1594 = vdwg.mxu0
        %1595 = vmatpush.msra.mxu0 0.0
        %1596 = vmatpush.msra.mxu0 0.0
        %1597 = vmatpush.msra.mxu0 0.0
        %1598 = vmatpush.msra.mxu0 0.0
        %1599 = vmatpush.msra.mxu0 0.0
        %1600 = vmatpush.msra.mxu0 0.0
        %1601 = vmatpush.msra.mxu0 0.0
        %1602 = vmatpush.msra.mxu0 0.0
        %1603 = vmatpush.msra.mxu0 0.0
        %1604 = vmatpush.msra.mxu0 0.0
        %1605 = vmatpush.msra.mxu0 0.0
        %1606 = vmatpush.msra.mxu0 0.0
        %1607 = vmatpush.msra.mxu0 %v528
        %1608 = vmatpush.msra.mxu0 %v464
        %1609 = vmatpush.msra.mxu0 %v400
        %1610 = vmatpush.msra.mxu0 %v336
        %1611 = vmatmul.f32.gmra.mxu0 %v693
        %v1612 = vpop.f32.mrf.mxu0
        %v1613 = vadd.f32 %v608, %v1612
        %1614 = vdwg.mxu0
        %1615 = vmatpush.msra.mxu0 0.0
        %1616 = vmatpush.msra.mxu0 0.0
        %1617 = vmatpush.msra.mxu0 0.0
        %1618 = vmatpush.msra.mxu0 0.0
        %1619 = vmatpush.msra.mxu0 0.0
        %1620 = vmatpush.msra.mxu0 0.0
        %1621 = vmatpush.msra.mxu0 0.0
        %1622 = vmatpush.msra.mxu0 0.0
        %1623 = vmatpush.msra.mxu0 0.0
        %1624 = vmatpush.msra.mxu0 0.0
        %1625 = vmatpush.msra.mxu0 0.0
        %1626 = vmatpush.msra.mxu0 0.0
        %1627 = vmatpush.msra.mxu0 %v529
        %1628 = vmatpush.msra.mxu0 %v465
        %1629 = vmatpush.msra.mxu0 %v401
        %1630 = vmatpush.msra.mxu0 %v337
        %1631 = vmatmul.f32.gmra.mxu0 %v693
        %v1632 = vpop.f32.mrf.mxu0
        %v1633 = vadd.f32 %v609, %v1632
        %1634 = vdwg.mxu0
        %1635 = vmatpush.msra.mxu0 0.0
        %1636 = vmatpush.msra.mxu0 0.0
        %1637 = vmatpush.msra.mxu0 0.0
        %1638 = vmatpush.msra.mxu0 0.0
        %1639 = vmatpush.msra.mxu0 0.0
        %1640 = vmatpush.msra.mxu0 0.0
        %1641 = vmatpush.msra.mxu0 0.0
        %1642 = vmatpush.msra.mxu0 0.0
        %1643 = vmatpush.msra.mxu0 0.0
        %1644 = vmatpush.msra.mxu0 0.0
        %1645 = vmatpush.msra.mxu0 0.0
        %1646 = vmatpush.msra.mxu0 0.0
        %1647 = vmatpush.msra.mxu0 %v530
        %1648 = vmatpush.msra.mxu0 %v466
        %1649 = vmatpush.msra.mxu0 %v402
        %1650 = vmatpush.msra.mxu0 %v338
        %1651 = vmatmul.f32.gmra.mxu0 %v693
        %v1652 = vpop.f32.mrf.mxu0
        %v1653 = vadd.f32 %v610, %v1652
        %1654 = vdwg.mxu0
        %1655 = vmatpush.msra.mxu0 0.0
        %1656 = vmatpush.msra.mxu0 0.0
        %1657 = vmatpush.msra.mxu0 0.0
        %1658 = vmatpush.msra.mxu0 0.0
        %1659 = vmatpush.msra.mxu0 0.0
        %1660 = vmatpush.msra.mxu0 0.0
        %1661 = vmatpush.msra.mxu0 0.0
        %1662 = vmatpush.msra.mxu0 0.0
        %1663 = vmatpush.msra.mxu0 0.0
        %1664 = vmatpush.msra.mxu0 0.0
        %1665 = vmatpush.msra.mxu0 0.0
        %1666 = vmatpush.msra.mxu0 0.0
        %1667 = vmatpush.msra.mxu0 %v531
        %1668 = vmatpush.msra.mxu0 %v467
        %1669 = vmatpush.msra.mxu0 %v403
        %1670 = vmatpush.msra.mxu0 %v339
        %1671 = vmatmul.f32.gmra.mxu0 %v693
        %v1672 = vpop.f32.mrf.mxu0
        %v1673 = vadd.f32 %v611, %v1672
        %1674 = vdwg.mxu0
        %1675 = vmatpush.msra.mxu0 0.0
        %1676 = vmatpush.msra.mxu0 0.0
        %1677 = vmatpush.msra.mxu0 0.0
        %1678 = vmatpush.msra.mxu0 0.0
        %1679 = vmatpush.msra.mxu0 0.0
        %1680 = vmatpush.msra.mxu0 0.0
        %1681 = vmatpush.msra.mxu0 0.0
        %1682 = vmatpush.msra.mxu0 0.0
        %1683 = vmatpush.msra.mxu0 0.0
        %1684 = vmatpush.msra.mxu0 0.0
        %1685 = vmatpush.msra.mxu0 0.0
        %1686 = vmatpush.msra.mxu0 0.0
        %1687 = vmatpush.msra.mxu0 %v532
        %1688 = vmatpush.msra.mxu0 %v468
        %1689 = vmatpush.msra.mxu0 %v404
        %1690 = vmatpush.msra.mxu0 %v340
        %1691 = vmatmul.f32.gmra.mxu0 %v693
        %v1692 = vpop.f32.mrf.mxu0
        %v1693 = vadd.f32 %v612, %v1692
        %1694 = vdwg.mxu0
        %1695 = vmatpush.msra.mxu0 0.0
        %1696 = vmatpush.msra.mxu0 0.0
        %1697 = vmatpush.msra.mxu0 0.0
        %1698 = vmatpush.msra.mxu0 0.0
        %1699 = vmatpush.msra.mxu0 0.0
        %1700 = vmatpush.msra.mxu0 0.0
        %1701 = vmatpush.msra.mxu0 0.0
        %1702 = vmatpush.msra.mxu0 0.0
        %1703 = vmatpush.msra.mxu0 0.0
        %1704 = vmatpush.msra.mxu0 0.0
        %1705 = vmatpush.msra.mxu0 0.0
        %1706 = vmatpush.msra.mxu0 0.0
        %1707 = vmatpush.msra.mxu0 %v533
        %1708 = vmatpush.msra.mxu0 %v469
        %1709 = vmatpush.msra.mxu0 %v405
        %1710 = vmatpush.msra.mxu0 %v341
        %1711 = vmatmul.f32.gmra.mxu0 %v693
        %v1712 = vpop.f32.mrf.mxu0
        %v1713 = vadd.f32 %v613, %v1712
        %1714 = vdwg.mxu0
        %1715 = vmatpush.msra.mxu0 0.0
        %1716 = vmatpush.msra.mxu0 0.0
        %1717 = vmatpush.msra.mxu0 0.0
        %1718 = vmatpush.msra.mxu0 0.0
        %1719 = vmatpush.msra.mxu0 0.0
        %1720 = vmatpush.msra.mxu0 0.0
        %1721 = vmatpush.msra.mxu0 0.0
        %1722 = vmatpush.msra.mxu0 0.0
        %1723 = vmatpush.msra.mxu0 0.0
        %1724 = vmatpush.msra.mxu0 0.0
        %1725 = vmatpush.msra.mxu0 0.0
        %1726 = vmatpush.msra.mxu0 0.0
        %1727 = vmatpush.msra.mxu0 %v534
        %1728 = vmatpush.msra.mxu0 %v470
        %1729 = vmatpush.msra.mxu0 %v406
        %1730 = vmatpush.msra.mxu0 %v342
        %1731 = vmatmul.f32.gmra.mxu0 %v693
        %v1732 = vpop.f32.mrf.mxu0
        %v1733 = vadd.f32 %v614, %v1732
        %1734 = vdwg.mxu0
        %1735 = vmatpush.msra.mxu0 0.0
        %1736 = vmatpush.msra.mxu0 0.0
        %1737 = vmatpush.msra.mxu0 0.0
        %1738 = vmatpush.msra.mxu0 0.0
        %1739 = vmatpush.msra.mxu0 0.0
        %1740 = vmatpush.msra.mxu0 0.0
        %1741 = vmatpush.msra.mxu0 0.0
        %1742 = vmatpush.msra.mxu0 0.0
        %1743 = vmatpush.msra.mxu0 0.0
        %1744 = vmatpush.msra.mxu0 0.0
        %1745 = vmatpush.msra.mxu0 0.0
        %1746 = vmatpush.msra.mxu0 0.0
        %1747 = vmatpush.msra.mxu0 %v535
        %1748 = vmatpush.msra.mxu0 %v471
        %1749 = vmatpush.msra.mxu0 %v407
        %1750 = vmatpush.msra.mxu0 %v343
        %1751 = vmatmul.f32.gmra.mxu0 %v693
        %v1752 = vpop.f32.mrf.mxu0
        %v1753 = vadd.f32 %v615, %v1752
        %1754 = vdwg.mxu0
        %1755 = vmatpush.msra.mxu0 0.0
        %1756 = vmatpush.msra.mxu0 0.0
        %1757 = vmatpush.msra.mxu0 0.0
        %1758 = vmatpush.msra.mxu0 0.0
        %1759 = vmatpush.msra.mxu0 0.0
        %1760 = vmatpush.msra.mxu0 0.0
        %1761 = vmatpush.msra.mxu0 0.0
        %1762 = vmatpush.msra.mxu0 0.0
        %1763 = vmatpush.msra.mxu0 0.0
        %1764 = vmatpush.msra.mxu0 0.0
        %1765 = vmatpush.msra.mxu0 0.0
        %1766 = vmatpush.msra.mxu0 0.0
        %1767 = vmatpush.msra.mxu0 %v536
        %1768 = vmatpush.msra.mxu0 %v472
        %1769 = vmatpush.msra.mxu0 %v408
        %1770 = vmatpush.msra.mxu0 %v344
        %1771 = vmatmul.f32.gmra.mxu0 %v693
        %v1772 = vpop.f32.mrf.mxu0
        %v1773 = vadd.f32 %v616, %v1772
        %1774 = vdwg.mxu0
        %1775 = vmatpush.msra.mxu0 0.0
        %1776 = vmatpush.msra.mxu0 0.0
        %1777 = vmatpush.msra.mxu0 0.0
        %1778 = vmatpush.msra.mxu0 0.0
        %1779 = vmatpush.msra.mxu0 0.0
        %1780 = vmatpush.msra.mxu0 0.0
        %1781 = vmatpush.msra.mxu0 0.0
        %1782 = vmatpush.msra.mxu0 0.0
        %1783 = vmatpush.msra.mxu0 0.0
        %1784 = vmatpush.msra.mxu0 0.0
        %1785 = vmatpush.msra.mxu0 0.0
        %1786 = vmatpush.msra.mxu0 0.0
        %1787 = vmatpush.msra.mxu0 %v537
        %1788 = vmatpush.msra.mxu0 %v473
        %1789 = vmatpush.msra.mxu0 %v409
        %1790 = vmatpush.msra.mxu0 %v345
        %1791 = vmatmul.f32.gmra.mxu0 %v693
        %v1792 = vpop.f32.mrf.mxu0
        %v1793 = vadd.f32 %v617, %v1792
        %1794 = vdwg.mxu0
        %1795 = vmatpush.msra.mxu0 0.0
        %1796 = vmatpush.msra.mxu0 0.0
        %1797 = vmatpush.msra.mxu0 0.0
        %1798 = vmatpush.msra.mxu0 0.0
        %1799 = vmatpush.msra.mxu0 0.0
        %1800 = vmatpush.msra.mxu0 0.0
        %1801 = vmatpush.msra.mxu0 0.0
        %1802 = vmatpush.msra.mxu0 0.0
        %1803 = vmatpush.msra.mxu0 0.0
        %1804 = vmatpush.msra.mxu0 0.0
        %1805 = vmatpush.msra.mxu0 0.0
        %1806 = vmatpush.msra.mxu0 0.0
        %1807 = vmatpush.msra.mxu0 %v538
        %1808 = vmatpush.msra.mxu0 %v474
        %1809 = vmatpush.msra.mxu0 %v410
        %1810 = vmatpush.msra.mxu0 %v346
        %1811 = vmatmul.f32.gmra.mxu0 %v693
        %v1812 = vpop.f32.mrf.mxu0
        %v1813 = vadd.f32 %v618, %v1812
        %1814 = vdwg.mxu0
        %1815 = vmatpush.msra.mxu0 0.0
        %1816 = vmatpush.msra.mxu0 0.0
        %1817 = vmatpush.msra.mxu0 0.0
        %1818 = vmatpush.msra.mxu0 0.0
        %1819 = vmatpush.msra.mxu0 0.0
        %1820 = vmatpush.msra.mxu0 0.0
        %1821 = vmatpush.msra.mxu0 0.0
        %1822 = vmatpush.msra.mxu0 0.0
        %1823 = vmatpush.msra.mxu0 0.0
        %1824 = vmatpush.msra.mxu0 0.0
        %1825 = vmatpush.msra.mxu0 0.0
        %1826 = vmatpush.msra.mxu0 0.0
        %1827 = vmatpush.msra.mxu0 %v539
        %1828 = vmatpush.msra.mxu0 %v475
        %1829 = vmatpush.msra.mxu0 %v411
        %1830 = vmatpush.msra.mxu0 %v347
        %1831 = vmatmul.f32.gmra.mxu0 %v693
        %v1832 = vpop.f32.mrf.mxu0
        %v1833 = vadd.f32 %v619, %v1832
        %1834 = vdwg.mxu0
        %1835 = vmatpush.msra.mxu0 0.0
        %1836 = vmatpush.msra.mxu0 0.0
        %1837 = vmatpush.msra.mxu0 0.0
        %1838 = vmatpush.msra.mxu0 0.0
        %1839 = vmatpush.msra.mxu0 0.0
        %1840 = vmatpush.msra.mxu0 0.0
        %1841 = vmatpush.msra.mxu0 0.0
        %1842 = vmatpush.msra.mxu0 0.0
        %1843 = vmatpush.msra.mxu0 0.0
        %1844 = vmatpush.msra.mxu0 0.0
        %1845 = vmatpush.msra.mxu0 0.0
        %1846 = vmatpush.msra.mxu0 0.0
        %1847 = vmatpush.msra.mxu0 %v540
        %1848 = vmatpush.msra.mxu0 %v476
        %1849 = vmatpush.msra.mxu0 %v412
        %1850 = vmatpush.msra.mxu0 %v348
        %1851 = vmatmul.f32.gmra.mxu0 %v693
        %v1852 = vpop.f32.mrf.mxu0
        %v1853 = vadd.f32 %v620, %v1852
        %1854 = vdwg.mxu0
        %1855 = vmatpush.msra.mxu0 0.0
        %1856 = vmatpush.msra.mxu0 0.0
        %1857 = vmatpush.msra.mxu0 0.0
        %1858 = vmatpush.msra.mxu0 0.0
        %1859 = vmatpush.msra.mxu0 0.0
        %1860 = vmatpush.msra.mxu0 0.0
        %1861 = vmatpush.msra.mxu0 0.0
        %1862 = vmatpush.msra.mxu0 0.0
        %1863 = vmatpush.msra.mxu0 0.0
        %1864 = vmatpush.msra.mxu0 0.0
        %1865 = vmatpush.msra.mxu0 0.0
        %1866 = vmatpush.msra.mxu0 0.0
        %1867 = vmatpush.msra.mxu0 %v541
        %1868 = vmatpush.msra.mxu0 %v477
        %1869 = vmatpush.msra.mxu0 %v413
        %1870 = vmatpush.msra.mxu0 %v349
        %1871 = vmatmul.f32.gmra.mxu0 %v693
        %v1872 = vpop.f32.mrf.mxu0
        %v1873 = vadd.f32 %v621, %v1872
        %1874 = vdwg.mxu0
        %1875 = vmatpush.msra.mxu0 0.0
        %1876 = vmatpush.msra.mxu0 0.0
        %1877 = vmatpush.msra.mxu0 0.0
        %1878 = vmatpush.msra.mxu0 0.0
        %1879 = vmatpush.msra.mxu0 0.0
        %1880 = vmatpush.msra.mxu0 0.0
        %1881 = vmatpush.msra.mxu0 0.0
        %1882 = vmatpush.msra.mxu0 0.0
        %1883 = vmatpush.msra.mxu0 0.0
        %1884 = vmatpush.msra.mxu0 0.0
        %1885 = vmatpush.msra.mxu0 0.0
        %1886 = vmatpush.msra.mxu0 0.0
        %1887 = vmatpush.msra.mxu0 %v542
        %1888 = vmatpush.msra.mxu0 %v478
        %1889 = vmatpush.msra.mxu0 %v414
        %1890 = vmatpush.msra.mxu0 %v350
        %1891 = vmatmul.f32.gmra.mxu0 %v693
        %v1892 = vpop.f32.mrf.mxu0
        %v1893 = vadd.f32 %v622, %v1892
        %1894 = vdwg.mxu0
        %1895 = vmatpush.msra.mxu0 0.0
        %1896 = vmatpush.msra.mxu0 0.0
        %1897 = vmatpush.msra.mxu0 0.0
        %1898 = vmatpush.msra.mxu0 0.0
        %1899 = vmatpush.msra.mxu0 0.0
        %1900 = vmatpush.msra.mxu0 0.0
        %1901 = vmatpush.msra.mxu0 0.0
        %1902 = vmatpush.msra.mxu0 0.0
        %1903 = vmatpush.msra.mxu0 0.0
        %1904 = vmatpush.msra.mxu0 0.0
        %1905 = vmatpush.msra.mxu0 0.0
        %1906 = vmatpush.msra.mxu0 0.0
        %1907 = vmatpush.msra.mxu0 %v543
        %1908 = vmatpush.msra.mxu0 %v479
        %1909 = vmatpush.msra.mxu0 %v415
        %1910 = vmatpush.msra.mxu0 %v351
        %1911 = vmatmul.f32.gmra.mxu0 %v693
        %v1912 = vpop.f32.mrf.mxu0
        %v1913 = vadd.f32 %v623, %v1912
        %1914 = vdwg.mxu0
        %1915 = vmatpush.msra.mxu0 0.0
        %1916 = vmatpush.msra.mxu0 0.0
        %1917 = vmatpush.msra.mxu0 0.0
        %1918 = vmatpush.msra.mxu0 0.0
        %1919 = vmatpush.msra.mxu0 0.0
        %1920 = vmatpush.msra.mxu0 0.0
        %1921 = vmatpush.msra.mxu0 0.0
        %1922 = vmatpush.msra.mxu0 0.0
        %1923 = vmatpush.msra.mxu0 0.0
        %1924 = vmatpush.msra.mxu0 0.0
        %1925 = vmatpush.msra.mxu0 0.0
        %1926 = vmatpush.msra.mxu0 0.0
        %1927 = vmatpush.msra.mxu0 %v544
        %1928 = vmatpush.msra.mxu0 %v480
        %1929 = vmatpush.msra.mxu0 %v416
        %1930 = vmatpush.msra.mxu0 %v352
        %1931 = vmatmul.f32.gmra.mxu0 %v693
        %v1932 = vpop.f32.mrf.mxu0
        %v1933 = vadd.f32 %v624, %v1932
        %1934 = vdwg.mxu0
        %1935 = vmatpush.msra.mxu0 0.0
        %1936 = vmatpush.msra.mxu0 0.0
        %1937 = vmatpush.msra.mxu0 0.0
        %1938 = vmatpush.msra.mxu0 0.0
        %1939 = vmatpush.msra.mxu0 0.0
        %1940 = vmatpush.msra.mxu0 0.0
        %1941 = vmatpush.msra.mxu0 0.0
        %1942 = vmatpush.msra.mxu0 0.0
        %1943 = vmatpush.msra.mxu0 0.0
        %1944 = vmatpush.msra.mxu0 0.0
        %1945 = vmatpush.msra.mxu0 0.0
        %1946 = vmatpush.msra.mxu0 0.0
        %1947 = vmatpush.msra.mxu0 %v545
        %1948 = vmatpush.msra.mxu0 %v481
        %1949 = vmatpush.msra.mxu0 %v417
        %1950 = vmatpush.msra.mxu0 %v353
        %1951 = vmatmul.f32.gmra.mxu0 %v693
        %v1952 = vpop.f32.mrf.mxu0
        %v1953 = vadd.f32 %v625, %v1952
        %1954 = vdwg.mxu0
        %1955 = vmatpush.msra.mxu0 0.0
        %1956 = vmatpush.msra.mxu0 0.0
        %1957 = vmatpush.msra.mxu0 0.0
        %1958 = vmatpush.msra.mxu0 0.0
        %1959 = vmatpush.msra.mxu0 0.0
        %1960 = vmatpush.msra.mxu0 0.0
        %1961 = vmatpush.msra.mxu0 0.0
        %1962 = vmatpush.msra.mxu0 0.0
        %1963 = vmatpush.msra.mxu0 0.0
        %1964 = vmatpush.msra.mxu0 0.0
        %1965 = vmatpush.msra.mxu0 0.0
        %1966 = vmatpush.msra.mxu0 0.0
        %1967 = vmatpush.msra.mxu0 %v546
        %1968 = vmatpush.msra.mxu0 %v482
        %1969 = vmatpush.msra.mxu0 %v418
        %1970 = vmatpush.msra.mxu0 %v354
        %1971 = vmatmul.f32.gmra.mxu0 %v693
        %v1972 = vpop.f32.mrf.mxu0
        %v1973 = vadd.f32 %v626, %v1972
        %1974 = vdwg.mxu0
        %v1975 = vmax.f32 %v713, 0.0
        %v1976 = vmax.f32 %v733, 0.0
        %v1977 = vmax.f32 %v753, 0.0
        %v1978 = vmax.f32 %v773, 0.0
        %v1979 = vmax.f32 %v793, 0.0
        %v1980 = vmax.f32 %v813, 0.0
        %v1981 = vmax.f32 %v833, 0.0
        %v1982 = vmax.f32 %v853, 0.0
        %v1983 = vmax.f32 %v873, 0.0
        %v1984 = vmax.f32 %v893, 0.0
        %v1985 = vmax.f32 %v913, 0.0
        %v1986 = vmax.f32 %v933, 0.0
        %v1987 = vmax.f32 %v953, 0.0
        %v1988 = vmax.f32 %v973, 0.0
        %v1989 = vmax.f32 %v993, 0.0
        %v1990 = vmax.f32 %v1013, 0.0
        %v1991 = vmax.f32 %v1033, 0.0
        %v1992 = vmax.f32 %v1053, 0.0
        %v1993 = vmax.f32 %v1073, 0.0
        %v1994 = vmax.f32 %v1093, 0.0
        %v1995 = vmax.f32 %v1113, 0.0
        %v1996 = vmax.f32 %v1133, 0.0
        %v1997 = vmax.f32 %v1153, 0.0
        %v1998 = vmax.f32 %v1173, 0.0
        %v1999 = vmax.f32 %v1193, 0.0
        %v2000 = vmax.f32 %v1213, 0.0
        %v2001 = vmax.f32 %v1233, 0.0
        %v2002 = vmax.f32 %v1253, 0.0
        %v2003 = vmax.f32 %v1273, 0.0
        %v2004 = vmax.f32 %v1293, 0.0
        %v2005 = vmax.f32 %v1313, 0.0
        %v2006 = vmax.f32 %v1333, 0.0
        %v2007 = vmax.f32 %v1353, 0.0
        %v2008 = vmax.f32 %v1373, 0.0
        %v2009 = vmax.f32 %v1393, 0.0
        %v2010 = vmax.f32 %v1413, 0.0
        %v2011 = vmax.f32 %v1433, 0.0
        %v2012 = vmax.f32 %v1453, 0.0
        %v2013 = vmax.f32 %v1473, 0.0
        %v2014 = vmax.f32 %v1493, 0.0
        %v2015 = vmax.f32 %v1513, 0.0
        %v2016 = vmax.f32 %v1533, 0.0
        %v2017 = vmax.f32 %v1553, 0.0
        %v2018 = vmax.f32 %v1573, 0.0
        %v2019 = vmax.f32 %v1593, 0.0
        %v2020 = vmax.f32 %v1613, 0.0
        %v2021 = vmax.f32 %v1633, 0.0
        %v2022 = vmax.f32 %v1653, 0.0
        %v2023 = vmax.f32 %v1673, 0.0
        %v2024 = vmax.f32 %v1693, 0.0
        %v2025 = vmax.f32 %v1713, 0.0
        %v2026 = vmax.f32 %v1733, 0.0
        %v2027 = vmax.f32 %v1753, 0.0
        %v2028 = vmax.f32 %v1773, 0.0
        %v2029 = vmax.f32 %v1793, 0.0
        %v2030 = vmax.f32 %v1813, 0.0
        %v2031 = vmax.f32 %v1833, 0.0
        %v2032 = vmax.f32 %v1853, 0.0
        %v2033 = vmax.f32 %v1873, 0.0
        %v2034 = vmax.f32 %v1893, 0.0
        %v2035 = vmax.f32 %v1913, 0.0
        %v2036 = vmax.f32 %v1933, 0.0
        %v2037 = vmax.f32 %v1953, 0.0
        %v2038 = vmax.f32 %v1973, 0.0
        %v2103 = vrot.slane %v1976, 7
        %v2104 = vrot.slane %v1977, 6
        %v2105 = vrot.slane %v1978, 5
        %v2106 = vrot.slane %v1979, 4
        %v2107 = vrot.slane %v1980, 3
        %v2108 = vrot.slane %v1981, 2
        %v2109 = vrot.slane %v1982, 1
        %v2110 = vrot.slane %v1984, 7
        %v2111 = vrot.slane %v1985, 6
        %v2112 = vrot.slane %v1986, 5
        %v2113 = vrot.slane %v1987, 4
        %v2114 = vrot.slane %v1988, 3
        %v2115 = vrot.slane %v1989, 2
        %v2116 = vrot.slane %v1990, 1
        %v2117 = vrot.slane %v1992, 7
        %v2118 = vrot.slane %v1993, 6
        %v2119 = vrot.slane %v1994, 5
        %v2120 = vrot.slane %v1995, 4
        %v2121 = vrot.slane %v1996, 3
        %v2122 = vrot.slane %v1997, 2
        %v2123 = vrot.slane %v1998, 1
        %v2124 = vrot.slane %v2000, 7
        %v2125 = vrot.slane %v2001, 6
        %v2126 = vrot.slane %v2002, 5
        %v2127 = vrot.slane %v2003, 4
        %v2128 = vrot.slane %v2004, 3
        %v2129 = vrot.slane %v2005, 2
        %v2130 = vrot.slane %v2006, 1
        %v2131 = vrot.slane %v2008, 7
        %v2132 = vrot.slane %v2009, 6
        %v2133 = vrot.slane %v2010, 5
        %v2134 = vrot.slane %v2011, 4
        %v2135 = vrot.slane %v2012, 3
        %v2136 = vrot.slane %v2013, 2
        %v2137 = vrot.slane %v2014, 1
        %v2138 = vrot.slane %v2016, 7
        %v2139 = vrot.slane %v2017, 6
        %v2140 = vrot.slane %v2018, 5
        %v2141 = vrot.slane %v2019, 4
        %v2142 = vrot.slane %v2020, 3
        %v2143 = vrot.slane %v2021, 2
        %v2144 = vrot.slane %v2022, 1
        %v2145 = vrot.slane %v2024, 7
        %v2146 = vrot.slane %v2025, 6
        %v2147 = vrot.slane %v2026, 5
        %v2148 = vrot.slane %v2027, 4
        %v2149 = vrot.slane %v2028, 3
        %v2150 = vrot.slane %v2029, 2
        %v2151 = vrot.slane %v2030, 1
        %v2152 = vrot.slane %v2032, 7
        %v2153 = vrot.slane %v2033, 6
        %v2154 = vrot.slane %v2034, 5
        %v2155 = vrot.slane %v2035, 4
        %v2156 = vrot.slane %v2036, 3
        %v2157 = vrot.slane %v2037, 2
        %v2158 = vrot.slane %v2038, 1
        %vm2159 = vcmask 1040384
        %v2160 = vsel %vm2159, %v1975, %v2103
        %vm2161 = vcmask 1042434
        %v2162 = vsel %vm2161, %v2104, %v2105
        %vm2163 = vcmask 1041408
        %v2164 = vsel %vm2163, %v2160, %v2162
        %vm2165 = vcmask 1044484
        %v2166 = vsel %vm2165, %v2106, %v2107
        %vm2167 = vcmask 1046534
        %v2168 = vsel %vm2167, %v2108, %v2109
        %vm2169 = vcmask 1045508
        %v2170 = vsel %vm2169, %v2166, %v2168
        %vm2171 = vcmask 1043456
        %v2172 = vsel %vm2171, %v2164, %v2170
        %v2173 = vsel %vm2159, %v1983, %v2110
        %v2174 = vsel %vm2161, %v2111, %v2112
        %v2175 = vsel %vm2163, %v2173, %v2174
        %v2176 = vsel %vm2165, %v2113, %v2114
        %v2177 = vsel %vm2167, %v2115, %v2116
        %v2178 = vsel %vm2169, %v2176, %v2177
        %v2179 = vsel %vm2171, %v2175, %v2178
        %v2180 = vsel %vm2159, %v1991, %v2117
        %v2181 = vsel %vm2161, %v2118, %v2119
        %v2182 = vsel %vm2163, %v2180, %v2181
        %v2183 = vsel %vm2165, %v2120, %v2121
        %v2184 = vsel %vm2167, %v2122, %v2123
        %v2185 = vsel %vm2169, %v2183, %v2184
        %v2186 = vsel %vm2171, %v2182, %v2185
        %v2187 = vsel %vm2159, %v1999, %v2124
        %v2188 = vsel %vm2161, %v2125, %v2126
        %v2189 = vsel %vm2163, %v2187, %v2188
        %v2190 = vsel %vm2165, %v2127, %v2128
        %v2191 = vsel %vm2167, %v2129, %v2130
        %v2192 = vsel %vm2169, %v2190, %v2191
        %v2193 = vsel %vm2171, %v2189, %v2192
        %v2194 = vsel %vm2159, %v2007, %v2131
        %v2195 = vsel %vm2161, %v2132, %v2133
        %v2196 = vsel %vm2163, %v2194, %v2195
        %v2197 = vsel %vm2165, %v2134, %v2135
        %v2198 = vsel %vm2167, %v2136, %v2137
        %v2199 = vsel %vm2169, %v2197, %v2198
        %v2200 = vsel %vm2171, %v2196, %v2199
        %v2201 = vsel %vm2159, %v2015, %v2138
        %v2202 = vsel %vm2161, %v2139, %v2140
        %v2203 = vsel %vm2163, %v2201, %v2202
        %v2204 = vsel %vm2165, %v2141, %v2142
        %v2205 = vsel %vm2167, %v2143, %v2144
        %v2206 = vsel %vm2169, %v2204, %v2205
        %v2207 = vsel %vm2171, %v2203, %v2206
        %v2208 = vsel %vm2159, %v2023, %v2145
        %v2209 = vsel %vm2161, %v2146, %v2147
        %v2210 = vsel %vm2163, %v2208, %v2209
        %v2211 = vsel %vm2165, %v2148, %v2149
        %v2212 = vsel %vm2167, %v2150, %v2151
        %v2213 = vsel %vm2169, %v2211, %v2212
        %v2214 = vsel %vm2171, %v2210, %v2213
        %v2215 = vsel %vm2159, %v2031, %v2152
        %v2216 = vsel %vm2161, %v2153, %v2154
        %v2217 = vsel %vm2163, %v2215, %v2216
        %v2218 = vsel %vm2165, %v2155, %v2156
        %v2219 = vsel %vm2167, %v2157, %v2158
        %v2220 = vsel %vm2169, %v2218, %v2219
        %v2221 = vsel %vm2171, %v2217, %v2220
        %2230 = vst [vmem:[#allocation2] sm:$0xff] %v2172
        %2231 = vst [vmem:[#allocation2 + $0x8] sm:$0xff] %v2179
        %2232 = vst [vmem:[#allocation2 + $0x10] sm:$0xff] %v2186
        %2233 = vst [vmem:[#allocation2 + $0x18] sm:$0xff] %v2193
        %2234 = vst [vmem:[#allocation2 + $0x20] sm:$0xff] %v2200
        %2235 = vst [vmem:[#allocation2 + $0x28] sm:$0xff] %v2207
        %2236 = vst [vmem:[#allocation2 + $0x30] sm:$0xff] %v2214
        %2237 = vst [vmem:[#allocation2 + $0x38] sm:$0xff] %v2221
        %v2238 = vld [vmem:[#allocation2] sm:$0x1]
        %2239 = vst [vmem:[#allocation3] sm:$0x1] %v2238
        %v2240 = vld [vmem:[#allocation2 + $0x1] sm:$0x1]
        %2241 = vst [vmem:[#allocation3 + $0x1] sm:$0x1] %v2240
        %v2242 = vld [vmem:[#allocation2 + $0x2] sm:$0x1]
        %2243 = vst [vmem:[#allocation3 + $0x2] sm:$0x1] %v2242
        %v2244 = vld [vmem:[#allocation2 + $0x3] sm:$0x1]
        %2245 = vst [vmem:[#allocation3 + $0x3] sm:$0x1] %v2244
        %v2246 = vld [vmem:[#allocation2 + $0x4] sm:$0x1]
        %2247 = vst [vmem:[#allocation3 + $0x4] sm:$0x1] %v2246
        %v2248 = vld [vmem:[#allocation2 + $0x5] sm:$0x1]
        %2249 = vst [vmem:[#allocation3 + $0x5] sm:$0x1] %v2248
        %v2250 = vld [vmem:[#allocation2 + $0x6] sm:$0x1]
        %2251 = vst [vmem:[#allocation3 + $0x6] sm:$0x1] %v2250
        %v2252 = vld [vmem:[#allocation2 + $0x7] sm:$0x1]
        %2253 = vst [vmem:[#allocation3 + $0x7] sm:$0x1] %v2252
        %v2254 = vld [vmem:[#allocation2 + $0x8] sm:$0x1]
        %2255 = vst [vmem:[#allocation3 + $0x10] sm:$0x1] %v2254
        %v2256 = vld [vmem:[#allocation2 + $0x9] sm:$0x1]
        %2257 = vst [vmem:[#allocation3 + $0x11] sm:$0x1] %v2256
        %v2258 = vld [vmem:[#allocation2 + $0xa] sm:$0x1]
        %2259 = vst [vmem:[#allocation3 + $0x12] sm:$0x1] %v2258
        %v2260 = vld [vmem:[#allocation2 + $0xb] sm:$0x1]
        %2261 = vst [vmem:[#allocation3 + $0x13] sm:$0x1] %v2260
        %v2262 = vld [vmem:[#allocation2 + $0xc] sm:$0x1]
        %2263 = vst [vmem:[#allocation3 + $0x14] sm:$0x1] %v2262
        %v2264 = vld [vmem:[#allocation2 + $0xd] sm:$0x1]
        %2265 = vst [vmem:[#allocation3 + $0x15] sm:$0x1] %v2264
        %v2266 = vld [vmem:[#allocation2 + $0xe] sm:$0x1]
        %2267 = vst [vmem:[#allocation3 + $0x16] sm:$0x1] %v2266
        %v2268 = vld [vmem:[#allocation2 + $0xf] sm:$0x1]
        %2269 = vst [vmem:[#allocation3 + $0x17] sm:$0x1] %v2268
        %v2270 = vld [vmem:[#allocation2 + $0x10] sm:$0x1]
        %2271 = vst [vmem:[#allocation3 + $0x20] sm:$0x1] %v2270
        %v2272 = vld [vmem:[#allocation2 + $0x11] sm:$0x1]
        %2273 = vst [vmem:[#allocation3 + $0x21] sm:$0x1] %v2272
        %v2274 = vld [vmem:[#allocation2 + $0x12] sm:$0x1]
        %2275 = vst [vmem:[#allocation3 + $0x22] sm:$0x1] %v2274
        %v2276 = vld [vmem:[#allocation2 + $0x13] sm:$0x1]
        %2277 = vst [vmem:[#allocation3 + $0x23] sm:$0x1] %v2276
        %v2278 = vld [vmem:[#allocation2 + $0x14] sm:$0x1]
        %2279 = vst [vmem:[#allocation3 + $0x24] sm:$0x1] %v2278
        %v2280 = vld [vmem:[#allocation2 + $0x15] sm:$0x1]
        %2281 = vst [vmem:[#allocation3 + $0x25] sm:$0x1] %v2280
        %v2282 = vld [vmem:[#allocation2 + $0x16] sm:$0x1]
        %2283 = vst [vmem:[#allocation3 + $0x26] sm:$0x1] %v2282
        %v2284 = vld [vmem:[#allocation2 + $0x17] sm:$0x1]
        %2285 = vst [vmem:[#allocation3 + $0x27] sm:$0x1] %v2284
        %v2286 = vld [vmem:[#allocation2 + $0x18] sm:$0x1]
        %2287 = vst [vmem:[#allocation3 + $0x30] sm:$0x1] %v2286
        %v2288 = vld [vmem:[#allocation2 + $0x19] sm:$0x1]
        %2289 = vst [vmem:[#allocation3 + $0x31] sm:$0x1] %v2288
        %v2290 = vld [vmem:[#allocation2 + $0x1a] sm:$0x1]
        %2291 = vst [vmem:[#allocation3 + $0x32] sm:$0x1] %v2290
        %v2292 = vld [vmem:[#allocation2 + $0x1b] sm:$0x1]
        %2293 = vst [vmem:[#allocation3 + $0x33] sm:$0x1] %v2292
        %v2294 = vld [vmem:[#allocation2 + $0x1c] sm:$0x1]
        %2295 = vst [vmem:[#allocation3 + $0x34] sm:$0x1] %v2294
        %v2296 = vld [vmem:[#allocation2 + $0x1d] sm:$0x1]
        %2297 = vst [vmem:[#allocation3 + $0x35] sm:$0x1] %v2296
        %v2298 = vld [vmem:[#allocation2 + $0x1e] sm:$0x1]
        %2299 = vst [vmem:[#allocation3 + $0x36] sm:$0x1] %v2298
        %v2300 = vld [vmem:[#allocation2 + $0x1f] sm:$0x1]
        %2301 = vst [vmem:[#allocation3 + $0x37] sm:$0x1] %v2300
        %v2302 = vld [vmem:[#allocation2 + $0x20] sm:$0x1]
        %2303 = vst [vmem:[#allocation3 + $0x8] sm:$0x1] %v2302
        %v2304 = vld [vmem:[#allocation2 + $0x21] sm:$0x1]
        %2305 = vst [vmem:[#allocation3 + $0x9] sm:$0x1] %v2304
        %v2306 = vld [vmem:[#allocation2 + $0x22] sm:$0x1]
        %2307 = vst [vmem:[#allocation3 + $0xa] sm:$0x1] %v2306
        %v2308 = vld [vmem:[#allocation2 + $0x23] sm:$0x1]
        %2309 = vst [vmem:[#allocation3 + $0xb] sm:$0x1] %v2308
        %v2310 = vld [vmem:[#allocation2 + $0x24] sm:$0x1]
        %2311 = vst [vmem:[#allocation3 + $0xc] sm:$0x1] %v2310
        %v2312 = vld [vmem:[#allocation2 + $0x25] sm:$0x1]
        %2313 = vst [vmem:[#allocation3 + $0xd] sm:$0x1] %v2312
        %v2314 = vld [vmem:[#allocation2 + $0x26] sm:$0x1]
        %2315 = vst [vmem:[#allocation3 + $0xe] sm:$0x1] %v2314
        %v2316 = vld [vmem:[#allocation2 + $0x27] sm:$0x1]
        %2317 = vst [vmem:[#allocation3 + $0xf] sm:$0x1] %v2316
        %v2318 = vld [vmem:[#allocation2 + $0x28] sm:$0x1]
        %2319 = vst [vmem:[#allocation3 + $0x18] sm:$0x1] %v2318
        %v2320 = vld [vmem:[#allocation2 + $0x29] sm:$0x1]
        %2321 = vst [vmem:[#allocation3 + $0x19] sm:$0x1] %v2320
        %v2322 = vld [vmem:[#allocation2 + $0x2a] sm:$0x1]
        %2323 = vst [vmem:[#allocation3 + $0x1a] sm:$0x1] %v2322
        %v2324 = vld [vmem:[#allocation2 + $0x2b] sm:$0x1]
        %2325 = vst [vmem:[#allocation3 + $0x1b] sm:$0x1] %v2324
        %v2326 = vld [vmem:[#allocation2 + $0x2c] sm:$0x1]
        %2327 = vst [vmem:[#allocation3 + $0x1c] sm:$0x1] %v2326
        %v2328 = vld [vmem:[#allocation2 + $0x2d] sm:$0x1]
        %2329 = vst [vmem:[#allocation3 + $0x1d] sm:$0x1] %v2328
        %v2330 = vld [vmem:[#allocation2 + $0x2e] sm:$0x1]
        %2331 = vst [vmem:[#allocation3 + $0x1e] sm:$0x1] %v2330
        %v2332 = vld [vmem:[#allocation2 + $0x2f] sm:$0x1]
        %2333 = vst [vmem:[#allocation3 + $0x1f] sm:$0x1] %v2332
        %v2334 = vld [vmem:[#allocation2 + $0x30] sm:$0x1]
        %2335 = vst [vmem:[#allocation3 + $0x28] sm:$0x1] %v2334
        %v2336 = vld [vmem:[#allocation2 + $0x31] sm:$0x1]
        %2337 = vst [vmem:[#allocation3 + $0x29] sm:$0x1] %v2336
        %v2338 = vld [vmem:[#allocation2 + $0x32] sm:$0x1]
        %2339 = vst [vmem:[#allocation3 + $0x2a] sm:$0x1] %v2338
        %v2340 = vld [vmem:[#allocation2 + $0x33] sm:$0x1]
        %2341 = vst [vmem:[#allocation3 + $0x2b] sm:$0x1] %v2340
        %v2342 = vld [vmem:[#allocation2 + $0x34] sm:$0x1]
        %2343 = vst [vmem:[#allocation3 + $0x2c] sm:$0x1] %v2342
        %v2344 = vld [vmem:[#allocation2 + $0x35] sm:$0x1]
        %2345 = vst [vmem:[#allocation3 + $0x2d] sm:$0x1] %v2344
        %v2346 = vld [vmem:[#allocation2 + $0x36] sm:$0x1]
        %2347 = vst [vmem:[#allocation3 + $0x2e] sm:$0x1] %v2346
        %v2348 = vld [vmem:[#allocation2 + $0x37] sm:$0x1]
        %2349 = vst [vmem:[#allocation3 + $0x2f] sm:$0x1] %v2348
        %v2350 = vld [vmem:[#allocation2 + $0x38] sm:$0x1]
        %2351 = vst [vmem:[#allocation3 + $0x38] sm:$0x1] %v2350
        %v2352 = vld [vmem:[#allocation2 + $0x39] sm:$0x1]
        %2353 = vst [vmem:[#allocation3 + $0x39] sm:$0x1] %v2352
        %v2354 = vld [vmem:[#allocation2 + $0x3a] sm:$0x1]
        %2355 = vst [vmem:[#allocation3 + $0x3a] sm:$0x1] %v2354
        %v2356 = vld [vmem:[#allocation2 + $0x3b] sm:$0x1]
        %2357 = vst [vmem:[#allocation3 + $0x3b] sm:$0x1] %v2356
        %v2358 = vld [vmem:[#allocation2 + $0x3c] sm:$0x1]
        %2359 = vst [vmem:[#allocation3 + $0x3c] sm:$0x1] %v2358
        %v2360 = vld [vmem:[#allocation2 + $0x3d] sm:$0x1]
        %2361 = vst [vmem:[#allocation3 + $0x3d] sm:$0x1] %v2360
        %v2362 = vld [vmem:[#allocation2 + $0x3e] sm:$0x1]
        %2363 = vst [vmem:[#allocation3 + $0x3e] sm:$0x1] %v2362
        %v2364 = vld [vmem:[#allocation2 + $0x3f] sm:$0x1]
        %2365 = vst [vmem:[#allocation3 + $0x3f] sm:$0x1] %v2364
        %v2366 = vld [vmem:[#allocation3] sm:$0xff]
        %v2367 = vld [vmem:[#allocation3 + $0x8] sm:$0xff]
        %v2368 = vld [vmem:[#allocation3 + $0x10] sm:$0xff]
        %v2369 = vld [vmem:[#allocation3 + $0x18] sm:$0xff]
        %v2370 = vld [vmem:[#allocation3 + $0x20] sm:$0xff]
        %v2371 = vld [vmem:[#allocation3 + $0x28] sm:$0xff]
        %v2372 = vld [vmem:[#allocation3 + $0x30] sm:$0xff]
        %v2373 = vld [vmem:[#allocation3 + $0x38] sm:$0xff]
        %v2374 = vld [vmem:[%s3] sm:$0xff]
        %v2375 = vld [vmem:[%s3 + $0x8] sm:$0xff]
        %v2376 = vld [vmem:[%s3 + $0x10] sm:$0xff]
        %v2377 = vld [vmem:[%s3 + $0x18] sm:$0xff]
        %v2378 = vld [vmem:[%s3 + $0x20] sm:$0xff]
        %v2379 = vld [vmem:[%s3 + $0x28] sm:$0xff]
        %v2380 = vld [vmem:[%s3 + $0x30] sm:$0xff]
        %v2381 = vld [vmem:[%s3 + $0x38] sm:$0xff]
        %s2382 = scalar_lea.vmem %s3, 64
        %v2383 = vld [vmem:[%s2382] sm:$0xff]
        %v2384 = vld [vmem:[%s2382 + $0x8] sm:$0xff]
        %v2385 = vld [vmem:[%s2382 + $0x10] sm:$0xff]
        %v2386 = vld [vmem:[%s2382 + $0x18] sm:$0xff]
        %v2387 = vld [vmem:[%s2382 + $0x20] sm:$0xff]
        %v2388 = vld [vmem:[%s2382 + $0x28] sm:$0xff]
        %v2389 = vld [vmem:[%s2382 + $0x30] sm:$0xff]
        %v2390 = vld [vmem:[%s2382 + $0x38] sm:$0xff]
        %v2392 = vsel %vm691, %v2383, 0
        %v2395 = vsel %vm691, %v2384, 0
        %v2398 = vsel %vm691, %v2385, 0
        %v2401 = vsel %vm691, %v2386, 0
        %v2404 = vsel %vm691, %v2387, 0
        %v2407 = vsel %vm691, %v2388, 0
        %v2410 = vsel %vm691, %v2389, 0
        %v2413 = vsel %vm691, %v2390, 0
        %2415 = vmatpush.msra.mxu0 0.0
        %2416 = vmatpush.msra.mxu0 0.0
        %2417 = vmatpush.msra.mxu0 0.0
        %2418 = vmatpush.msra.mxu0 0.0
        %2419 = vmatpush.msra.mxu0 0.0
        %2420 = vmatpush.msra.mxu0 0.0
        %2421 = vmatpush.msra.mxu0 0.0
        %2422 = vmatpush.msra.mxu0 0.0
        %2423 = vmatpush.msra.mxu0 0.0
        %2424 = vmatpush.msra.mxu0 0.0
        %2425 = vmatpush.msra.mxu0 0.0
        %2426 = vmatpush.msra.mxu0 0.0
        %2427 = vmatpush.msra.mxu0 %v2372
        %2428 = vmatpush.msra.mxu0 %v2370
        %2429 = vmatpush.msra.mxu0 %v2368
        %2430 = vmatpush.msra.mxu0 %v2366
        %2431 = vmatmul.f32.gmra.mxu0 %v2392
        %v2432 = vpop.f32.mrf.mxu0
        %v2433 = vadd.f32 0.0, %v2432
        %2434 = vmatmul.f32.gmra.mxu0 %v2395
        %v2435 = vpop.f32.mrf.mxu0
        %v2436 = vadd.f32 0.0, %v2435
        %2437 = vmatmul.f32.gmra.mxu0 %v2398
        %v2438 = vpop.f32.mrf.mxu0
        %v2439 = vadd.f32 0.0, %v2438
        %2440 = vmatmul.f32.gmra.mxu0 %v2401
        %v2441 = vpop.f32.mrf.mxu0
        %v2442 = vadd.f32 0.0, %v2441
        %2443 = vmatmul.f32.gmra.mxu0 %v2404
        %v2444 = vpop.f32.mrf.mxu0
        %v2445 = vadd.f32 0.0, %v2444
        %2446 = vmatmul.f32.gmra.mxu0 %v2407
        %v2447 = vpop.f32.mrf.mxu0
        %v2448 = vadd.f32 0.0, %v2447
        %2449 = vmatmul.f32.gmra.mxu0 %v2410
        %v2450 = vpop.f32.mrf.mxu0
        %v2451 = vadd.f32 0.0, %v2450
        %2452 = vmatmul.f32.gmra.mxu0 %v2413
        %v2453 = vpop.f32.mrf.mxu0
        %v2454 = vadd.f32 0.0, %v2453
        %2455 = vdwg.mxu0
        %2456 = vmatpush.msra.mxu0 0.0
        %2457 = vmatpush.msra.mxu0 0.0
        %2458 = vmatpush.msra.mxu0 0.0
        %2459 = vmatpush.msra.mxu0 0.0
        %2460 = vmatpush.msra.mxu0 0.0
        %2461 = vmatpush.msra.mxu0 0.0
        %2462 = vmatpush.msra.mxu0 0.0
        %2463 = vmatpush.msra.mxu0 0.0
        %2464 = vmatpush.msra.mxu0 0.0
        %2465 = vmatpush.msra.mxu0 0.0
        %2466 = vmatpush.msra.mxu0 0.0
        %2467 = vmatpush.msra.mxu0 0.0
        %2468 = vmatpush.msra.mxu0 %v2373
        %2469 = vmatpush.msra.mxu0 %v2371
        %2470 = vmatpush.msra.mxu0 %v2369
        %2471 = vmatpush.msra.mxu0 %v2367
        %2472 = vmatmul.f32.gmra.mxu0 %v2392
        %v2473 = vpop.f32.mrf.mxu0
        %v2474 = vadd.f32 0.0, %v2473
        %2475 = vmatmul.f32.gmra.mxu0 %v2395
        %v2476 = vpop.f32.mrf.mxu0
        %v2477 = vadd.f32 0.0, %v2476
        %2478 = vmatmul.f32.gmra.mxu0 %v2398
        %v2479 = vpop.f32.mrf.mxu0
        %v2480 = vadd.f32 0.0, %v2479
        %2481 = vmatmul.f32.gmra.mxu0 %v2401
        %v2482 = vpop.f32.mrf.mxu0
        %v2483 = vadd.f32 0.0, %v2482
        %2484 = vmatmul.f32.gmra.mxu0 %v2404
        %v2485 = vpop.f32.mrf.mxu0
        %v2486 = vadd.f32 0.0, %v2485
        %2487 = vmatmul.f32.gmra.mxu0 %v2407
        %v2488 = vpop.f32.mrf.mxu0
        %v2489 = vadd.f32 0.0, %v2488
        %2490 = vmatmul.f32.gmra.mxu0 %v2410
        %v2491 = vpop.f32.mrf.mxu0
        %v2492 = vadd.f32 0.0, %v2491
        %2493 = vmatmul.f32.gmra.mxu0 %v2413
        %v2494 = vpop.f32.mrf.mxu0
        %v2495 = vadd.f32 0.0, %v2494
        %2496 = vdwg.mxu0
        %2497 = vrot.lane.b32.xlu0 %v2433, 1
        %v2498 = vpop.permute.xlu0 %2497
        %2499 = vrot.lane.b32.xlu0 %v2436, 1
        %v2500 = vpop.permute.xlu0 %2499
        %2501 = vrot.lane.b32.xlu0 %v2439, 1
        %v2502 = vpop.permute.xlu0 %2501
        %2503 = vrot.lane.b32.xlu0 %v2442, 1
        %v2504 = vpop.permute.xlu0 %2503
        %2505 = vrot.lane.b32.xlu0 %v2445, 1
        %v2506 = vpop.permute.xlu0 %2505
        %2507 = vrot.lane.b32.xlu0 %v2448, 1
        %v2508 = vpop.permute.xlu0 %2507
        %2509 = vrot.lane.b32.xlu0 %v2451, 1
        %v2510 = vpop.permute.xlu0 %2509
        %2511 = vrot.lane.b32.xlu0 %v2454, 1
        %v2512 = vpop.permute.xlu0 %2511
        %2513 = vrot.lane.b32.xlu0 %v2474, 1
        %v2514 = vpop.permute.xlu0 %2513
        %2515 = vrot.lane.b32.xlu0 %v2477, 1
        %v2516 = vpop.permute.xlu0 %2515
        %2517 = vrot.lane.b32.xlu0 %v2480, 1
        %v2518 = vpop.permute.xlu0 %2517
        %2519 = vrot.lane.b32.xlu0 %v2483, 1
        %v2520 = vpop.permute.xlu0 %2519
        %2521 = vrot.lane.b32.xlu0 %v2486, 1
        %v2522 = vpop.permute.xlu0 %2521
        %2523 = vrot.lane.b32.xlu0 %v2489, 1
        %v2524 = vpop.permute.xlu0 %2523
        %2525 = vrot.lane.b32.xlu0 %v2492, 1
        %v2526 = vpop.permute.xlu0 %2525
        %2527 = vrot.lane.b32.xlu0 %v2495, 1
        %v2528 = vpop.permute.xlu0 %2527
        %v2529 = vlaneseq
        %v2530 = vand.u32 %v2529, 127
        %vm2531 = vcmp.lt.s32.totalorder %v2530, 1
        %v2532 = vsel %vm2531, %v2498, %v2514
        %v2533 = vsel %vm2531, %v2500, %v2516
        %v2534 = vsel %vm2531, %v2502, %v2518
        %v2535 = vsel %vm2531, %v2504, %v2520
        %v2536 = vsel %vm2531, %v2506, %v2522
        %v2537 = vsel %vm2531, %v2508, %v2524
        %v2538 = vsel %vm2531, %v2510, %v2526
        %v2539 = vsel %vm2531, %v2512, %v2528
        %v2540 = vsel %vm2531, %v2514, %v2498
        %v2541 = vsel %vm2531, %v2516, %v2500
        %v2542 = vsel %vm2531, %v2518, %v2502
        %v2543 = vsel %vm2531, %v2520, %v2504
        %v2544 = vsel %vm2531, %v2522, %v2506
        %v2545 = vsel %vm2531, %v2524, %v2508
        %v2546 = vsel %vm2531, %v2526, %v2510
        %v2547 = vsel %vm2531, %v2528, %v2512
        %v2549 = vsel %vm691, %v2374, 0
        %v2552 = vsel %vm691, %v2375, 0
        %v2555 = vsel %vm691, %v2376, 0
        %v2558 = vsel %vm691, %v2377, 0
        %v2561 = vsel %vm691, %v2378, 0
        %v2564 = vsel %vm691, %v2379, 0
        %v2567 = vsel %vm691, %v2380, 0
        %v2570 = vsel %vm691, %v2381, 0
        %2572 = vmatpush.msra.mxu0 0.0
        %2573 = vmatpush.msra.mxu0 0.0
        %2574 = vmatpush.msra.mxu0 0.0
        %2575 = vmatpush.msra.mxu0 0.0
        %2576 = vmatpush.msra.mxu0 0.0
        %2577 = vmatpush.msra.mxu0 0.0
        %2578 = vmatpush.msra.mxu0 0.0
        %2579 = vmatpush.msra.mxu0 0.0
        %2580 = vmatpush.msra.mxu0 0.0
        %2581 = vmatpush.msra.mxu0 0.0
        %2582 = vmatpush.msra.mxu0 0.0
        %2583 = vmatpush.msra.mxu0 0.0
        %2584 = vmatpush.msra.mxu0 %v2372
        %2585 = vmatpush.msra.mxu0 %v2370
        %2586 = vmatpush.msra.mxu0 %v2368
        %2587 = vmatpush.msra.mxu0 %v2366
        %2588 = vmatmul.f32.gmra.mxu0 %v2549
        %v2589 = vpop.f32.mrf.mxu0
        %v2590 = vadd.f32 %v2540, %v2589
        %2591 = vmatmul.f32.gmra.mxu0 %v2552
        %v2592 = vpop.f32.mrf.mxu0
        %v2593 = vadd.f32 %v2541, %v2592
        %2594 = vmatmul.f32.gmra.mxu0 %v2555
        %v2595 = vpop.f32.mrf.mxu0
        %v2596 = vadd.f32 %v2542, %v2595
        %2597 = vmatmul.f32.gmra.mxu0 %v2558
        %v2598 = vpop.f32.mrf.mxu0
        %v2599 = vadd.f32 %v2543, %v2598
        %2600 = vmatmul.f32.gmra.mxu0 %v2561
        %v2601 = vpop.f32.mrf.mxu0
        %v2602 = vadd.f32 %v2544, %v2601
        %2603 = vmatmul.f32.gmra.mxu0 %v2564
        %v2604 = vpop.f32.mrf.mxu0
        %v2605 = vadd.f32 %v2545, %v2604
        %2606 = vmatmul.f32.gmra.mxu0 %v2567
        %v2607 = vpop.f32.mrf.mxu0
        %v2608 = vadd.f32 %v2546, %v2607
        %2609 = vmatmul.f32.gmra.mxu0 %v2570
        %v2610 = vpop.f32.mrf.mxu0
        %v2611 = vadd.f32 %v2547, %v2610
        %2612 = vdwg.mxu0
        %2613 = vmatpush.msra.mxu0 0.0
        %2614 = vmatpush.msra.mxu0 0.0
        %2615 = vmatpush.msra.mxu0 0.0
        %2616 = vmatpush.msra.mxu0 0.0
        %2617 = vmatpush.msra.mxu0 0.0
        %2618 = vmatpush.msra.mxu0 0.0
        %2619 = vmatpush.msra.mxu0 0.0
        %2620 = vmatpush.msra.mxu0 0.0
        %2621 = vmatpush.msra.mxu0 0.0
        %2622 = vmatpush.msra.mxu0 0.0
        %2623 = vmatpush.msra.mxu0 0.0
        %2624 = vmatpush.msra.mxu0 0.0
        %2625 = vmatpush.msra.mxu0 %v2373
        %2626 = vmatpush.msra.mxu0 %v2371
        %2627 = vmatpush.msra.mxu0 %v2369
        %2628 = vmatpush.msra.mxu0 %v2367
        %2629 = vmatmul.f32.gmra.mxu0 %v2549
        %v2630 = vpop.f32.mrf.mxu0
        %v2631 = vadd.f32 %v2532, %v2630
        %2632 = vmatmul.f32.gmra.mxu0 %v2552
        %v2633 = vpop.f32.mrf.mxu0
        %v2634 = vadd.f32 %v2533, %v2633
        %2635 = vmatmul.f32.gmra.mxu0 %v2555
        %v2636 = vpop.f32.mrf.mxu0
        %v2637 = vadd.f32 %v2534, %v2636
        %2638 = vmatmul.f32.gmra.mxu0 %v2558
        %v2639 = vpop.f32.mrf.mxu0
        %v2640 = vadd.f32 %v2535, %v2639
        %2641 = vmatmul.f32.gmra.mxu0 %v2561
        %v2642 = vpop.f32.mrf.mxu0
        %v2643 = vadd.f32 %v2536, %v2642
        %2644 = vmatmul.f32.gmra.mxu0 %v2564
        %v2645 = vpop.f32.mrf.mxu0
        %v2646 = vadd.f32 %v2537, %v2645
        %2647 = vmatmul.f32.gmra.mxu0 %v2567
        %v2648 = vpop.f32.mrf.mxu0
        %v2649 = vadd.f32 %v2538, %v2648
        %2650 = vmatmul.f32.gmra.mxu0 %v2570
        %v2651 = vpop.f32.mrf.mxu0
        %v2652 = vadd.f32 %v2539, %v2651
        %2653 = vdwg.mxu0
        %s2654 = scalar_lea.vmem %s3, 128
        %v2655 = vld [vmem:[%s2654] sm:$0xff]
        %v2656 = vld [vmem:[%s2654 + $0x8] sm:$0xff]
        %v2657 = vld [vmem:[%s2654 + $0x10] sm:$0xff]
        %v2658 = vld [vmem:[%s2654 + $0x18] sm:$0xff]
        %v2659 = vld [vmem:[%s2654 + $0x20] sm:$0xff]
        %v2660 = vld [vmem:[%s2654 + $0x28] sm:$0xff]
        %v2661 = vld [vmem:[%s2654 + $0x30] sm:$0xff]
        %v2662 = vld [vmem:[%s2654 + $0x38] sm:$0xff]
        %v2664 = vsel %vm691, %v2655, 0
        %v2667 = vsel %vm691, %v2656, 0
        %v2670 = vsel %vm691, %v2657, 0
        %v2673 = vsel %vm691, %v2658, 0
        %v2676 = vsel %vm691, %v2659, 0
        %v2679 = vsel %vm691, %v2660, 0
        %v2682 = vsel %vm691, %v2661, 0
        %v2685 = vsel %vm691, %v2662, 0
        %2687 = vmatpush.msra.mxu0 0.0
        %2688 = vmatpush.msra.mxu0 0.0
        %2689 = vmatpush.msra.mxu0 0.0
        %2690 = vmatpush.msra.mxu0 0.0
        %2691 = vmatpush.msra.mxu0 0.0
        %2692 = vmatpush.msra.mxu0 0.0
        %2693 = vmatpush.msra.mxu0 0.0
        %2694 = vmatpush.msra.mxu0 0.0
        %2695 = vmatpush.msra.mxu0 0.0
        %2696 = vmatpush.msra.mxu0 0.0
        %2697 = vmatpush.msra.mxu0 0.0
        %2698 = vmatpush.msra.mxu0 0.0
        %2699 = vmatpush.msra.mxu0 %v2372
        %2700 = vmatpush.msra.mxu0 %v2370
        %2701 = vmatpush.msra.mxu0 %v2368
        %2702 = vmatpush.msra.mxu0 %v2366
        %2703 = vmatmul.f32.gmra.mxu0 %v2664
        %v2704 = vpop.f32.mrf.mxu0
        %v2705 = vadd.f32 0.0, %v2704
        %2706 = vmatmul.f32.gmra.mxu0 %v2667
        %v2707 = vpop.f32.mrf.mxu0
        %v2708 = vadd.f32 0.0, %v2707
        %2709 = vmatmul.f32.gmra.mxu0 %v2670
        %v2710 = vpop.f32.mrf.mxu0
        %v2711 = vadd.f32 0.0, %v2710
        %2712 = vmatmul.f32.gmra.mxu0 %v2673
        %v2713 = vpop.f32.mrf.mxu0
        %v2714 = vadd.f32 0.0, %v2713
        %2715 = vmatmul.f32.gmra.mxu0 %v2676
        %v2716 = vpop.f32.mrf.mxu0
        %v2717 = vadd.f32 0.0, %v2716
        %2718 = vmatmul.f32.gmra.mxu0 %v2679
        %v2719 = vpop.f32.mrf.mxu0
        %v2720 = vadd.f32 0.0, %v2719
        %2721 = vmatmul.f32.gmra.mxu0 %v2682
        %v2722 = vpop.f32.mrf.mxu0
        %v2723 = vadd.f32 0.0, %v2722
        %2724 = vmatmul.f32.gmra.mxu0 %v2685
        %v2725 = vpop.f32.mrf.mxu0
        %v2726 = vadd.f32 0.0, %v2725
        %2727 = vdwg.mxu0
        %2728 = vmatpush.msra.mxu0 0.0
        %2729 = vmatpush.msra.mxu0 0.0
        %2730 = vmatpush.msra.mxu0 0.0
        %2731 = vmatpush.msra.mxu0 0.0
        %2732 = vmatpush.msra.mxu0 0.0
        %2733 = vmatpush.msra.mxu0 0.0
        %2734 = vmatpush.msra.mxu0 0.0
        %2735 = vmatpush.msra.mxu0 0.0
        %2736 = vmatpush.msra.mxu0 0.0
        %2737 = vmatpush.msra.mxu0 0.0
        %2738 = vmatpush.msra.mxu0 0.0
        %2739 = vmatpush.msra.mxu0 0.0
        %2740 = vmatpush.msra.mxu0 %v2373
        %2741 = vmatpush.msra.mxu0 %v2371
        %2742 = vmatpush.msra.mxu0 %v2369
        %2743 = vmatpush.msra.mxu0 %v2367
        %2744 = vmatmul.f32.gmra.mxu0 %v2664
        %v2745 = vpop.f32.mrf.mxu0
        %v2746 = vadd.f32 0.0, %v2745
        %2747 = vmatmul.f32.gmra.mxu0 %v2667
        %v2748 = vpop.f32.mrf.mxu0
        %v2749 = vadd.f32 0.0, %v2748
        %2750 = vmatmul.f32.gmra.mxu0 %v2670
        %v2751 = vpop.f32.mrf.mxu0
        %v2752 = vadd.f32 0.0, %v2751
        %2753 = vmatmul.f32.gmra.mxu0 %v2673
        %v2754 = vpop.f32.mrf.mxu0
        %v2755 = vadd.f32 0.0, %v2754
        %2756 = vmatmul.f32.gmra.mxu0 %v2676
        %v2757 = vpop.f32.mrf.mxu0
        %v2758 = vadd.f32 0.0, %v2757
        %2759 = vmatmul.f32.gmra.mxu0 %v2679
        %v2760 = vpop.f32.mrf.mxu0
        %v2761 = vadd.f32 0.0, %v2760
        %2762 = vmatmul.f32.gmra.mxu0 %v2682
        %v2763 = vpop.f32.mrf.mxu0
        %v2764 = vadd.f32 0.0, %v2763
        %2765 = vmatmul.f32.gmra.mxu0 %v2685
        %v2766 = vpop.f32.mrf.mxu0
        %v2767 = vadd.f32 0.0, %v2766
        %2768 = vdwg.mxu0
        %2769 = vrot.lane.b32.xlu0 %v2705, 2
        %v2770 = vpop.permute.xlu0 %2769
        %2771 = vrot.lane.b32.xlu0 %v2708, 2
        %v2772 = vpop.permute.xlu0 %2771
        %2773 = vrot.lane.b32.xlu0 %v2711, 2
        %v2774 = vpop.permute.xlu0 %2773
        %2775 = vrot.lane.b32.xlu0 %v2714, 2
        %v2776 = vpop.permute.xlu0 %2775
        %2777 = vrot.lane.b32.xlu0 %v2717, 2
        %v2778 = vpop.permute.xlu0 %2777
        %2779 = vrot.lane.b32.xlu0 %v2720, 2
        %v2780 = vpop.permute.xlu0 %2779
        %2781 = vrot.lane.b32.xlu0 %v2723, 2
        %v2782 = vpop.permute.xlu0 %2781
        %2783 = vrot.lane.b32.xlu0 %v2726, 2
        %v2784 = vpop.permute.xlu0 %2783
        %2785 = vrot.lane.b32.xlu0 %v2746, 2
        %v2786 = vpop.permute.xlu0 %2785
        %2787 = vrot.lane.b32.xlu0 %v2749, 2
        %v2788 = vpop.permute.xlu0 %2787
        %2789 = vrot.lane.b32.xlu0 %v2752, 2
        %v2790 = vpop.permute.xlu0 %2789
        %2791 = vrot.lane.b32.xlu0 %v2755, 2
        %v2792 = vpop.permute.xlu0 %2791
        %2793 = vrot.lane.b32.xlu0 %v2758, 2
        %v2794 = vpop.permute.xlu0 %2793
        %2795 = vrot.lane.b32.xlu0 %v2761, 2
        %v2796 = vpop.permute.xlu0 %2795
        %2797 = vrot.lane.b32.xlu0 %v2764, 2
        %v2798 = vpop.permute.xlu0 %2797
        %2799 = vrot.lane.b32.xlu0 %v2767, 2
        %v2800 = vpop.permute.xlu0 %2799
        %vm2801 = vcmp.lt.s32.totalorder %v2530, 2
        %v2802 = vsel %vm2801, %v2770, %v2786
        %v2803 = vsel %vm2801, %v2772, %v2788
        %v2804 = vsel %vm2801, %v2774, %v2790
        %v2805 = vsel %vm2801, %v2776, %v2792
        %v2806 = vsel %vm2801, %v2778, %v2794
        %v2807 = vsel %vm2801, %v2780, %v2796
        %v2808 = vsel %vm2801, %v2782, %v2798
        %v2809 = vsel %vm2801, %v2784, %v2800
        %v2810 = vsel %vm2801, %v2786, %v2770
        %v2811 = vsel %vm2801, %v2788, %v2772
        %v2812 = vsel %vm2801, %v2790, %v2774
        %v2813 = vsel %vm2801, %v2792, %v2776
        %v2814 = vsel %vm2801, %v2794, %v2778
        %v2815 = vsel %vm2801, %v2796, %v2780
        %v2816 = vsel %vm2801, %v2798, %v2782
        %v2817 = vsel %vm2801, %v2800, %v2784
        %v2818 = vadd.f32 %v2590, %v2810
        %v2819 = vadd.f32 %v2631, %v2802
        %v2820 = vadd.f32 %v2593, %v2811
        %v2821 = vadd.f32 %v2634, %v2803
        %v2822 = vadd.f32 %v2596, %v2812
        %v2823 = vadd.f32 %v2637, %v2804
        %v2824 = vadd.f32 %v2599, %v2813
        %v2825 = vadd.f32 %v2640, %v2805
        %v2826 = vadd.f32 %v2602, %v2814
        %v2827 = vadd.f32 %v2643, %v2806
        %v2828 = vadd.f32 %v2605, %v2815
        %v2829 = vadd.f32 %v2646, %v2807
        %v2830 = vadd.f32 %v2608, %v2816
        %v2831 = vadd.f32 %v2649, %v2808
        %v2832 = vadd.f32 %v2611, %v2817
        %v2833 = vadd.f32 %v2652, %v2809
        %v2834 = vld [vmem:[%s4] sm:$0xff]
        %v2835 = vld [vmem:[%s4 + $0x8] sm:$0xff]
        %v2836 = vld [vmem:[%s4 + $0x10] sm:$0xff]
        %v2837 = vld [vmem:[%s4 + $0x18] sm:$0xff]
        %v2838 = vld [vmem:[%s4 + $0x20] sm:$0xff]
        %v2839 = vld [vmem:[%s4 + $0x28] sm:$0xff]
        %v2840 = vld [vmem:[%s4 + $0x30] sm:$0xff]
        %v2841 = vld [vmem:[%s4 + $0x38] sm:$0xff]
        %2843 = vset.pattern.permute.xlu0 0
        %2844 = vperm.xlu0 %2843, %v2834
        %v2845 = vpop.permute.xlu0 %2844
        %2848 = vset.pattern.permute.xlu0 0
        %2849 = vperm.xlu0 %2848, %v2835
        %v2850 = vpop.permute.xlu0 %2849
        %2853 = vset.pattern.permute.xlu0 0
        %2854 = vperm.xlu0 %2853, %v2836
        %v2855 = vpop.permute.xlu0 %2854
        %2858 = vset.pattern.permute.xlu0 0
        %2859 = vperm.xlu0 %2858, %v2837
        %v2860 = vpop.permute.xlu0 %2859
        %2863 = vset.pattern.permute.xlu0 0
        %2864 = vperm.xlu0 %2863, %v2838
        %v2865 = vpop.permute.xlu0 %2864
        %2868 = vset.pattern.permute.xlu0 0
        %2869 = vperm.xlu0 %2868, %v2839
        %v2870 = vpop.permute.xlu0 %2869
        %2873 = vset.pattern.permute.xlu0 0
        %2874 = vperm.xlu0 %2873, %v2840
        %v2875 = vpop.permute.xlu0 %2874
        %2878 = vset.pattern.permute.xlu0 0
        %2879 = vperm.xlu0 %2878, %v2841
        %v2880 = vpop.permute.xlu0 %2879
        %v2882 = vadd.f32 %v2818, %v2845
        %v2883 = vadd.f32 %v2819, %v2845
        %v2884 = vadd.f32 %v2820, %v2850
        %v2885 = vadd.f32 %v2821, %v2850
        %v2886 = vadd.f32 %v2822, %v2855
        %v2887 = vadd.f32 %v2823, %v2855
        %v2888 = vadd.f32 %v2824, %v2860
        %v2889 = vadd.f32 %v2825, %v2860
        %v2890 = vadd.f32 %v2826, %v2865
        %v2891 = vadd.f32 %v2827, %v2865
        %v2892 = vadd.f32 %v2828, %v2870
        %v2893 = vadd.f32 %v2829, %v2870
        %v2894 = vadd.f32 %v2830, %v2875
        %v2895 = vadd.f32 %v2831, %v2875
        %v2896 = vadd.f32 %v2832, %v2880
        %v2897 = vadd.f32 %v2833, %v2880
        %v2898 = vmax.f32 %v2882, 0.0
        %v2899 = vmax.f32 %v2883, 0.0
        %v2900 = vmax.f32 %v2884, 0.0
        %v2901 = vmax.f32 %v2885, 0.0
        %v2902 = vmax.f32 %v2886, 0.0
        %v2903 = vmax.f32 %v2887, 0.0
        %v2904 = vmax.f32 %v2888, 0.0
        %v2905 = vmax.f32 %v2889, 0.0
        %v2906 = vmax.f32 %v2890, 0.0
        %v2907 = vmax.f32 %v2891, 0.0
        %v2908 = vmax.f32 %v2892, 0.0
        %v2909 = vmax.f32 %v2893, 0.0
        %v2910 = vmax.f32 %v2894, 0.0
        %v2911 = vmax.f32 %v2895, 0.0
        %v2912 = vmax.f32 %v2896, 0.0
        %v2913 = vmax.f32 %v2897, 0.0
        %v2914 = vadd.s32 %v2530, 128
        %v2915 = vand.u32 %v2530, 127
        %v2916 = vand.u32 %v2914, 127
        %vm2917 = vcmp.lt.s32.totalorder %v2915, 69
        %vm2918 = vcmp.lt.s32.totalorder %v2916, 69
        %v2919 = vsel %vm2917, %v2898, 0.0
        %v2920 = vsel %vm2918, %v2899, 0.0
        %v2921 = vsel %vm2917, %v2900, 0.0
        %v2922 = vsel %vm2918, %v2901, 0.0
        %v2923 = vsel %vm2917, %v2902, 0.0
        %v2924 = vsel %vm2918, %v2903, 0.0
        %v2925 = vsel %vm2917, %v2904, 0.0
        %v2926 = vsel %vm2918, %v2905, 0.0
        %v2927 = vsel %vm2917, %v2906, 0.0
        %v2928 = vsel %vm2918, %v2907, 0.0
        %v2929 = vsel %vm2917, %v2908, 0.0
        %v2930 = vsel %vm2918, %v2909, 0.0
        %v2931 = vsel %vm2917, %v2910, 0.0
        %v2932 = vsel %vm2918, %v2911, 0.0
        %v2933 = vsel %vm2917, %v2912, 0.0
        %v2934 = vsel %vm2918, %v2913, 0.0
        %v2935 = vld [vmem:[%s5] sm:$0x7]
        %vm2936 = vcmask 523264
        %v2938 = vsel %vm2936, %v2935, 0
        %2940 = vmatpush.msra.mxu0 0.0
        %2941 = vmatpush.msra.mxu0 0.0
        %2942 = vmatpush.msra.mxu0 0.0
        %2943 = vmatpush.msra.mxu0 0.0
        %2944 = vmatpush.msra.mxu0 0.0
        %2945 = vmatpush.msra.mxu0 0.0
        %2946 = vmatpush.msra.mxu0 0.0
        %2947 = vmatpush.msra.mxu0 0.0
        %2948 = vmatpush.msra.mxu0 %v2933
        %2949 = vmatpush.msra.mxu0 %v2931
        %2950 = vmatpush.msra.mxu0 %v2929
        %2951 = vmatpush.msra.mxu0 %v2927
        %2952 = vmatpush.msra.mxu0 %v2925
        %2953 = vmatpush.msra.mxu0 %v2923
        %2954 = vmatpush.msra.mxu0 %v2921
        %2955 = vmatpush.msra.mxu0 %v2919
        %2956 = vmatmul.f32.gmra.mxu0 %v2938
        %v2957 = vpop.f32.mrf.mxu0
        %v2958 = vadd.f32 0.0, %v2957
        %2959 = vdwg.mxu0
        %2960 = vmatpush.msra.mxu0 0.0
        %2961 = vmatpush.msra.mxu0 0.0
        %2962 = vmatpush.msra.mxu0 0.0
        %2963 = vmatpush.msra.mxu0 0.0
        %2964 = vmatpush.msra.mxu0 0.0
        %2965 = vmatpush.msra.mxu0 0.0
        %2966 = vmatpush.msra.mxu0 0.0
        %2967 = vmatpush.msra.mxu0 0.0
        %2968 = vmatpush.msra.mxu0 %v2934
        %2969 = vmatpush.msra.mxu0 %v2932
        %2970 = vmatpush.msra.mxu0 %v2930
        %2971 = vmatpush.msra.mxu0 %v2928
        %2972 = vmatpush.msra.mxu0 %v2926
        %2973 = vmatpush.msra.mxu0 %v2924
        %2974 = vmatpush.msra.mxu0 %v2922
        %2975 = vmatpush.msra.mxu0 %v2920
        %2976 = vmatmul.f32.gmra.mxu0 %v2938
        %v2977 = vpop.f32.mrf.mxu0
        %v2978 = vadd.f32 0.0, %v2977
        %2979 = vdwg.mxu0
        %v2982 = vrot.slane %v2958, 1
        %v2983 = vrot.slane %v2978, 1
        %2986 = vrot.lane.b32.xlu0 %v2982, 1
        %v2987 = vpop.permute.xlu0 %2986
        %2988 = vrot.lane.b32.xlu0 %v2983, 1
        %v2989 = vpop.permute.xlu0 %2988
        %v2990 = vsel %vm2531, %v2987, %v2989
        %v2991 = vsel %vm2531, %v2989, %v2987
        %v2992 = vadd.f32 %v2958, %v2991
        %v2993 = vadd.f32 %v2978, %v2990
        %v2994 = vrot.slane %v2958, 2
        %v2995 = vrot.slane %v2978, 2
        %2998 = vrot.lane.b32.xlu0 %v2994, 2
        %v2999 = vpop.permute.xlu0 %2998
        %3000 = vrot.lane.b32.xlu0 %v2995, 2
        %v3001 = vpop.permute.xlu0 %3000
        %v3002 = vsel %vm2801, %v2999, %v3001
        %v3003 = vsel %vm2801, %v3001, %v2999
        %v3004 = vadd.f32 %v2992, %v3003
        %v3005 = vadd.f32 %v2993, %v3002
        %v3006 = vld [vmem:[#allocation4] sm:$0x1]
        %3008 = vset.pattern.permute.xlu0 0
        %3009 = vperm.xlu0 %3008, %v3006
        %v3010 = vpop.permute.xlu0 %3009
        %v3012 = vperm.slane %v3010, 0
        %v3013 = vadd.f32 %v3004, %v3012
        %v3014 = vadd.f32 %v3005, %v3012
        %v3016 = vrot.slane %v3014, 7
        %v3018 = vsel %vm2159, %v3013, %v3016
        %3019 = vst [vmem:[%s286] sm:$0x3] %v3018
        %s3020 = sand.u32 %s184, 1
        %s3021 = scalar_lea.sflag [#allocation7], %s3020
        %s3022 = sand.u32 %s184, 1
        %s3023 = smul.addr %s3022, 2
        %s3024 = scalar_lea.vmem [#allocation8], %s3023
        // Predicated region
        $region53: #{tpu_custom_call.1} parent=47 // pred_check
          %p3025 = pneg %p194
        $region54: #{tpu_custom_call.1} parent=47 // pred_check_branch
          %3027 = sbr.rel (%p3025) target = $region56
        $region55: #{tpu_custom_call.1} parent=47 // pred_region
          %3029 = vsyncadd %s3021, 0
          %s3030 = smul.addr %s24, 2
          %s3031 = scalar_lea.hbm %s7, %s3030
          %s3033 = sshll.u32 %s3024, 4
          %s3034 = int_to_ptr.vmem [resolvable:$true] %s3033
          %s3035 = sshll.u32 %s3031, 4
          %s3036 = int_to_ptr.hbm [resolvable:$true] %s3035
          %3038 = dma.vmem_to_hbm [thread:$0]  %s3034, 32, %s3036, %s3021
        $region56: #{tpu_custom_call.1} parent=47 // pred_fallthru
          _
      $region48: #{tpu_custom_call.1} parent=5 // pred_fallthru
        _
      %p3039 = scmp.le.s32.totalorder 2, %s19
      // Predicated region
      $region57: #{tpu_custom_call.1} parent=5 // pred_check
        %p3040 = pneg %p3039
      $region58: #{tpu_custom_call.1} parent=5 // pred_check_branch
        %3042 = sbr.rel (%p3040) target = $region60
      $region59: #{tpu_custom_call.1} parent=5 // pred_region
        %s3043 = ssub.s32 %s19, 2
        // Predicated region
        $region61: #{tpu_custom_call.1} parent=59 // pred_check
          %p3044 = pneg %p200
        $region62: #{tpu_custom_call.1} parent=59 // pred_check_branch
          %3046 = sbr.rel (%p3044) target = $region64
        $region63: #{tpu_custom_call.1} parent=59 // pred_region
          %s3047 = sand.u32 %s185, 1
          %s3048 = scalar_lea.sflag [#allocation7], %s3047
          %s3049 = sand.u32 %s185, 1
          %s3050 = smul.addr %s3049, 2
          %s3051 = scalar_lea.vmem [#allocation8], %s3050
          %3053 = dma.done %s3048, 32
        $region64: #{tpu_custom_call.1} parent=59 // pred_fallthru
          _
      $region60: #{tpu_custom_call.1} parent=5 // pred_fallthru
        _
    $region6: #{tpu_custom_call.1} parent=1 // loop_footer
      %s23 = sadd.s32 1, %s19
    $region7: #{tpu_custom_call.1} parent=1 // loop_footer_branch
      %18 = sbr.rel target = $region3
    $region8: #{tpu_custom_call.1} parent=1 // loop_exit
      _
    %3054 = vsyncpa [#allocation6], 1
    %s3055 = scalar_lea.sflag [#allocation6], 1
    %3056 = vsyncpa %s3055, 1
    %3057 = vsyncpa [#allocation7], 1
    %s3058 = scalar_lea.sflag [#allocation7], 1
    %3059 = vsyncpa %s3058, 1

</llo_original>
